<compile_context>
chip_gen: v7x
topology: tpu7x:2x2x1
jax: 0.10.0
libtpu: 0.0.40
codegen_flags: <defaults>
</compile_context>

<pallas_src>
import functools

import jax
import jax.numpy as jnp
from jax.experimental import pallas as pl
from jax.experimental.pallas import tpu as pltpu

_EPS = 1e-5                 # nn.BatchNorm2d default eps
_TILE_TARGET = 2 << 20      # ~2 MiB streamed input block (perf-review target)


@functools.lru_cache(maxsize=None)
def _vmem_limit_bytes():
    """Generation-aware VMEM budget (~48 MiB on v7x, ~96 MiB on v5e/v6e)."""
    try:
        cap = int(pltpu.get_tpu_info().vmem_capacity_bytes)
    except Exception:
        cap = 64 << 20      # conservative fallback
    return max(32 << 20, min(100 << 20, (cap * 3) // 4))


def _elem_tiles(nrows, hw, bytes_per_elem, target=_TILE_TARGET):
    """(8,128)-legal, lane-dense tiles sized ~`target` bytes of the real dtype."""
    if hw % 128 == 0 and hw * 8 * bytes_per_elem > target:
        hw_t = max(128, min(hw, ((target // (8 * bytes_per_elem)) // 128) * 128))
    else:
        hw_t = hw                               # full rows (always legal)
    rows = max(1, target // (hw_t * bytes_per_elem))
    if rows >= nrows:
        row_t = nrows
    elif rows >= 8:
        row_t = (rows // 8) * 8
    else:
        row_t = min(8, nrows)
    return row_t, hw_t


def _conv3x3_bn_stats(xs, ws, bias, h, w):
    """3x3 'same' conv of the channel-concat of `xs`, plus per-channel batch stats.

    xs  : list of (N, Ci_k, H, W)    (their channel concatenation is the conv input)
    ws  : list of (Co, Ci_k, 3, 3)   (matching split of the full OIHW weight)
    bias: (Co,)
    Returns conv_out (N, Co, H*W) f32, ch_sum (Co,) f32, ch_sqsum (Co,) f32.
    """
    n = xs[0].shape[0]
    co = ws[0].shape[0]
    hw = h * w
    pad = w + 1                                  # flat-axis halo: every tap = lane window
    hwp = hw + 2 * pad
    cis = [x.shape[1] for x in xs]
    for x in xs:
        assert x.shape[0] == n and x.shape[2] == h and x.shape[3] == w

    # Flattened spatial view with a zero halo (free reshape + one small pad).
    xfs = [jnp.pad(x.reshape(n, c, hw), ((0, 0), (0, 0), (pad, pad)))
           for x, c in zip(xs, cis)]
    # Weights tap-major: w9[t] == w[:, :, t // 3, t % 3]  -> clean (Co, Ci) tiles.
    w9s = [jnp.transpose(wt, (2, 3, 0, 1)).reshape(9, co, c).astype(jnp.float32)
           for wt, c in zip(ws, cis)]
    b2 = bias.reshape(co, 1).astype(jnp.float32)
    # Column masks for horizontally-shifted taps (precomputed on host, tiny).
    colj = jnp.arange(hw, dtype=jnp.int32) % w
    mask_l = (colj >= 1).astype(jnp.float32).reshape(1, hw)       # tap dx = -1
    mask_r = (colj <= w - 2).astype(jnp.float32).reshape(1, hw)   # tap dx = +1

    n_in = len(xs)

    def kernel(*refs):
        x_refs = refs[:n_in]
        w_refs = refs[n_in:2 * n_in]
        b_ref, ml_ref, mr_ref = refs[2 * n_in:2 * n_in + 3]
        out_ref, sum_ref, sq_ref = refs[2 * n_in + 3:]

        ml = ml_ref[...]                                      # (1, hw)
        mr = mr_ref[...]
        acc = jnp.zeros((co, hw), jnp.float32)
        for x_ref, w_ref in zip(x_refs, w_refs):
            for ky in range(3):
                for kx in range(3):
                    off = pad + (ky - 1) * w + (kx - 1)
                    tap = x_ref[0, :, off:off + hw].astype(jnp.float32)
                    if kx == 0:
                        tap = tap * ml
                    elif kx == 2:
                        tap = tap * mr
                    acc = acc + jnp.dot(w_ref[ky * 3 + kx], tap,
                                        preferred_element_type=jnp.float32)
        res = acc + b_ref[...]                                # bias (Co,1) broadcast
        out_ref[0] = res
        sum_ref[0] = jnp.sum(res, axis=-1, keepdims=True)     # BN stats ride along
        sq_ref[0] = jnp.sum(res * res, axis=-1, keepdims=True)

    in_specs = (
        [pl.BlockSpec((1, c, hwp), lambda i: (i, 0, 0)) for c in cis]
        + [pl.BlockSpec((9, co, c), lambda i: (0, 0, 0)) for c in cis]
        + [pl.BlockSpec((co, 1), lambda i: (0, 0)),
           pl.BlockSpec((1, hw), lambda i: (0, 0)),
           pl.BlockSpec((1, hw), lambda i: (0, 0))])
    out_specs = [pl.BlockSpec((1, co, hw), lambda i: (i, 0, 0)),
                 pl.BlockSpec((1, co, 1), lambda i: (i, 0, 0)),
                 pl.BlockSpec((1, co, 1), lambda i: (i, 0, 0))]

    conv_out, sums, sqs = pl.pallas_call(
        kernel,
        out_shape=(jax.ShapeDtypeStruct((n, co, hw), jnp.float32),
                   jax.ShapeDtypeStruct((n, co, 1), jnp.float32),
                   jax.ShapeDtypeStruct((n, co, 1), jnp.float32)),
        grid_spec=pltpu.PrefetchScalarGridSpec(
            num_scalar_prefetch=0,
            grid=(n,),
            in_specs=in_specs,
            out_specs=out_specs),
        compiler_params=pltpu.CompilerParams(
            dimension_semantics=("parallel",),        # >=2 samples -> both v7x cores
            vmem_limit_bytes=_vmem_limit_bytes()),
    )(*xfs, *w9s, b2, mask_l, mask_r)

    ch_sum = jnp.sum(sums[:, :, 0], axis=0)
    ch_sq = jnp.sum(sqs[:, :, 0], axis=0)
    return conv_out, ch_sum, ch_sq


def _bn_fold(ch_sum, ch_sq, count, gamma, beta, eps):
    """Fold batch statistics into a single per-channel scale/shift (f32)."""
    mean = ch_sum / float(count)
    var = jnp.maximum(ch_sq / float(count) - mean * mean, 0.0)   # clamp: no NaN rsqrt
    inv_std = jax.lax.rsqrt(var + eps)
    scale = gamma.astype(jnp.float32) * inv_std
    shift = beta.astype(jnp.float32) - mean * scale
    return scale, shift


def _per_row(per_channel, n):
    c = per_channel.shape[0]
    return jnp.broadcast_to(per_channel.reshape(1, c), (n, c)).reshape(n * c, 1)


def _bn_relu_apply(rows, scale_rows, shift_rows, out_dtype):
    """y = relu(x * scale + shift), one fused FMA, lane-dense tiled streams."""
    nrows, hw = rows.shape
    row_t, hw_t = _elem_tiles(nrows, hw, jnp.dtype(rows.dtype).itemsize)
    grid = (pl.cdiv(nrows, row_t), pl.cdiv(hw, hw_t))

    def kernel(x_ref, sc_ref, sh_ref, o_ref):
        o_ref[...] = jnp.maximum(
            x_ref[...] * sc_ref[...] + sh_ref[...], 0.0).astype(o_ref.dtype)

    return pl.pallas_call(
        kernel,
        out_shape=jax.ShapeDtypeStruct((nrows, hw), out_dtype),
        grid_spec=pltpu.PrefetchScalarGridSpec(
            num_scalar_prefetch=0,
            grid=grid,
            in_specs=[pl.BlockSpec((row_t, hw_t), lambda r, t: (r, t)),
                      pl.BlockSpec((row_t, 1), lambda r, t: (r, 0)),
                      pl.BlockSpec((row_t, 1), lambda r, t: (r, 0))],
            out_specs=pl.BlockSpec((row_t, hw_t), lambda r, t: (r, t))),
        compiler_params=pltpu.CompilerParams(
            dimension_semantics=("parallel", "parallel"),
            vmem_limit_bytes=_vmem_limit_bytes()),
    )(rows, scale_rows, shift_rows)


def up_forward(x1, x2, params, *, eps=_EPS):
    """Forward of Up(in_channels, out_channels, bilinear=False) in training mode."""
    n, cin, h1, w1 = x1.shape
    n2, c2, h2, w2 = x2.shape
    assert n2 == n
    cout = params["w_b"].shape[0]
    assert c2 + cout == params["w_1"].shape[1]     # cat([x2, up(x1)]) feeds DoubleConv

    # ---- bottom_conv: Conv3x3 -> BN(batch stats) -> ReLU ----
    s, ssum, ssq = _conv3x3_bn_stats([x1], [params["w_b"]], params["b_b"], h1, w1)
    scale, shift = _bn_fold(ssum, ssq, n * h1 * w1, params["g_b"], params["be_b"], eps)
    y = _bn_relu_apply(s.reshape(n * cout, h1 * w1),
                       _per_row(scale, n), _per_row(shift, n), x1.dtype)
    y = y.reshape(n, cout, h1, w1)

    # ---- nn.Upsample(scale_factor=2, nearest) + F.pad to x2's spatial size ----
    y = jnp.repeat(jnp.repeat(y, 2, axis=2), 2, axis=3)
    d_y, d_x = h2 - y.shape[2], w2 - y.shape[3]
    y = jnp.pad(y, ((0, 0), (0, 0),
                    (d_y // 2, d_y - d_y // 2), (d_x // 2, d_x - d_x // 2)))

    # ---- DoubleConv conv1: torch.cat([x2, y], dim=1) folded into a 2-operand conv ----
    w_skip, w_up = params["w_1"][:, :c2], params["w_1"][:, c2:]
    s, ssum, ssq = _conv3x3_bn_stats([x2, y], [w_skip, w_up], params["b_1"], h2, w2)
    scale, shift = _bn_fold(ssum, ssq, n * h2 * w2, params["g_1"], params["be_1"], eps)
    z = _bn_relu_apply(s.reshape(n * cout, h2 * w2),
                       _per_row(scale, n), _per_row(shift, n), x1.dtype)
    z = z.reshape(n, cout, h2, w2)

    # ---- DoubleConv conv2 ----
    s, ssum, ssq = _conv3x3_bn_stats([z], [params["w_2"]], params["b_2"], h2, w2)
    scale, shift = _bn_fold(ssum, ssq, n * h2 * w2, params["g_2"], params["be_2"], eps)
    out = _bn_relu_apply(s.reshape(n * cout, h2 * w2),
                         _per_row(scale, n), _per_row(shift, n), x1.dtype)
    return out.reshape(n, cout, h2, w2)


def _reference(x1, x2, params, eps=_EPS):
    """Plain-JAX reference matching the PyTorch Up.forward (training-mode BN)."""
    def conv(x, wt, b):
        y = jax.lax.conv_general_dilated(
            x.astype(jnp.float32), wt.astype(jnp.float32), (1, 1),
            ((1, 1), (1, 1)), dimension_numbers=("NCHW", "OIHW", "NCHW"),
            precision=jax.lax.Precision.HIGHEST)
        return y + b.reshape(1, -1, 1, 1)

    def bn_relu(x, g, b):
        mean = x.mean(axis=(0, 2, 3), keepdims=True)
        var = x.var(axis=(0, 2, 3), keepdims=True)        # biased, like torch BN
        y = (x - mean) * jax.lax.rsqrt(var + eps)
        return jnp.maximum(y * g.reshape(1, -1, 1, 1) + b.reshape(1, -1, 1, 1), 0.0)

    h = bn_relu(conv(x1, params["w_b"], params["b_b"]), params["g_b"], params["be_b"])
    h = jnp.repeat(jnp.repeat(h, 2, axis=2), 2, axis=3)
    d_y, d_x = x2.shape[2] - h.shape[2], x2.shape[3] - h.shape[3]
    h = jnp.pad(h, ((0, 0), (0, 0),
                    (d_y // 2, d_y - d_y // 2), (d_x // 2, d_x - d_x // 2)))
    xcat = jnp.concatenate([x2, h], axis=1)
    h = bn_relu(conv(xcat, params["w_1"], params["b_1"]), params["g_1"], params["be_1"])
    h = bn_relu(conv(h, params["w_2"], params["b_2"]), params["g_2"], params["be_2"])
    return h


if __name__ == "__main__":
    # Up(in_channels=8, out_channels=4): x1 is the low-res feature map (8 channels),
    # x2 is the skip connection (4 channels) at 2x the spatial resolution.
    N = 2
    IN_CH, OUT_CH = 8, 4
    H1 = W1 = 8
    H2 = W2 = 16
    C2 = IN_CH - OUT_CH

    key = jax.random.PRNGKey(0)
    ks = jax.random.split(key, 16)
    x1 = jax.random.normal(ks[0], (N, IN_CH, H1, W1), jnp.float32)
    x2 = jax.random.normal(ks[1], (N, C2, H2, W2), jnp.float32)

    def w_init(k, co, ci):
        return (1.0 / (3.0 * float(ci) ** 0.5)) * jax.random.normal(
            k, (co, ci, 3, 3), jnp.float32)

    params = {
        # bottom_conv: Conv(IN_CH -> OUT_CH) + BN + ReLU
        "w_b": w_init(ks[2], OUT_CH, IN_CH),
        "b_b": 0.1 * jax.random.normal(ks[3], (OUT_CH,), jnp.float32),
        "g_b": 1.0 + 0.1 * jax.random.normal(ks[4], (OUT_CH,), jnp.float32),
        "be_b": 0.1 * jax.random.normal(ks[5], (OUT_CH,), jnp.float32),
        # DoubleConv conv1: Conv(IN_CH -> OUT_CH) + BN + ReLU
        "w_1": w_init(ks[6], OUT_CH, IN_CH),
        "b_1": 0.1 * jax.random.normal(ks[7], (OUT_CH,), jnp.float32),
        "g_1": 1.0 + 0.1 * jax.random.normal(ks[8], (OUT_CH,), jnp.float32),
        "be_1": 0.1 * jax.random.normal(ks[9], (OUT_CH,), jnp.float32),
        # DoubleConv conv2: Conv(OUT_CH -> OUT_CH) + BN + ReLU
        "w_2": w_init(ks[10], OUT_CH, OUT_CH),
        "b_2": 0.1 * jax.random.normal(ks[11], (OUT_CH,), jnp.float32),
        "g_2": 1.0 + 0.1 * jax.random.normal(ks[12], (OUT_CH,), jnp.float32),
        "be_2": 0.1 * jax.random.normal(ks[13], (OUT_CH,), jnp.float32),
    }

    out = jax.block_until_ready(jax.jit(up_forward)(x1, x2, params))
    assert out.shape == (N, OUT_CH, H2, W2), out.shape
    ref = _reference(x1, x2, params)
    err = float(jnp.max(jnp.abs(out - ref)))
    assert err < 3e-2, err
    print("KERNEL_OK")
</pallas_src>

<mosaic_0001>
module attributes {stable_mosaic.version = 11 : i64} {
  func.func @kernel(%arg0: i32, %arg1: i32, %arg2: memref<8x64xf32, #tpu.memory_space<vmem>>, %arg3: memref<8x1xf32, #tpu.memory_space<vmem>>, %arg4: memref<8x1xf32, #tpu.memory_space<vmem>>, %arg5: memref<8x64xf32, #tpu.memory_space<vmem>>) attributes {dimension_semantics = [#tpu.dimension_semantics<parallel>, #tpu.dimension_semantics<parallel>], iteration_bounds = array<i64: 1, 1>, scalar_prefetch = 0 : i64, scratch_operands = 0 : i64, tpu.core_type = #tpu.core_type<tc>, window_params = [{transform_indices = @transform_0, window_bounds = array<i64: 8, 64>}, {transform_indices = @transform_1, window_bounds = array<i64: 8, 1>}, {transform_indices = @transform_2, window_bounds = array<i64: 8, 1>}, {transform_indices = @transform_3, window_bounds = array<i64: 8, 64>}]} {
    %c0 = arith.constant 0 : index
    %c0_0 = arith.constant 0 : index
    %0 = vector.load %arg2[%c0, %c0_0] : memref<8x64xf32, #tpu.memory_space<vmem>>, vector<8x64xf32>
    %c0_1 = arith.constant 0 : index
    %c0_2 = arith.constant 0 : index
    %1 = vector.load %arg3[%c0_1, %c0_2] : memref<8x1xf32, #tpu.memory_space<vmem>>, vector<8x1xf32>
    %2 = vector.broadcast %1 : vector<8x1xf32> to vector<8x64xf32>
    %3 = arith.mulf %0, %2 : vector<8x64xf32>
    %c0_3 = arith.constant 0 : index
    %c0_4 = arith.constant 0 : index
    %4 = vector.load %arg4[%c0_3, %c0_4] : memref<8x1xf32, #tpu.memory_space<vmem>>, vector<8x1xf32>
    %5 = vector.broadcast %4 : vector<8x1xf32> to vector<8x64xf32>
    %6 = arith.addf %3, %5 : vector<8x64xf32>
    %cst = arith.constant 0.000000e+00 : f32
    %7 = vector.broadcast %cst : f32 to vector<8x64xf32>
    %8 = arith.maximumf %6, %7 : vector<8x64xf32>
    %c0_5 = arith.constant 0 : index
    %c0_6 = arith.constant 0 : index
    %9 = vector.load %arg5[%c0_5, %c0_6] : memref<8x64xf32, #tpu.memory_space<vmem>>, vector<8x64xf32>
    tpu.vector_store %arg5[%c0_5, %c0_6], %8 {strides = array<i32>} : memref<8x64xf32, #tpu.memory_space<vmem>>, vector<8x64xf32>,
    return
  }
  func.func @transform_0(%arg0: i32, %arg1: i32) -> (i32, i32) {
    %c0_i32 = arith.constant 0 : i32
    return %arg0, %arg1 : i32, i32
  }
  func.func @transform_1(%arg0: i32, %arg1: i32) -> (i32, i32) {
    %c0_i32 = arith.constant 0 : i32
    %c0_i32_0 = arith.constant 0 : i32
    return %arg0, %c0_i32 : i32, i32
  }
  func.func @transform_2(%arg0: i32, %arg1: i32) -> (i32, i32) {
    %c0_i32 = arith.constant 0 : i32
    %c0_i32_0 = arith.constant 0 : i32
    return %arg0, %c0_i32 : i32, i32
  }
  func.func @transform_3(%arg0: i32, %arg1: i32) -> (i32, i32) {
    %c0_i32 = arith.constant 0 : i32
    return %arg0, %arg1 : i32, i32
  }
}

module attributes {stable_mosaic.version = 11 : i64} {
  func.func @kernel(%arg0: i32, %arg1: memref<1x8x82xf32, #tpu.memory_space<vmem>>, %arg2: memref<9x4x8xf32, #tpu.memory_space<vmem>>, %arg3: memref<4x1xf32, #tpu.memory_space<vmem>>, %arg4: memref<1x64xf32, #tpu.memory_space<vmem>>, %arg5: memref<1x64xf32, #tpu.memory_space<vmem>>, %arg6: memref<1x4x64xf32, #tpu.memory_space<vmem>>, %arg7: memref<1x4x1xf32, #tpu.memory_space<vmem>>, %arg8: memref<1x4x1xf32, #tpu.memory_space<vmem>>) attributes {dimension_semantics = [#tpu.dimension_semantics<parallel>], iteration_bounds = array<i64: 2>, scalar_prefetch = 0 : i64, scratch_operands = 0 : i64, tpu.core_type = #tpu.core_type<tc>, window_params = [{transform_indices = @transform_0, window_bounds = array<i64: 1, 8, 82>}, {pipeline_mode = #tpu.pipeline_mode<synchronous>, transform_indices = @transform_1, window_bounds = array<i64: 9, 4, 8>}, {pipeline_mode = #tpu.pipeline_mode<synchronous>, transform_indices = @transform_2, window_bounds = array<i64: 4, 1>}, {pipeline_mode = #tpu.pipeline_mode<synchronous>, transform_indices = @transform_3, window_bounds = array<i64: 1, 64>}, {pipeline_mode = #tpu.pipeline_mode<synchronous>, transform_indices = @transform_4, window_bounds = array<i64: 1, 64>}, {transform_indices = @transform_5, window_bounds = array<i64: 1, 4, 64>}, {transform_indices = @transform_6, window_bounds = array<i64: 1, 4, 1>}, {transform_indices = @transform_7, window_bounds = array<i64: 1, 4, 1>}]} {
    %c0 = arith.constant 0 : index
    %c0_0 = arith.constant 0 : index
    %0 = vector.load %arg4[%c0, %c0_0] : memref<1x64xf32, #tpu.memory_space<vmem>>, vector<1x64xf32>
    %c0_1 = arith.constant 0 : index
    %c0_2 = arith.constant 0 : index
    %1 = vector.load %arg5[%c0_1, %c0_2] : memref<1x64xf32, #tpu.memory_space<vmem>>, vector<1x64xf32>
    %cst = arith.constant 0.000000e+00 : f32
    %2 = vector.broadcast %cst : f32 to vector<4x64xf32>
    %c0_3 = arith.constant 0 : index
    %c0_4 = arith.constant 0 : index
    %c0_5 = arith.constant 0 : index
    %3 = vector.load %arg1[%c0_3, %c0_4, %c0_5] : memref<1x8x82xf32, #tpu.memory_space<vmem>>, vector<1x8x64xf32>
    %4 = vector.shape_cast %3 : vector<1x8x64xf32> to vector<8x64xf32>
    %5 = vector.broadcast %0 : vector<1x64xf32> to vector<8x64xf32>
    %6 = arith.mulf %4, %5 : vector<8x64xf32>
    %c0_6 = arith.constant 0 : index
    %c0_7 = arith.constant 0 : index
    %c0_8 = arith.constant 0 : index
    %7 = vector.load %arg2[%c0_6, %c0_7, %c0_8] : memref<9x4x8xf32, #tpu.memory_space<vmem>>, vector<1x4x8xf32>
    %8 = vector.shape_cast %7 : vector<1x4x8xf32> to vector<4x8xf32>
    %cst_9 = arith.constant dense<0.000000e+00> : vector<4x64xf32>
    %9 = tpu.matmul %8, %6, %cst_9 {dimension_numbers = #tpu.dot_dimension_numbers<[1], [0], [0], [1], [0, 0, 1, 1], [], []>} : vector<4x8xf32>, vector<8x64xf32>, vector<4x64xf32> -> vector<4x64xf32>
    %10 = arith.addf %2, %9 : vector<4x64xf32>
    %c0_10 = arith.constant 0 : index
    %c0_11 = arith.constant 0 : index
    %c1 = arith.constant 1 : index
    %11 = vector.load %arg1[%c0_10, %c0_11, %c1] : memref<1x8x82xf32, #tpu.memory_space<vmem>>, vector<1x8x64xf32>
    %12 = vector.shape_cast %11 : vector<1x8x64xf32> to vector<8x64xf32>
    %c1_12 = arith.constant 1 : index
    %c0_13 = arith.constant 0 : index
    %c0_14 = arith.constant 0 : index
    %13 = vector.load %arg2[%c1_12, %c0_13, %c0_14] : memref<9x4x8xf32, #tpu.memory_space<vmem>>, vector<1x4x8xf32>
    %14 = vector.shape_cast %13 : vector<1x4x8xf32> to vector<4x8xf32>
    %cst_15 = arith.constant dense<0.000000e+00> : vector<4x64xf32>
    %15 = tpu.matmul %14, %12, %cst_15 {dimension_numbers = #tpu.dot_dimension_numbers<[1], [0], [0], [1], [0, 0, 1, 1], [], []>} : vector<4x8xf32>, vector<8x64xf32>, vector<4x64xf32> -> vector<4x64xf32>
    %16 = arith.addf %10, %15 : vector<4x64xf32>
    %c0_16 = arith.constant 0 : index
    %c0_17 = arith.constant 0 : index
    %c2 = arith.constant 2 : index
    %17 = vector.load %arg1[%c0_16, %c0_17, %c2] : memref<1x8x82xf32, #tpu.memory_space<vmem>>, vector<1x8x64xf32>
    %18 = vector.shape_cast %17 : vector<1x8x64xf32> to vector<8x64xf32>
    %19 = vector.broadcast %1 : vector<1x64xf32> to vector<8x64xf32>
    %20 = arith.mulf %18, %19 : vector<8x64xf32>
    %c2_18 = arith.constant 2 : index
    %c0_19 = arith.constant 0 : index
    %c0_20 = arith.constant 0 : index
    %21 = vector.load %arg2[%c2_18, %c0_19, %c0_20] : memref<9x4x8xf32, #tpu.memory_space<vmem>>, vector<1x4x8xf32>
    %22 = vector.shape_cast %21 : vector<1x4x8xf32> to vector<4x8xf32>
    %cst_21 = arith.constant dense<0.000000e+00> : vector<4x64xf32>
    %23 = tpu.matmul %22, %20, %cst_21 {dimension_numbers = #tpu.dot_dimension_numbers<[1], [0], [0], [1], [0, 0, 1, 1], [], []>} : vector<4x8xf32>, vector<8x64xf32>, vector<4x64xf32> -> vector<4x64xf32>
    %24 = arith.addf %16, %23 : vector<4x64xf32>
    %c0_22 = arith.constant 0 : index
    %c0_23 = arith.constant 0 : index
    %c8 = arith.constant 8 : index
    %25 = vector.load %arg1[%c0_22, %c0_23, %c8] : memref<1x8x82xf32, #tpu.memory_space<vmem>>, vector<1x8x64xf32>
    %26 = vector.shape_cast %25 : vector<1x8x64xf32> to vector<8x64xf32>
    %27 = vector.broadcast %0 : vector<1x64xf32> to vector<8x64xf32>
    %28 = arith.mulf %26, %27 : vector<8x64xf32>
    %c3 = arith.constant 3 : index
    %c0_24 = arith.constant 0 : index
    %c0_25 = arith.constant 0 : index
    %29 = vector.load %arg2[%c3, %c0_24, %c0_25] : memref<9x4x8xf32, #tpu.memory_space<vmem>>, vector<1x4x8xf32>
    %30 = vector.shape_cast %29 : vector<1x4x8xf32> to vector<4x8xf32>
    %cst_26 = arith.constant dense<0.000000e+00> : vector<4x64xf32>
    %31 = tpu.matmul %30, %28, %cst_26 {dimension_numbers = #tpu.dot_dimension_numbers<[1], [0], [0], [1], [0, 0, 1, 1], [], []>} : vector<4x8xf32>, vector<8x64xf32>, vector<4x64xf32> -> vector<4x64xf32>
    %32 = arith.addf %24, %31 : vector<4x64xf32>
    %c0_27 = arith.constant 0 : index
    %c0_28 = arith.constant 0 : index
    %c9 = arith.constant 9 : index
    %33 = vector.load %arg1[%c0_27, %c0_28, %c9] : memref<1x8x82xf32, #tpu.memory_space<vmem>>, vector<1x8x64xf32>
    %34 = vector.shape_cast %33 : vector<1x8x64xf32> to vector<8x64xf32>
    %c4 = arith.constant 4 : index
    %c0_29 = arith.constant 0 : index
    %c0_30 = arith.constant 0 : index
    %35 = vector.load %arg2[%c4, %c0_29, %c0_30] : memref<9x4x8xf32, #tpu.memory_space<vmem>>, vector<1x4x8xf32>
    %36 = vector.shape_cast %35 : vector<1x4x8xf32> to vector<4x8xf32>
    %cst_31 = arith.constant dense<0.000000e+00> : vector<4x64xf32>
    %37 = tpu.matmul %36, %34, %cst_31 {dimension_numbers = #tpu.dot_dimension_numbers<[1], [0], [0], [1], [0, 0, 1, 1], [], []>} : vector<4x8xf32>, vector<8x64xf32>, vector<4x64xf32> -> vector<4x64xf32>
    %38 = arith.addf %32, %37 : vector<4x64xf32>
    %c0_32 = arith.constant 0 : index
    %c0_33 = arith.constant 0 : index
    %c10 = arith.constant 10 : index
    %39 = vector.load %arg1[%c0_32, %c0_33, %c10] : memref<1x8x82xf32, #tpu.memory_space<vmem>>, vector<1x8x64xf32>
    %40 = vector.shape_cast %39 : vector<1x8x64xf32> to vector<8x64xf32>
    %41 = vector.broadcast %1 : vector<1x64xf32> to vector<8x64xf32>
    %42 = arith.mulf %40, %41 : vector<8x64xf32>
    %c5 = arith.constant 5 : index
    %c0_34 = arith.constant 0 : index
    %c0_35 = arith.constant 0 : index
    %43 = vector.load %arg2[%c5, %c0_34, %c0_35] : memref<9x4x8xf32, #tpu.memory_space<vmem>>, vector<1x4x8xf32>
    %44 = vector.shape_cast %43 : vector<1x4x8xf32> to vector<4x8xf32>
    %cst_36 = arith.constant dense<0.000000e+00> : vector<4x64xf32>
    %45 = tpu.matmul %44, %42, %cst_36 {dimension_numbers = #tpu.dot_dimension_numbers<[1], [0], [0], [1], [0, 0, 1, 1], [], []>} : vector<4x8xf32>, vector<8x64xf32>, vector<4x64xf32> -> vector<4x64xf32>
    %46 = arith.addf %38, %45 : vector<4x64xf32>
    %c0_37 = arith.constant 0 : index
    %c0_38 = arith.constant 0 : index
    %c16 = arith.constant 16 : index
    %47 = vector.load %arg1[%c0_37, %c0_38, %c16] : memref<1x8x82xf32, #tpu.memory_space<vmem>>, vector<1x8x64xf32>
    %48 = vector.shape_cast %47 : vector<1x8x64xf32> to vector<8x64xf32>
    %49 = vector.broadcast %0 : vector<1x64xf32> to vector<8x64xf32>
    %50 = arith.mulf %48, %49 : vector<8x64xf32>
    %c6 = arith.constant 6 : index
    %c0_39 = arith.constant 0 : index
    %c0_40 = arith.constant 0 : index
    %51 = vector.load %arg2[%c6, %c0_39, %c0_40] : memref<9x4x8xf32, #tpu.memory_space<vmem>>, vector<1x4x8xf32>
    %52 = vector.shape_cast %51 : vector<1x4x8xf32> to vector<4x8xf32>
    %cst_41 = arith.constant dense<0.000000e+00> : vector<4x64xf32>
    %53 = tpu.matmul %52, %50, %cst_41 {dimension_numbers = #tpu.dot_dimension_numbers<[1], [0], [0], [1], [0, 0, 1, 1], [], []>} : vector<4x8xf32>, vector<8x64xf32>, vector<4x64xf32> -> vector<4x64xf32>
    %54 = arith.addf %46, %53 : vector<4x64xf32>
    %c0_42 = arith.constant 0 : index
    %c0_43 = arith.constant 0 : index
    %c17 = arith.constant 17 : index
    %55 = vector.load %arg1[%c0_42, %c0_43, %c17] : memref<1x8x82xf32, #tpu.memory_space<vmem>>, vector<1x8x64xf32>
    %56 = vector.shape_cast %55 : vector<1x8x64xf32> to vector<8x64xf32>
    %c7 = arith.constant 7 : index
    %c0_44 = arith.constant 0 : index
    %c0_45 = arith.constant 0 : index
    %57 = vector.load %arg2[%c7, %c0_44, %c0_45] : memref<9x4x8xf32, #tpu.memory_space<vmem>>, vector<1x4x8xf32>
    %58 = vector.shape_cast %57 : vector<1x4x8xf32> to vector<4x8xf32>
    %cst_46 = arith.constant dense<0.000000e+00> : vector<4x64xf32>
    %59 = tpu.matmul %58, %56, %cst_46 {dimension_numbers = #tpu.dot_dimension_numbers<[1], [0], [0], [1], [0, 0, 1, 1], [], []>} : vector<4x8xf32>, vector<8x64xf32>, vector<4x64xf32> -> vector<4x64xf32>
    %60 = arith.addf %54, %59 : vector<4x64xf32>
    %c0_47 = arith.constant 0 : index
    %c0_48 = arith.constant 0 : index
    %c18 = arith.constant 18 : index
    %61 = vector.load %arg1[%c0_47, %c0_48, %c18] : memref<1x8x82xf32, #tpu.memory_space<vmem>>, vector<1x8x64xf32>
    %62 = vector.shape_cast %61 : vector<1x8x64xf32> to vector<8x64xf32>
    %63 = vector.broadcast %1 : vector<1x64xf32> to vector<8x64xf32>
    %64 = arith.mulf %62, %63 : vector<8x64xf32>
    %c8_49 = arith.constant 8 : index
    %c0_50 = arith.constant 0 : index
    %c0_51 = arith.constant 0 : index
    %65 = vector.load %arg2[%c8_49, %c0_50, %c0_51] : memref<9x4x8xf32, #tpu.memory_space<vmem>>, vector<1x4x8xf32>
    %66 = vector.shape_cast %65 : vector<1x4x8xf32> to vector<4x8xf32>
    %cst_52 = arith.constant dense<0.000000e+00> : vector<4x64xf32>
    %67 = tpu.matmul %66, %64, %cst_52 {dimension_numbers = #tpu.dot_dimension_numbers<[1], [0], [0], [1], [0, 0, 1, 1], [], []>} : vector<4x8xf32>, vector<8x64xf32>, vector<4x64xf32> -> vector<4x64xf32>
    %68 = arith.addf %60, %67 : vector<4x64xf32>
    %c0_53 = arith.constant 0 : index
    %c0_54 = arith.constant 0 : index
    %69 = vector.load %arg3[%c0_53, %c0_54] : memref<4x1xf32, #tpu.memory_space<vmem>>, vector<4x1xf32>
    %70 = vector.broadcast %69 : vector<4x1xf32> to vector<4x64xf32>
    %71 = arith.addf %68, %70 : vector<4x64xf32>
    %c0_55 = arith.constant 0 : index
    %c0_56 = arith.constant 0 : index
    %c0_57 = arith.constant 0 : index
    %72 = vector.load %arg6[%c0_55, %c0_56, %c0_57] : memref<1x4x64xf32, #tpu.memory_space<vmem>>, vector<1x4x64xf32>
    %73 = vector.shape_cast %72 : vector<1x4x64xf32> to vector<4x64xf32>
    %74 = vector.shape_cast %71 : vector<4x64xf32> to vector<1x4x64xf32>
    tpu.vector_store %arg6[%c0_55, %c0_56, %c0_57], %74 {strides = array<i32>} : memref<1x4x64xf32, #tpu.memory_space<vmem>>, vector<1x4x64xf32>,
    %cst_58 = arith.constant dense<0.000000e+00> : vector<4xf32>
    %75 = vector.multi_reduction <add>, %71, %cst_58 [1] : vector<4x64xf32> to vector<4xf32>
    %76 = vector.shape_cast %75 : vector<4xf32> to vector<4x1xf32>
    %c0_59 = arith.constant 0 : index
    %c0_60 = arith.constant 0 : index
    %c0_61 = arith.constant 0 : index
    %77 = vector.load %arg7[%c0_59, %c0_60, %c0_61] : memref<1x4x1xf32, #tpu.memory_space<vmem>>, vector<1x4x1xf32>
    %78 = vector.shape_cast %77 : vector<1x4x1xf32> to vector<4x1xf32>
    %79 = vector.shape_cast %76 : vector<4x1xf32> to vector<1x4x1xf32>
    tpu.vector_store %arg7[%c0_59, %c0_60, %c0_61], %79 {strides = array<i32>} : memref<1x4x1xf32, #tpu.memory_space<vmem>>, vector<1x4x1xf32>,
    %80 = arith.mulf %71, %71 : vector<4x64xf32>
    %cst_62 = arith.constant dense<0.000000e+00> : vector<4xf32>
    %81 = vector.multi_reduction <add>, %80, %cst_62 [1] : vector<4x64xf32> to vector<4xf32>
    %82 = vector.shape_cast %81 : vector<4xf32> to vector<4x1xf32>
    %c0_63 = arith.constant 0 : index
    %c0_64 = arith.constant 0 : index
    %c0_65 = arith.constant 0 : index
    %83 = vector.load %arg8[%c0_63, %c0_64, %c0_65] : memref<1x4x1xf32, #tpu.memory_space<vmem>>, vector<1x4x1xf32>
    %84 = vector.shape_cast %83 : vector<1x4x1xf32> to vector<4x1xf32>
    %85 = vector.shape_cast %82 : vector<4x1xf32> to vector<1x4x1xf32>
    tpu.vector_store %arg8[%c0_63, %c0_64, %c0_65], %85 {strides = array<i32>} : memref<1x4x1xf32, #tpu.memory_space<vmem>>, vector<1x4x1xf32>,
    return
  }
  func.func @transform_0(%arg0: i32) -> (i32, i32, i32) {
    %c0_i32 = arith.constant 0 : i32
    %c0_i32_0 = arith.constant 0 : i32
    %c0_i32_1 = arith.constant 0 : i32
    return %arg0, %c0_i32, %c0_i32_0 : i32, i32, i32
  }
  func.func @transform_1(%arg0: i32) -> (i32, i32, i32) {
    %c0_i32 = arith.constant 0 : i32
    %c0_i32_0 = arith.constant 0 : i32
    %c0_i32_1 = arith.constant 0 : i32
    %c0_i32_2 = arith.constant 0 : i32
    return %c0_i32, %c0_i32_0, %c0_i32_1 : i32, i32, i32
  }
  func.func @transform_2(%arg0: i32) -> (i32, i32) {
    %c0_i32 = arith.constant 0 : i32
    %c0_i32_0 = arith.constant 0 : i32
    %c0_i32_1 = arith.constant 0 : i32
    return %c0_i32, %c0_i32_0 : i32, i32
  }
  func.func @transform_3(%arg0: i32) -> (i32, i32) {
    %c0_i32 = arith.constant 0 : i32
    %c0_i32_0 = arith.constant 0 : i32
    %c0_i32_1 = arith.constant 0 : i32
    return %c0_i32, %c0_i32_0 : i32, i32
  }
  func.func @transform_4(%arg0: i32) -> (i32, i32) {
    %c0_i32 = arith.constant 0 : i32
    %c0_i32_0 = arith.constant 0 : i32
    %c0_i32_1 = arith.constant 0 : i32
    return %c0_i32, %c0_i32_0 : i32, i32
  }
  func.func @transform_5(%arg0: i32) -> (i32, i32, i32) {
    %c0_i32 = arith.constant 0 : i32
    %c0_i32_0 = arith.constant 0 : i32
    %c0_i32_1 = arith.constant 0 : i32
    return %arg0, %c0_i32, %c0_i32_0 : i32, i32, i32
  }
  func.func @transform_6(%arg0: i32) -> (i32, i32, i32) {
    %c0_i32 = arith.constant 0 : i32
    %c0_i32_0 = arith.constant 0 : i32
    %c0_i32_1 = arith.constant 0 : i32
    return %arg0, %c0_i32, %c0_i32_0 : i32, i32, i32
  }
  func.func @transform_7(%arg0: i32) -> (i32, i32, i32) {
    %c0_i32 = arith.constant 0 : i32
    %c0_i32_0 = arith.constant 0 : i32
    %c0_i32_1 = arith.constant 0 : i32
    return %arg0, %c0_i32, %c0_i32_0 : i32, i32, i32
  }
}

module attributes {stable_mosaic.version = 11 : i64} {
  func.func @kernel(%arg0: i32, %arg1: memref<1x4x290xf32, #tpu.memory_space<vmem>>, %arg2: memref<1x4x290xf32, #tpu.memory_space<vmem>>, %arg3: memref<9x4x4xf32, #tpu.memory_space<vmem>>, %arg4: memref<9x4x4xf32, #tpu.memory_space<vmem>>, %arg5: memref<4x1xf32, #tpu.memory_space<vmem>>, %arg6: memref<1x256xf32, #tpu.memory_space<vmem>>, %arg7: memref<1x256xf32, #tpu.memory_space<vmem>>, %arg8: memref<1x4x256xf32, #tpu.memory_space<vmem>>, %arg9: memref<1x4x1xf32, #tpu.memory_space<vmem>>, %arg10: memref<1x4x1xf32, #tpu.memory_space<vmem>>) attributes {dimension_semantics = [#tpu.dimension_semantics<parallel>], iteration_bounds = array<i64: 2>, scalar_prefetch = 0 : i64, scratch_operands = 0 : i64, tpu.core_type = #tpu.core_type<tc>, window_params = [{transform_indices = @transform_0, window_bounds = array<i64: 1, 4, 290>}, {transform_indices = @transform_1, window_bounds = array<i64: 1, 4, 290>}, {pipeline_mode = #tpu.pipeline_mode<synchronous>, transform_indices = @transform_2, window_bounds = array<i64: 9, 4, 4>}, {pipeline_mode = #tpu.pipeline_mode<synchronous>, transform_indices = @transform_3, window_bounds = array<i64: 9, 4, 4>}, {pipeline_mode = #tpu.pipeline_mode<synchronous>, transform_indices = @transform_4, window_bounds = array<i64: 4, 1>}, {pipeline_mode = #tpu.pipeline_mode<synchronous>, transform_indices = @transform_5, window_bounds = array<i64: 1, 256>}, {pipeline_mode = #tpu.pipeline_mode<synchronous>, transform_indices = @transform_6, window_bounds = array<i64: 1, 256>}, {transform_indices = @transform_7, window_bounds = array<i64: 1, 4, 256>}, {transform_indices = @transform_8, window_bounds = array<i64: 1, 4, 1>}, {transform_indices = @transform_9, window_bounds = array<i64: 1, 4, 1>}]} {
    %c0 = arith.constant 0 : index
    %c0_0 = arith.constant 0 : index
    %0 = vector.load %arg6[%c0, %c0_0] : memref<1x256xf32, #tpu.memory_space<vmem>>, vector<1x256xf32>
    %c0_1 = arith.constant 0 : index
    %c0_2 = arith.constant 0 : index
    %1 = vector.load %arg7[%c0_1, %c0_2] : memref<1x256xf32, #tpu.memory_space<vmem>>, vector<1x256xf32>
    %cst = arith.constant 0.000000e+00 : f32
    %2 = vector.broadcast %cst : f32 to vector<4x256xf32>
    %c0_3 = arith.constant 0 : index
    %c0_4 = arith.constant 0 : index
    %c0_5 = arith.constant 0 : index
    %3 = vector.load %arg1[%c0_3, %c0_4, %c0_5] : memref<1x4x290xf32, #tpu.memory_space<vmem>>, vector<1x4x256xf32>
    %4 = vector.shape_cast %3 : vector<1x4x256xf32> to vector<4x256xf32>
    %5 = vector.broadcast %0 : vector<1x256xf32> to vector<4x256xf32>
    %6 = arith.mulf %4, %5 : vector<4x256xf32>
    %c0_6 = arith.constant 0 : index
    %c0_7 = arith.constant 0 : index
    %c0_8 = arith.constant 0 : index
    %7 = vector.load %arg3[%c0_6, %c0_7, %c0_8] : memref<9x4x4xf32, #tpu.memory_space<vmem>>, vector<1x4x4xf32>
    %8 = vector.shape_cast %7 : vector<1x4x4xf32> to vector<4x4xf32>
    %cst_9 = arith.constant dense<0.000000e+00> : vector<4x256xf32>
    %9 = tpu.matmul %8, %6, %cst_9 {dimension_numbers = #tpu.dot_dimension_numbers<[1], [0], [0], [1], [0, 0, 1, 1], [], []>} : vector<4x4xf32>, vector<4x256xf32>, vector<4x256xf32> -> vector<4x256xf32>
    %10 = arith.addf %2, %9 : vector<4x256xf32>
    %c0_10 = arith.constant 0 : index
    %c0_11 = arith.constant 0 : index
    %c1 = arith.constant 1 : index
    %11 = vector.load %arg1[%c0_10, %c0_11, %c1] : memref<1x4x290xf32, #tpu.memory_space<vmem>>, vector<1x4x256xf32>
    %12 = vector.shape_cast %11 : vector<1x4x256xf32> to vector<4x256xf32>
    %c1_12 = arith.constant 1 : index
    %c0_13 = arith.constant 0 : index
    %c0_14 = arith.constant 0 : index
    %13 = vector.load %arg3[%c1_12, %c0_13, %c0_14] : memref<9x4x4xf32, #tpu.memory_space<vmem>>, vector<1x4x4xf32>
    %14 = vector.shape_cast %13 : vector<1x4x4xf32> to vector<4x4xf32>
    %cst_15 = arith.constant dense<0.000000e+00> : vector<4x256xf32>
    %15 = tpu.matmul %14, %12, %cst_15 {dimension_numbers = #tpu.dot_dimension_numbers<[1], [0], [0], [1], [0, 0, 1, 1], [], []>} : vector<4x4xf32>, vector<4x256xf32>, vector<4x256xf32> -> vector<4x256xf32>
    %16 = arith.addf %10, %15 : vector<4x256xf32>
    %c0_16 = arith.constant 0 : index
    %c0_17 = arith.constant 0 : index
    %c2 = arith.constant 2 : index
    %17 = vector.load %arg1[%c0_16, %c0_17, %c2] : memref<1x4x290xf32, #tpu.memory_space<vmem>>, vector<1x4x256xf32>
    %18 = vector.shape_cast %17 : vector<1x4x256xf32> to vector<4x256xf32>
    %19 = vector.broadcast %1 : vector<1x256xf32> to vector<4x256xf32>
    %20 = arith.mulf %18, %19 : vector<4x256xf32>
    %c2_18 = arith.constant 2 : index
    %c0_19 = arith.constant 0 : index
    %c0_20 = arith.constant 0 : index
    %21 = vector.load %arg3[%c2_18, %c0_19, %c0_20] : memref<9x4x4xf32, #tpu.memory_space<vmem>>, vector<1x4x4xf32>
    %22 = vector.shape_cast %21 : vector<1x4x4xf32> to vector<4x4xf32>
    %cst_21 = arith.constant dense<0.000000e+00> : vector<4x256xf32>
    %23 = tpu.matmul %22, %20, %cst_21 {dimension_numbers = #tpu.dot_dimension_numbers<[1], [0], [0], [1], [0, 0, 1, 1], [], []>} : vector<4x4xf32>, vector<4x256xf32>, vector<4x256xf32> -> vector<4x256xf32>
    %24 = arith.addf %16, %23 : vector<4x256xf32>
    %c0_22 = arith.constant 0 : index
    %c0_23 = arith.constant 0 : index
    %c16 = arith.constant 16 : index
    %25 = vector.load %arg1[%c0_22, %c0_23, %c16] : memref<1x4x290xf32, #tpu.memory_space<vmem>>, vector<1x4x256xf32>
    %26 = vector.shape_cast %25 : vector<1x4x256xf32> to vector<4x256xf32>
    %27 = vector.broadcast %0 : vector<1x256xf32> to vector<4x256xf32>
    %28 = arith.mulf %26, %27 : vector<4x256xf32>
    %c3 = arith.constant 3 : index
    %c0_24 = arith.constant 0 : index
    %c0_25 = arith.constant 0 : index
    %29 = vector.load %arg3[%c3, %c0_24, %c0_25] : memref<9x4x4xf32, #tpu.memory_space<vmem>>, vector<1x4x4xf32>
    %30 = vector.shape_cast %29 : vector<1x4x4xf32> to vector<4x4xf32>
    %cst_26 = arith.constant dense<0.000000e+00> : vector<4x256xf32>
    %31 = tpu.matmul %30, %28, %cst_26 {dimension_numbers = #tpu.dot_dimension_numbers<[1], [0], [0], [1], [0, 0, 1, 1], [], []>} : vector<4x4xf32>, vector<4x256xf32>, vector<4x256xf32> -> vector<4x256xf32>
    %32 = arith.addf %24, %31 : vector<4x256xf32>
    %c0_27 = arith.constant 0 : index
    %c0_28 = arith.constant 0 : index
    %c17 = arith.constant 17 : index
    %33 = vector.load %arg1[%c0_27, %c0_28, %c17] : memref<1x4x290xf32, #tpu.memory_space<vmem>>, vector<1x4x256xf32>
    %34 = vector.shape_cast %33 : vector<1x4x256xf32> to vector<4x256xf32>
    %c4 = arith.constant 4 : index
    %c0_29 = arith.constant 0 : index
    %c0_30 = arith.constant 0 : index
    %35 = vector.load %arg3[%c4, %c0_29, %c0_30] : memref<9x4x4xf32, #tpu.memory_space<vmem>>, vector<1x4x4xf32>
    %36 = vector.shape_cast %35 : vector<1x4x4xf32> to vector<4x4xf32>
    %cst_31 = arith.constant dense<0.000000e+00> : vector<4x256xf32>
    %37 = tpu.matmul %36, %34, %cst_31 {dimension_numbers = #tpu.dot_dimension_numbers<[1], [0], [0], [1], [0, 0, 1, 1], [], []>} : vector<4x4xf32>, vector<4x256xf32>, vector<4x256xf32> -> vector<4x256xf32>
    %38 = arith.addf %32, %37 : vector<4x256xf32>
    %c0_32 = arith.constant 0 : index
    %c0_33 = arith.constant 0 : index
    %c18 = arith.constant 18 : index
    %39 = vector.load %arg1[%c0_32, %c0_33, %c18] : memref<1x4x290xf32, #tpu.memory_space<vmem>>, vector<1x4x256xf32>
    %40 = vector.shape_cast %39 : vector<1x4x256xf32> to vector<4x256xf32>
    %41 = vector.broadcast %1 : vector<1x256xf32> to vector<4x256xf32>
    %42 = arith.mulf %40, %41 : vector<4x256xf32>
    %c5 = arith.constant 5 : index
    %c0_34 = arith.constant 0 : index
    %c0_35 = arith.constant 0 : index
    %43 = vector.load %arg3[%c5, %c0_34, %c0_35] : memref<9x4x4xf32, #tpu.memory_space<vmem>>, vector<1x4x4xf32>
    %44 = vector.shape_cast %43 : vector<1x4x4xf32> to vector<4x4xf32>
    %cst_36 = arith.constant dense<0.000000e+00> : vector<4x256xf32>
    %45 = tpu.matmul %44, %42, %cst_36 {dimension_numbers = #tpu.dot_dimension_numbers<[1], [0], [0], [1], [0, 0, 1, 1], [], []>} : vector<4x4xf32>, vector<4x256xf32>, vector<4x256xf32> -> vector<4x256xf32>
    %46 = arith.addf %38, %45 : vector<4x256xf32>
    %c0_37 = arith.constant 0 : index
    %c0_38 = arith.constant 0 : index
    %c32 = arith.constant 32 : index
    %47 = vector.load %arg1[%c0_37, %c0_38, %c32] : memref<1x4x290xf32, #tpu.memory_space<vmem>>, vector<1x4x256xf32>
    %48 = vector.shape_cast %47 : vector<1x4x256xf32> to vector<4x256xf32>
    %49 = vector.broadcast %0 : vector<1x256xf32> to vector<4x256xf32>
    %50 = arith.mulf %48, %49 : vector<4x256xf32>
    %c6 = arith.constant 6 : index
    %c0_39 = arith.constant 0 : index
    %c0_40 = arith.constant 0 : index
    %51 = vector.load %arg3[%c6, %c0_39, %c0_40] : memref<9x4x4xf32, #tpu.memory_space<vmem>>, vector<1x4x4xf32>
    %52 = vector.shape_cast %51 : vector<1x4x4xf32> to vector<4x4xf32>
    %cst_41 = arith.constant dense<0.000000e+00> : vector<4x256xf32>
    %53 = tpu.matmul %52, %50, %cst_41 {dimension_numbers = #tpu.dot_dimension_numbers<[1], [0], [0], [1], [0, 0, 1, 1], [], []>} : vector<4x4xf32>, vector<4x256xf32>, vector<4x256xf32> -> vector<4x256xf32>
    %54 = arith.addf %46, %53 : vector<4x256xf32>
    %c0_42 = arith.constant 0 : index
    %c0_43 = arith.constant 0 : index
    %c33 = arith.constant 33 : index
    %55 = vector.load %arg1[%c0_42, %c0_43, %c33] : memref<1x4x290xf32, #tpu.memory_space<vmem>>, vector<1x4x256xf32>
    %56 = vector.shape_cast %55 : vector<1x4x256xf32> to vector<4x256xf32>
    %c7 = arith.constant 7 : index
    %c0_44 = arith.constant 0 : index
    %c0_45 = arith.constant 0 : index
    %57 = vector.load %arg3[%c7, %c0_44, %c0_45] : memref<9x4x4xf32, #tpu.memory_space<vmem>>, vector<1x4x4xf32>
    %58 = vector.shape_cast %57 : vector<1x4x4xf32> to vector<4x4xf32>
    %cst_46 = arith.constant dense<0.000000e+00> : vector<4x256xf32>
    %59 = tpu.matmul %58, %56, %cst_46 {dimension_numbers = #tpu.dot_dimension_numbers<[1], [0], [0], [1], [0, 0, 1, 1], [], []>} : vector<4x4xf32>, vector<4x256xf32>, vector<4x256xf32> -> vector<4x256xf32>
    %60 = arith.addf %54, %59 : vector<4x256xf32>
    %c0_47 = arith.constant 0 : index
    %c0_48 = arith.constant 0 : index
    %c34 = arith.constant 34 : index
    %61 = vector.load %arg1[%c0_47, %c0_48, %c34] : memref<1x4x290xf32, #tpu.memory_space<vmem>>, vector<1x4x256xf32>
    %62 = vector.shape_cast %61 : vector<1x4x256xf32> to vector<4x256xf32>
    %63 = vector.broadcast %1 : vector<1x256xf32> to vector<4x256xf32>
    %64 = arith.mulf %62, %63 : vector<4x256xf32>
    %c8 = arith.constant 8 : index
    %c0_49 = arith.constant 0 : index
    %c0_50 = arith.constant 0 : index
    %65 = vector.load %arg3[%c8, %c0_49, %c0_50] : memref<9x4x4xf32, #tpu.memory_space<vmem>>, vector<1x4x4xf32>
    %66 = vector.shape_cast %65 : vector<1x4x4xf32> to vector<4x4xf32>
    %cst_51 = arith.constant dense<0.000000e+00> : vector<4x256xf32>
    %67 = tpu.matmul %66, %64, %cst_51 {dimension_numbers = #tpu.dot_dimension_numbers<[1], [0], [0], [1], [0, 0, 1, 1], [], []>} : vector<4x4xf32>, vector<4x256xf32>, vector<4x256xf32> -> vector<4x256xf32>
    %68 = arith.addf %60, %67 : vector<4x256xf32>
    %c0_52 = arith.constant 0 : index
    %c0_53 = arith.constant 0 : index
    %c0_54 = arith.constant 0 : index
    %69 = vector.load %arg2[%c0_52, %c0_53, %c0_54] : memref<1x4x290xf32, #tpu.memory_space<vmem>>, vector<1x4x256xf32>
    %70 = vector.shape_cast %69 : vector<1x4x256xf32> to vector<4x256xf32>
    %71 = vector.broadcast %0 : vector<1x256xf32> to vector<4x256xf32>
    %72 = arith.mulf %70, %71 : vector<4x256xf32>
    %c0_55 = arith.constant 0 : index
    %c0_56 = arith.constant 0 : index
    %c0_57 = arith.constant 0 : index
    %73 = vector.load %arg4[%c0_55, %c0_56, %c0_57] : memref<9x4x4xf32, #tpu.memory_space<vmem>>, vector<1x4x4xf32>
    %74 = vector.shape_cast %73 : vector<1x4x4xf32> to vector<4x4xf32>
    %cst_58 = arith.constant dense<0.000000e+00> : vector<4x256xf32>
    %75 = tpu.matmul %74, %72, %cst_58 {dimension_numbers = #tpu.dot_dimension_numbers<[1], [0], [0], [1], [0, 0, 1, 1], [], []>} : vector<4x4xf32>, vector<4x256xf32>, vector<4x256xf32> -> vector<4x256xf32>
    %76 = arith.addf %68, %75 : vector<4x256xf32>
    %c0_59 = arith.constant 0 : index
    %c0_60 = arith.constant 0 : index
    %c1_61 = arith.constant 1 : index
    %77 = vector.load %arg2[%c0_59, %c0_60, %c1_61] : memref<1x4x290xf32, #tpu.memory_space<vmem>>, vector<1x4x256xf32>
    %78 = vector.shape_cast %77 : vector<1x4x256xf32> to vector<4x256xf32>
    %c1_62 = arith.constant 1 : index
    %c0_63 = arith.constant 0 : index
    %c0_64 = arith.constant 0 : index
    %79 = vector.load %arg4[%c1_62, %c0_63, %c0_64] : memref<9x4x4xf32, #tpu.memory_space<vmem>>, vector<1x4x4xf32>
    %80 = vector.shape_cast %79 : vector<1x4x4xf32> to vector<4x4xf32>
    %cst_65 = arith.constant dense<0.000000e+00> : vector<4x256xf32>
    %81 = tpu.matmul %80, %78, %cst_65 {dimension_numbers = #tpu.dot_dimension_numbers<[1], [0], [0], [1], [0, 0, 1, 1], [], []>} : vector<4x4xf32>, vector<4x256xf32>, vector<4x256xf32> -> vector<4x256xf32>
    %82 = arith.addf %76, %81 : vector<4x256xf32>
    %c0_66 = arith.constant 0 : index
    %c0_67 = arith.constant 0 : index
    %c2_68 = arith.constant 2 : index
    %83 = vector.load %arg2[%c0_66, %c0_67, %c2_68] : memref<1x4x290xf32, #tpu.memory_space<vmem>>, vector<1x4x256xf32>
    %84 = vector.shape_cast %83 : vector<1x4x256xf32> to vector<4x256xf32>
    %85 = vector.broadcast %1 : vector<1x256xf32> to vector<4x256xf32>
    %86 = arith.mulf %84, %85 : vector<4x256xf32>
    %c2_69 = arith.constant 2 : index
    %c0_70 = arith.constant 0 : index
    %c0_71 = arith.constant 0 : index
    %87 = vector.load %arg4[%c2_69, %c0_70, %c0_71] : memref<9x4x4xf32, #tpu.memory_space<vmem>>, vector<1x4x4xf32>
    %88 = vector.shape_cast %87 : vector<1x4x4xf32> to vector<4x4xf32>
    %cst_72 = arith.constant dense<0.000000e+00> : vector<4x256xf32>
    %89 = tpu.matmul %88, %86, %cst_72 {dimension_numbers = #tpu.dot_dimension_numbers<[1], [0], [0], [1], [0, 0, 1, 1], [], []>} : vector<4x4xf32>, vector<4x256xf32>, vector<4x256xf32> -> vector<4x256xf32>
    %90 = arith.addf %82, %89 : vector<4x256xf32>
    %c0_73 = arith.constant 0 : index
    %c0_74 = arith.constant 0 : index
    %c16_75 = arith.constant 16 : index
    %91 = vector.load %arg2[%c0_73, %c0_74, %c16_75] : memref<1x4x290xf32, #tpu.memory_space<vmem>>, vector<1x4x256xf32>
    %92 = vector.shape_cast %91 : vector<1x4x256xf32> to vector<4x256xf32>
    %93 = vector.broadcast %0 : vector<1x256xf32> to vector<4x256xf32>
    %94 = arith.mulf %92, %93 : vector<4x256xf32>
    %c3_76 = arith.constant 3 : index
    %c0_77 = arith.constant 0 : index
    %c0_78 = arith.constant 0 : index
    %95 = vector.load %arg4[%c3_76, %c0_77, %c0_78] : memref<9x4x4xf32, #tpu.memory_space<vmem>>, vector<1x4x4xf32>
    %96 = vector.shape_cast %95 : vector<1x4x4xf32> to vector<4x4xf32>
    %cst_79 = arith.constant dense<0.000000e+00> : vector<4x256xf32>
    %97 = tpu.matmul %96, %94, %cst_79 {dimension_numbers = #tpu.dot_dimension_numbers<[1], [0], [0], [1], [0, 0, 1, 1], [], []>} : vector<4x4xf32>, vector<4x256xf32>, vector<4x256xf32> -> vector<4x256xf32>
    %98 = arith.addf %90, %97 : vector<4x256xf32>
    %c0_80 = arith.constant 0 : index
    %c0_81 = arith.constant 0 : index
    %c17_82 = arith.constant 17 : index
    %99 = vector.load %arg2[%c0_80, %c0_81, %c17_82] : memref<1x4x290xf32, #tpu.memory_space<vmem>>, vector<1x4x256xf32>
    %100 = vector.shape_cast %99 : vector<1x4x256xf32> to vector<4x256xf32>
    %c4_83 = arith.constant 4 : index
    %c0_84 = arith.constant 0 : index
    %c0_85 = arith.constant 0 : index
    %101 = vector.load %arg4[%c4_83, %c0_84, %c0_85] : memref<9x4x4xf32, #tpu.memory_space<vmem>>, vector<1x4x4xf32>
    %102 = vector.shape_cast %101 : vector<1x4x4xf32> to vector<4x4xf32>
    %cst_86 = arith.constant dense<0.000000e+00> : vector<4x256xf32>
    %103 = tpu.matmul %102, %100, %cst_86 {dimension_numbers = #tpu.dot_dimension_numbers<[1], [0], [0], [1], [0, 0, 1, 1], [], []>} : vector<4x4xf32>, vector<4x256xf32>, vector<4x256xf32> -> vector<4x256xf32>
    %104 = arith.addf %98, %103 : vector<4x256xf32>
    %c0_87 = arith.constant 0 : index
    %c0_88 = arith.constant 0 : index
    %c18_89 = arith.constant 18 : index
    %105 = vector.load %arg2[%c0_87, %c0_88, %c18_89] : memref<1x4x290xf32, #tpu.memory_space<vmem>>, vector<1x4x256xf32>
    %106 = vector.shape_cast %105 : vector<1x4x256xf32> to vector<4x256xf32>
    %107 = vector.broadcast %1 : vector<1x256xf32> to vector<4x256xf32>
    %108 = arith.mulf %106, %107 : vector<4x256xf32>
    %c5_90 = arith.constant 5 : index
    %c0_91 = arith.constant 0 : index
    %c0_92 = arith.constant 0 : index
    %109 = vector.load %arg4[%c5_90, %c0_91, %c0_92] : memref<9x4x4xf32, #tpu.memory_space<vmem>>, vector<1x4x4xf32>
    %110 = vector.shape_cast %109 : vector<1x4x4xf32> to vector<4x4xf32>
    %cst_93 = arith.constant dense<0.000000e+00> : vector<4x256xf32>
    %111 = tpu.matmul %110, %108, %cst_93 {dimension_numbers = #tpu.dot_dimension_numbers<[1], [0], [0], [1], [0, 0, 1, 1], [], []>} : vector<4x4xf32>, vector<4x256xf32>, vector<4x256xf32> -> vector<4x256xf32>
    %112 = arith.addf %104, %111 : vector<4x256xf32>
    %c0_94 = arith.constant 0 : index
    %c0_95 = arith.constant 0 : index
    %c32_96 = arith.constant 32 : index
    %113 = vector.load %arg2[%c0_94, %c0_95, %c32_96] : memref<1x4x290xf32, #tpu.memory_space<vmem>>, vector<1x4x256xf32>
    %114 = vector.shape_cast %113 : vector<1x4x256xf32> to vector<4x256xf32>
    %115 = vector.broadcast %0 : vector<1x256xf32> to vector<4x256xf32>
    %116 = arith.mulf %114, %115 : vector<4x256xf32>
    %c6_97 = arith.constant 6 : index
    %c0_98 = arith.constant 0 : index
    %c0_99 = arith.constant 0 : index
    %117 = vector.load %arg4[%c6_97, %c0_98, %c0_99] : memref<9x4x4xf32, #tpu.memory_space<vmem>>, vector<1x4x4xf32>
    %118 = vector.shape_cast %117 : vector<1x4x4xf32> to vector<4x4xf32>
    %cst_100 = arith.constant dense<0.000000e+00> : vector<4x256xf32>
    %119 = tpu.matmul %118, %116, %cst_100 {dimension_numbers = #tpu.dot_dimension_numbers<[1], [0], [0], [1], [0, 0, 1, 1], [], []>} : vector<4x4xf32>, vector<4x256xf32>, vector<4x256xf32> -> vector<4x256xf32>
    %120 = arith.addf %112, %119 : vector<4x256xf32>
    %c0_101 = arith.constant 0 : index
    %c0_102 = arith.constant 0 : index
    %c33_103 = arith.constant 33 : index
    %121 = vector.load %arg2[%c0_101, %c0_102, %c33_103] : memref<1x4x290xf32, #tpu.memory_space<vmem>>, vector<1x4x256xf32>
    %122 = vector.shape_cast %121 : vector<1x4x256xf32> to vector<4x256xf32>
    %c7_104 = arith.constant 7 : index
    %c0_105 = arith.constant 0 : index
    %c0_106 = arith.constant 0 : index
    %123 = vector.load %arg4[%c7_104, %c0_105, %c0_106] : memref<9x4x4xf32, #tpu.memory_space<vmem>>, vector<1x4x4xf32>
    %124 = vector.shape_cast %123 : vector<1x4x4xf32> to vector<4x4xf32>
    %cst_107 = arith.constant dense<0.000000e+00> : vector<4x256xf32>
    %125 = tpu.matmul %124, %122, %cst_107 {dimension_numbers = #tpu.dot_dimension_numbers<[1], [0], [0], [1], [0, 0, 1, 1], [], []>} : vector<4x4xf32>, vector<4x256xf32>, vector<4x256xf32> -> vector<4x256xf32>
    %126 = arith.addf %120, %125 : vector<4x256xf32>
    %c0_108 = arith.constant 0 : index
    %c0_109 = arith.constant 0 : index
    %c34_110 = arith.constant 34 : index
    %127 = vector.load %arg2[%c0_108, %c0_109, %c34_110] : memref<1x4x290xf32, #tpu.memory_space<vmem>>, vector<1x4x256xf32>
    %128 = vector.shape_cast %127 : vector<1x4x256xf32> to vector<4x256xf32>
    %129 = vector.broadcast %1 : vector<1x256xf32> to vector<4x256xf32>
    %130 = arith.mulf %128, %129 : vector<4x256xf32>
    %c8_111 = arith.constant 8 : index
    %c0_112 = arith.constant 0 : index
    %c0_113 = arith.constant 0 : index
    %131 = vector.load %arg4[%c8_111, %c0_112, %c0_113] : memref<9x4x4xf32, #tpu.memory_space<vmem>>, vector<1x4x4xf32>
    %132 = vector.shape_cast %131 : vector<1x4x4xf32> to vector<4x4xf32>
    %cst_114 = arith.constant dense<0.000000e+00> : vector<4x256xf32>
    %133 = tpu.matmul %132, %130, %cst_114 {dimension_numbers = #tpu.dot_dimension_numbers<[1], [0], [0], [1], [0, 0, 1, 1], [], []>} : vector<4x4xf32>, vector<4x256xf32>, vector<4x256xf32> -> vector<4x256xf32>
    %134 = arith.addf %126, %133 : vector<4x256xf32>
    %c0_115 = arith.constant 0 : index
    %c0_116 = arith.constant 0 : index
    %135 = vector.load %arg5[%c0_115, %c0_116] : memref<4x1xf32, #tpu.memory_space<vmem>>, vector<4x1xf32>
    %136 = vector.broadcast %135 : vector<4x1xf32> to vector<4x256xf32>
    %137 = arith.addf %134, %136 : vector<4x256xf32>
    %c0_117 = arith.constant 0 : index
    %c0_118 = arith.constant 0 : index
    %c0_119 = arith.constant 0 : index
    %138 = vector.load %arg8[%c0_117, %c0_118, %c0_119] : memref<1x4x256xf32, #tpu.memory_space<vmem>>, vector<1x4x256xf32>
    %139 = vector.shape_cast %138 : vector<1x4x256xf32> to vector<4x256xf32>
    %140 = vector.shape_cast %137 : vector<4x256xf32> to vector<1x4x256xf32>
    tpu.vector_store %arg8[%c0_117, %c0_118, %c0_119], %140 {strides = array<i32>} : memref<1x4x256xf32, #tpu.memory_space<vmem>>, vector<1x4x256xf32>,
    %cst_120 = arith.constant dense<0.000000e+00> : vector<4xf32>
    %141 = vector.multi_reduction <add>, %137, %cst_120 [1] : vector<4x256xf32> to vector<4xf32>
    %142 = vector.shape_cast %141 : vector<4xf32> to vector<4x1xf32>
    %c0_121 = arith.constant 0 : index
    %c0_122 = arith.constant 0 : index
    %c0_123 = arith.constant 0 : index
    %143 = vector.load %arg9[%c0_121, %c0_122, %c0_123] : memref<1x4x1xf32, #tpu.memory_space<vmem>>, vector<1x4x1xf32>
    %144 = vector.shape_cast %143 : vector<1x4x1xf32> to vector<4x1xf32>
    %145 = vector.shape_cast %142 : vector<4x1xf32> to vector<1x4x1xf32>
    tpu.vector_store %arg9[%c0_121, %c0_122, %c0_123], %145 {strides = array<i32>} : memref<1x4x1xf32, #tpu.memory_space<vmem>>, vector<1x4x1xf32>,
    %146 = arith.mulf %137, %137 : vector<4x256xf32>
    %cst_124 = arith.constant dense<0.000000e+00> : vector<4xf32>
    %147 = vector.multi_reduction <add>, %146, %cst_124 [1] : vector<4x256xf32> to vector<4xf32>
    %148 = vector.shape_cast %147 : vector<4xf32> to vector<4x1xf32>
    %c0_125 = arith.constant 0 : index
    %c0_126 = arith.constant 0 : index
    %c0_127 = arith.constant 0 : index
    %149 = vector.load %arg10[%c0_125, %c0_126, %c0_127] : memref<1x4x1xf32, #tpu.memory_space<vmem>>, vector<1x4x1xf32>
    %150 = vector.shape_cast %149 : vector<1x4x1xf32> to vector<4x1xf32>
    %151 = vector.shape_cast %148 : vector<4x1xf32> to vector<1x4x1xf32>
    tpu.vector_store %arg10[%c0_125, %c0_126, %c0_127], %151 {strides = array<i32>} : memref<1x4x1xf32, #tpu.memory_space<vmem>>, vector<1x4x1xf32>,
    return
  }
  func.func @transform_0(%arg0: i32) -> (i32, i32, i32) {
    %c0_i32 = arith.constant 0 : i32
    %c0_i32_0 = arith.constant 0 : i32
    %c0_i32_1 = arith.constant 0 : i32
    return %arg0, %c0_i32, %c0_i32_0 : i32, i32, i32
  }
  func.func @transform_1(%arg0: i32) -> (i32, i32, i32) {
    %c0_i32 = arith.constant 0 : i32
    %c0_i32_0 = arith.constant 0 : i32
    %c0_i32_1 = arith.constant 0 : i32
    return %arg0, %c0_i32, %c0_i32_0 : i32, i32, i32
  }
  func.func @transform_2(%arg0: i32) -> (i32, i32, i32) {
    %c0_i32 = arith.constant 0 : i32
    %c0_i32_0 = arith.constant 0 : i32
    %c0_i32_1 = arith.constant 0 : i32
    %c0_i32_2 = arith.constant 0 : i32
    return %c0_i32, %c0_i32_0, %c0_i32_1 : i32, i32, i32
  }
  func.func @transform_3(%arg0: i32) -> (i32, i32, i32) {
    %c0_i32 = arith.constant 0 : i32
    %c0_i32_0 = arith.constant 0 : i32
    %c0_i32_1 = arith.constant 0 : i32
    %c0_i32_2 = arith.constant 0 : i32
    return %c0_i32, %c0_i32_0, %c0_i32_1 : i32, i32, i32
  }
  func.func @transform_4(%arg0: i32) -> (i32, i32) {
    %c0_i32 = arith.constant 0 : i32
    %c0_i32_0 = arith.constant 0 : i32
    %c0_i32_1 = arith.constant 0 : i32
    return %c0_i32, %c0_i32_0 : i32, i32
  }
  func.func @transform_5(%arg0: i32) -> (i32, i32) {
    %c0_i32 = arith.constant 0 : i32
    %c0_i32_0 = arith.constant 0 : i32
    %c0_i32_1 = arith.constant 0 : i32
    return %c0_i32, %c0_i32_0 : i32, i32
  }
  func.func @transform_6(%arg0: i32) -> (i32, i32) {
    %c0_i32 = arith.constant 0 : i32
    %c0_i32_0 = arith.constant 0 : i32
    %c0_i32_1 = arith.constant 0 : i32
    return %c0_i32, %c0_i32_0 : i32, i32
  }
  func.func @transform_7(%arg0: i32) -> (i32, i32, i32) {
    %c0_i32 = arith.constant 0 : i32
    %c0_i32_0 = arith.constant 0 : i32
    %c0_i32_1 = arith.constant 0 : i32
    return %arg0, %c0_i32, %c0_i32_0 : i32, i32, i32
  }
  func.func @transform_8(%arg0: i32) -> (i32, i32, i32) {
    %c0_i32 = arith.constant 0 : i32
    %c0_i32_0 = arith.constant 0 : i32
    %c0_i32_1 = arith.constant 0 : i32
    return %arg0, %c0_i32, %c0_i32_0 : i32, i32, i32
  }
  func.func @transform_9(%arg0: i32) -> (i32, i32, i32) {
    %c0_i32 = arith.constant 0 : i32
    %c0_i32_0 = arith.constant 0 : i32
    %c0_i32_1 = arith.constant 0 : i32
    return %arg0, %c0_i32, %c0_i32_0 : i32, i32, i32
  }
}

module attributes {stable_mosaic.version = 11 : i64} {
  func.func @kernel(%arg0: i32, %arg1: i32, %arg2: memref<8x256xf32, #tpu.memory_space<vmem>>, %arg3: memref<8x1xf32, #tpu.memory_space<vmem>>, %arg4: memref<8x1xf32, #tpu.memory_space<vmem>>, %arg5: memref<8x256xf32, #tpu.memory_space<vmem>>) attributes {dimension_semantics = [#tpu.dimension_semantics<parallel>, #tpu.dimension_semantics<parallel>], iteration_bounds = array<i64: 1, 1>, scalar_prefetch = 0 : i64, scratch_operands = 0 : i64, tpu.core_type = #tpu.core_type<tc>, window_params = [{transform_indices = @transform_0, window_bounds = array<i64: 8, 256>}, {transform_indices = @transform_1, window_bounds = array<i64: 8, 1>}, {transform_indices = @transform_2, window_bounds = array<i64: 8, 1>}, {transform_indices = @transform_3, window_bounds = array<i64: 8, 256>}]} {
    %c0 = arith.constant 0 : index
    %c0_0 = arith.constant 0 : index
    %0 = vector.load %arg2[%c0, %c0_0] : memref<8x256xf32, #tpu.memory_space<vmem>>, vector<8x256xf32>
    %c0_1 = arith.constant 0 : index
    %c0_2 = arith.constant 0 : index
    %1 = vector.load %arg3[%c0_1, %c0_2] : memref<8x1xf32, #tpu.memory_space<vmem>>, vector<8x1xf32>
    %2 = vector.broadcast %1 : vector<8x1xf32> to vector<8x256xf32>
    %3 = arith.mulf %0, %2 : vector<8x256xf32>
    %c0_3 = arith.constant 0 : index
    %c0_4 = arith.constant 0 : index
    %4 = vector.load %arg4[%c0_3, %c0_4] : memref<8x1xf32, #tpu.memory_space<vmem>>, vector<8x1xf32>
    %5 = vector.broadcast %4 : vector<8x1xf32> to vector<8x256xf32>
    %6 = arith.addf %3, %5 : vector<8x256xf32>
    %cst = arith.constant 0.000000e+00 : f32
    %7 = vector.broadcast %cst : f32 to vector<8x256xf32>
    %8 = arith.maximumf %6, %7 : vector<8x256xf32>
    %c0_5 = arith.constant 0 : index
    %c0_6 = arith.constant 0 : index
    %9 = vector.load %arg5[%c0_5, %c0_6] : memref<8x256xf32, #tpu.memory_space<vmem>>, vector<8x256xf32>
    tpu.vector_store %arg5[%c0_5, %c0_6], %8 {strides = array<i32>} : memref<8x256xf32, #tpu.memory_space<vmem>>, vector<8x256xf32>,
    return
  }
  func.func @transform_0(%arg0: i32, %arg1: i32) -> (i32, i32) {
    %c0_i32 = arith.constant 0 : i32
    return %arg0, %arg1 : i32, i32
  }
  func.func @transform_1(%arg0: i32, %arg1: i32) -> (i32, i32) {
    %c0_i32 = arith.constant 0 : i32
    %c0_i32_0 = arith.constant 0 : i32
    return %arg0, %c0_i32 : i32, i32
  }
  func.func @transform_2(%arg0: i32, %arg1: i32) -> (i32, i32) {
    %c0_i32 = arith.constant 0 : i32
    %c0_i32_0 = arith.constant 0 : i32
    return %arg0, %c0_i32 : i32, i32
  }
  func.func @transform_3(%arg0: i32, %arg1: i32) -> (i32, i32) {
    %c0_i32 = arith.constant 0 : i32
    return %arg0, %arg1 : i32, i32
  }
}

module attributes {stable_mosaic.version = 11 : i64} {
  func.func @kernel(%arg0: i32, %arg1: memref<1x4x290xf32, #tpu.memory_space<vmem>>, %arg2: memref<9x4x4xf32, #tpu.memory_space<vmem>>, %arg3: memref<4x1xf32, #tpu.memory_space<vmem>>, %arg4: memref<1x256xf32, #tpu.memory_space<vmem>>, %arg5: memref<1x256xf32, #tpu.memory_space<vmem>>, %arg6: memref<1x4x256xf32, #tpu.memory_space<vmem>>, %arg7: memref<1x4x1xf32, #tpu.memory_space<vmem>>, %arg8: memref<1x4x1xf32, #tpu.memory_space<vmem>>) attributes {dimension_semantics = [#tpu.dimension_semantics<parallel>], iteration_bounds = array<i64: 2>, scalar_prefetch = 0 : i64, scratch_operands = 0 : i64, tpu.core_type = #tpu.core_type<tc>, window_params = [{transform_indices = @transform_0, window_bounds = array<i64: 1, 4, 290>}, {pipeline_mode = #tpu.pipeline_mode<synchronous>, transform_indices = @transform_1, window_bounds = array<i64: 9, 4, 4>}, {pipeline_mode = #tpu.pipeline_mode<synchronous>, transform_indices = @transform_2, window_bounds = array<i64: 4, 1>}, {pipeline_mode = #tpu.pipeline_mode<synchronous>, transform_indices = @transform_3, window_bounds = array<i64: 1, 256>}, {pipeline_mode = #tpu.pipeline_mode<synchronous>, transform_indices = @transform_4, window_bounds = array<i64: 1, 256>}, {transform_indices = @transform_5, window_bounds = array<i64: 1, 4, 256>}, {transform_indices = @transform_6, window_bounds = array<i64: 1, 4, 1>}, {transform_indices = @transform_7, window_bounds = array<i64: 1, 4, 1>}]} {
    %c0 = arith.constant 0 : index
    %c0_0 = arith.constant 0 : index
    %0 = vector.load %arg4[%c0, %c0_0] : memref<1x256xf32, #tpu.memory_space<vmem>>, vector<1x256xf32>
    %c0_1 = arith.constant 0 : index
    %c0_2 = arith.constant 0 : index
    %1 = vector.load %arg5[%c0_1, %c0_2] : memref<1x256xf32, #tpu.memory_space<vmem>>, vector<1x256xf32>
    %cst = arith.constant 0.000000e+00 : f32
    %2 = vector.broadcast %cst : f32 to vector<4x256xf32>
    %c0_3 = arith.constant 0 : index
    %c0_4 = arith.constant 0 : index
    %c0_5 = arith.constant 0 : index
    %3 = vector.load %arg1[%c0_3, %c0_4, %c0_5] : memref<1x4x290xf32, #tpu.memory_space<vmem>>, vector<1x4x256xf32>
    %4 = vector.shape_cast %3 : vector<1x4x256xf32> to vector<4x256xf32>
    %5 = vector.broadcast %0 : vector<1x256xf32> to vector<4x256xf32>
    %6 = arith.mulf %4, %5 : vector<4x256xf32>
    %c0_6 = arith.constant 0 : index
    %c0_7 = arith.constant 0 : index
    %c0_8 = arith.constant 0 : index
    %7 = vector.load %arg2[%c0_6, %c0_7, %c0_8] : memref<9x4x4xf32, #tpu.memory_space<vmem>>, vector<1x4x4xf32>
    %8 = vector.shape_cast %7 : vector<1x4x4xf32> to vector<4x4xf32>
    %cst_9 = arith.constant dense<0.000000e+00> : vector<4x256xf32>
    %9 = tpu.matmul %8, %6, %cst_9 {dimension_numbers = #tpu.dot_dimension_numbers<[1], [0], [0], [1], [0, 0, 1, 1], [], []>} : vector<4x4xf32>, vector<4x256xf32>, vector<4x256xf32> -> vector<4x256xf32>
    %10 = arith.addf %2, %9 : vector<4x256xf32>
    %c0_10 = arith.constant 0 : index
    %c0_11 = arith.constant 0 : index
    %c1 = arith.constant 1 : index
    %11 = vector.load %arg1[%c0_10, %c0_11, %c1] : memref<1x4x290xf32, #tpu.memory_space<vmem>>, vector<1x4x256xf32>
    %12 = vector.shape_cast %11 : vector<1x4x256xf32> to vector<4x256xf32>
    %c1_12 = arith.constant 1 : index
    %c0_13 = arith.constant 0 : index
    %c0_14 = arith.constant 0 : index
    %13 = vector.load %arg2[%c1_12, %c0_13, %c0_14] : memref<9x4x4xf32, #tpu.memory_space<vmem>>, vector<1x4x4xf32>
    %14 = vector.shape_cast %13 : vector<1x4x4xf32> to vector<4x4xf32>
    %cst_15 = arith.constant dense<0.000000e+00> : vector<4x256xf32>
    %15 = tpu.matmul %14, %12, %cst_15 {dimension_numbers = #tpu.dot_dimension_numbers<[1], [0], [0], [1], [0, 0, 1, 1], [], []>} : vector<4x4xf32>, vector<4x256xf32>, vector<4x256xf32> -> vector<4x256xf32>
    %16 = arith.addf %10, %15 : vector<4x256xf32>
    %c0_16 = arith.constant 0 : index
    %c0_17 = arith.constant 0 : index
    %c2 = arith.constant 2 : index
    %17 = vector.load %arg1[%c0_16, %c0_17, %c2] : memref<1x4x290xf32, #tpu.memory_space<vmem>>, vector<1x4x256xf32>
    %18 = vector.shape_cast %17 : vector<1x4x256xf32> to vector<4x256xf32>
    %19 = vector.broadcast %1 : vector<1x256xf32> to vector<4x256xf32>
    %20 = arith.mulf %18, %19 : vector<4x256xf32>
    %c2_18 = arith.constant 2 : index
    %c0_19 = arith.constant 0 : index
    %c0_20 = arith.constant 0 : index
    %21 = vector.load %arg2[%c2_18, %c0_19, %c0_20] : memref<9x4x4xf32, #tpu.memory_space<vmem>>, vector<1x4x4xf32>
    %22 = vector.shape_cast %21 : vector<1x4x4xf32> to vector<4x4xf32>
    %cst_21 = arith.constant dense<0.000000e+00> : vector<4x256xf32>
    %23 = tpu.matmul %22, %20, %cst_21 {dimension_numbers = #tpu.dot_dimension_numbers<[1], [0], [0], [1], [0, 0, 1, 1], [], []>} : vector<4x4xf32>, vector<4x256xf32>, vector<4x256xf32> -> vector<4x256xf32>
    %24 = arith.addf %16, %23 : vector<4x256xf32>
    %c0_22 = arith.constant 0 : index
    %c0_23 = arith.constant 0 : index
    %c16 = arith.constant 16 : index
    %25 = vector.load %arg1[%c0_22, %c0_23, %c16] : memref<1x4x290xf32, #tpu.memory_space<vmem>>, vector<1x4x256xf32>
    %26 = vector.shape_cast %25 : vector<1x4x256xf32> to vector<4x256xf32>
    %27 = vector.broadcast %0 : vector<1x256xf32> to vector<4x256xf32>
    %28 = arith.mulf %26, %27 : vector<4x256xf32>
    %c3 = arith.constant 3 : index
    %c0_24 = arith.constant 0 : index
    %c0_25 = arith.constant 0 : index
    %29 = vector.load %arg2[%c3, %c0_24, %c0_25] : memref<9x4x4xf32, #tpu.memory_space<vmem>>, vector<1x4x4xf32>
    %30 = vector.shape_cast %29 : vector<1x4x4xf32> to vector<4x4xf32>
    %cst_26 = arith.constant dense<0.000000e+00> : vector<4x256xf32>
    %31 = tpu.matmul %30, %28, %cst_26 {dimension_numbers = #tpu.dot_dimension_numbers<[1], [0], [0], [1], [0, 0, 1, 1], [], []>} : vector<4x4xf32>, vector<4x256xf32>, vector<4x256xf32> -> vector<4x256xf32>
    %32 = arith.addf %24, %31 : vector<4x256xf32>
    %c0_27 = arith.constant 0 : index
    %c0_28 = arith.constant 0 : index
    %c17 = arith.constant 17 : index
    %33 = vector.load %arg1[%c0_27, %c0_28, %c17] : memref<1x4x290xf32, #tpu.memory_space<vmem>>, vector<1x4x256xf32>
    %34 = vector.shape_cast %33 : vector<1x4x256xf32> to vector<4x256xf32>
    %c4 = arith.constant 4 : index
    %c0_29 = arith.constant 0 : index
    %c0_30 = arith.constant 0 : index
    %35 = vector.load %arg2[%c4, %c0_29, %c0_30] : memref<9x4x4xf32, #tpu.memory_space<vmem>>, vector<1x4x4xf32>
    %36 = vector.shape_cast %35 : vector<1x4x4xf32> to vector<4x4xf32>
    %cst_31 = arith.constant dense<0.000000e+00> : vector<4x256xf32>
    %37 = tpu.matmul %36, %34, %cst_31 {dimension_numbers = #tpu.dot_dimension_numbers<[1], [0], [0], [1], [0, 0, 1, 1], [], []>} : vector<4x4xf32>, vector<4x256xf32>, vector<4x256xf32> -> vector<4x256xf32>
    %38 = arith.addf %32, %37 : vector<4x256xf32>
    %c0_32 = arith.constant 0 : index
    %c0_33 = arith.constant 0 : index
    %c18 = arith.constant 18 : index
    %39 = vector.load %arg1[%c0_32, %c0_33, %c18] : memref<1x4x290xf32, #tpu.memory_space<vmem>>, vector<1x4x256xf32>
    %40 = vector.shape_cast %39 : vector<1x4x256xf32> to vector<4x256xf32>
    %41 = vector.broadcast %1 : vector<1x256xf32> to vector<4x256xf32>
    %42 = arith.mulf %40, %41 : vector<4x256xf32>
    %c5 = arith.constant 5 : index
    %c0_34 = arith.constant 0 : index
    %c0_35 = arith.constant 0 : index
    %43 = vector.load %arg2[%c5, %c0_34, %c0_35] : memref<9x4x4xf32, #tpu.memory_space<vmem>>, vector<1x4x4xf32>
    %44 = vector.shape_cast %43 : vector<1x4x4xf32> to vector<4x4xf32>
    %cst_36 = arith.constant dense<0.000000e+00> : vector<4x256xf32>
    %45 = tpu.matmul %44, %42, %cst_36 {dimension_numbers = #tpu.dot_dimension_numbers<[1], [0], [0], [1], [0, 0, 1, 1], [], []>} : vector<4x4xf32>, vector<4x256xf32>, vector<4x256xf32> -> vector<4x256xf32>
    %46 = arith.addf %38, %45 : vector<4x256xf32>
    %c0_37 = arith.constant 0 : index
    %c0_38 = arith.constant 0 : index
    %c32 = arith.constant 32 : index
    %47 = vector.load %arg1[%c0_37, %c0_38, %c32] : memref<1x4x290xf32, #tpu.memory_space<vmem>>, vector<1x4x256xf32>
    %48 = vector.shape_cast %47 : vector<1x4x256xf32> to vector<4x256xf32>
    %49 = vector.broadcast %0 : vector<1x256xf32> to vector<4x256xf32>
    %50 = arith.mulf %48, %49 : vector<4x256xf32>
    %c6 = arith.constant 6 : index
    %c0_39 = arith.constant 0 : index
    %c0_40 = arith.constant 0 : index
    %51 = vector.load %arg2[%c6, %c0_39, %c0_40] : memref<9x4x4xf32, #tpu.memory_space<vmem>>, vector<1x4x4xf32>
    %52 = vector.shape_cast %51 : vector<1x4x4xf32> to vector<4x4xf32>
    %cst_41 = arith.constant dense<0.000000e+00> : vector<4x256xf32>
    %53 = tpu.matmul %52, %50, %cst_41 {dimension_numbers = #tpu.dot_dimension_numbers<[1], [0], [0], [1], [0, 0, 1, 1], [], []>} : vector<4x4xf32>, vector<4x256xf32>, vector<4x256xf32> -> vector<4x256xf32>
    %54 = arith.addf %46, %53 : vector<4x256xf32>
    %c0_42 = arith.constant 0 : index
    %c0_43 = arith.constant 0 : index
    %c33 = arith.constant 33 : index
    %55 = vector.load %arg1[%c0_42, %c0_43, %c33] : memref<1x4x290xf32, #tpu.memory_space<vmem>>, vector<1x4x256xf32>
    %56 = vector.shape_cast %55 : vector<1x4x256xf32> to vector<4x256xf32>
    %c7 = arith.constant 7 : index
    %c0_44 = arith.constant 0 : index
    %c0_45 = arith.constant 0 : index
    %57 = vector.load %arg2[%c7, %c0_44, %c0_45] : memref<9x4x4xf32, #tpu.memory_space<vmem>>, vector<1x4x4xf32>
    %58 = vector.shape_cast %57 : vector<1x4x4xf32> to vector<4x4xf32>
    %cst_46 = arith.constant dense<0.000000e+00> : vector<4x256xf32>
    %59 = tpu.matmul %58, %56, %cst_46 {dimension_numbers = #tpu.dot_dimension_numbers<[1], [0], [0], [1], [0, 0, 1, 1], [], []>} : vector<4x4xf32>, vector<4x256xf32>, vector<4x256xf32> -> vector<4x256xf32>
    %60 = arith.addf %54, %59 : vector<4x256xf32>
    %c0_47 = arith.constant 0 : index
    %c0_48 = arith.constant 0 : index
    %c34 = arith.constant 34 : index
    %61 = vector.load %arg1[%c0_47, %c0_48, %c34] : memref<1x4x290xf32, #tpu.memory_space<vmem>>, vector<1x4x256xf32>
    %62 = vector.shape_cast %61 : vector<1x4x256xf32> to vector<4x256xf32>
    %63 = vector.broadcast %1 : vector<1x256xf32> to vector<4x256xf32>
    %64 = arith.mulf %62, %63 : vector<4x256xf32>
    %c8 = arith.constant 8 : index
    %c0_49 = arith.constant 0 : index
    %c0_50 = arith.constant 0 : index
    %65 = vector.load %arg2[%c8, %c0_49, %c0_50] : memref<9x4x4xf32, #tpu.memory_space<vmem>>, vector<1x4x4xf32>
    %66 = vector.shape_cast %65 : vector<1x4x4xf32> to vector<4x4xf32>
    %cst_51 = arith.constant dense<0.000000e+00> : vector<4x256xf32>
    %67 = tpu.matmul %66, %64, %cst_51 {dimension_numbers = #tpu.dot_dimension_numbers<[1], [0], [0], [1], [0, 0, 1, 1], [], []>} : vector<4x4xf32>, vector<4x256xf32>, vector<4x256xf32> -> vector<4x256xf32>
    %68 = arith.addf %60, %67 : vector<4x256xf32>
    %c0_52 = arith.constant 0 : index
    %c0_53 = arith.constant 0 : index
    %69 = vector.load %arg3[%c0_52, %c0_53] : memref<4x1xf32, #tpu.memory_space<vmem>>, vector<4x1xf32>
    %70 = vector.broadcast %69 : vector<4x1xf32> to vector<4x256xf32>
    %71 = arith.addf %68, %70 : vector<4x256xf32>
    %c0_54 = arith.constant 0 : index
    %c0_55 = arith.constant 0 : index
    %c0_56 = arith.constant 0 : index
    %72 = vector.load %arg6[%c0_54, %c0_55, %c0_56] : memref<1x4x256xf32, #tpu.memory_space<vmem>>, vector<1x4x256xf32>
    %73 = vector.shape_cast %72 : vector<1x4x256xf32> to vector<4x256xf32>
    %74 = vector.shape_cast %71 : vector<4x256xf32> to vector<1x4x256xf32>
    tpu.vector_store %arg6[%c0_54, %c0_55, %c0_56], %74 {strides = array<i32>} : memref<1x4x256xf32, #tpu.memory_space<vmem>>, vector<1x4x256xf32>,
    %cst_57 = arith.constant dense<0.000000e+00> : vector<4xf32>
    %75 = vector.multi_reduction <add>, %71, %cst_57 [1] : vector<4x256xf32> to vector<4xf32>
    %76 = vector.shape_cast %75 : vector<4xf32> to vector<4x1xf32>
    %c0_58 = arith.constant 0 : index
    %c0_59 = arith.constant 0 : index
    %c0_60 = arith.constant 0 : index
    %77 = vector.load %arg7[%c0_58, %c0_59, %c0_60] : memref<1x4x1xf32, #tpu.memory_space<vmem>>, vector<1x4x1xf32>
    %78 = vector.shape_cast %77 : vector<1x4x1xf32> to vector<4x1xf32>
    %79 = vector.shape_cast %76 : vector<4x1xf32> to vector<1x4x1xf32>
    tpu.vector_store %arg7[%c0_58, %c0_59, %c0_60], %79 {strides = array<i32>} : memref<1x4x1xf32, #tpu.memory_space<vmem>>, vector<1x4x1xf32>,
    %80 = arith.mulf %71, %71 : vector<4x256xf32>
    %cst_61 = arith.constant dense<0.000000e+00> : vector<4xf32>
    %81 = vector.multi_reduction <add>, %80, %cst_61 [1] : vector<4x256xf32> to vector<4xf32>
    %82 = vector.shape_cast %81 : vector<4xf32> to vector<4x1xf32>
    %c0_62 = arith.constant 0 : index
    %c0_63 = arith.constant 0 : index
    %c0_64 = arith.constant 0 : index
    %83 = vector.load %arg8[%c0_62, %c0_63, %c0_64] : memref<1x4x1xf32, #tpu.memory_space<vmem>>, vector<1x4x1xf32>
    %84 = vector.shape_cast %83 : vector<1x4x1xf32> to vector<4x1xf32>
    %85 = vector.shape_cast %82 : vector<4x1xf32> to vector<1x4x1xf32>
    tpu.vector_store %arg8[%c0_62, %c0_63, %c0_64], %85 {strides = array<i32>} : memref<1x4x1xf32, #tpu.memory_space<vmem>>, vector<1x4x1xf32>,
    return
  }
  func.func @transform_0(%arg0: i32) -> (i32, i32, i32) {
    %c0_i32 = arith.constant 0 : i32
    %c0_i32_0 = arith.constant 0 : i32
    %c0_i32_1 = arith.constant 0 : i32
    return %arg0, %c0_i32, %c0_i32_0 : i32, i32, i32
  }
  func.func @transform_1(%arg0: i32) -> (i32, i32, i32) {
    %c0_i32 = arith.constant 0 : i32
    %c0_i32_0 = arith.constant 0 : i32
    %c0_i32_1 = arith.constant 0 : i32
    %c0_i32_2 = arith.constant 0 : i32
    return %c0_i32, %c0_i32_0, %c0_i32_1 : i32, i32, i32
  }
  func.func @transform_2(%arg0: i32) -> (i32, i32) {
    %c0_i32 = arith.constant 0 : i32
    %c0_i32_0 = arith.constant 0 : i32
    %c0_i32_1 = arith.constant 0 : i32
    return %c0_i32, %c0_i32_0 : i32, i32
  }
  func.func @transform_3(%arg0: i32) -> (i32, i32) {
    %c0_i32 = arith.constant 0 : i32
    %c0_i32_0 = arith.constant 0 : i32
    %c0_i32_1 = arith.constant 0 : i32
    return %c0_i32, %c0_i32_0 : i32, i32
  }
  func.func @transform_4(%arg0: i32) -> (i32, i32) {
    %c0_i32 = arith.constant 0 : i32
    %c0_i32_0 = arith.constant 0 : i32
    %c0_i32_1 = arith.constant 0 : i32
    return %c0_i32, %c0_i32_0 : i32, i32
  }
  func.func @transform_5(%arg0: i32) -> (i32, i32, i32) {
    %c0_i32 = arith.constant 0 : i32
    %c0_i32_0 = arith.constant 0 : i32
    %c0_i32_1 = arith.constant 0 : i32
    return %arg0, %c0_i32, %c0_i32_0 : i32, i32, i32
  }
  func.func @transform_6(%arg0: i32) -> (i32, i32, i32) {
    %c0_i32 = arith.constant 0 : i32
    %c0_i32_0 = arith.constant 0 : i32
    %c0_i32_1 = arith.constant 0 : i32
    return %arg0, %c0_i32, %c0_i32_0 : i32, i32, i32
  }
  func.func @transform_7(%arg0: i32) -> (i32, i32, i32) {
    %c0_i32 = arith.constant 0 : i32
    %c0_i32_0 = arith.constant 0 : i32
    %c0_i32_1 = arith.constant 0 : i32
    return %arg0, %c0_i32, %c0_i32_0 : i32, i32, i32
  }
}

</mosaic_0001>

<llo_original>
// kernel: up_forward.7
$region0: #{up_forward.7}
  #allocation0 [shape = 'u32[]', space=smem, size = 0x4, offset = 0x4, fixed_abs, tag = 'smem constant byte address 0x4 - core index']
  #allocation1 [shape = 'u32[144,128]{1,0:T(1,128)}', space=vmem, size = 0x12000, scoped, tag = 'internal scratch']
  %s0 = inlined_call_operand.vmem [shape: f32[8,64], index: 0, kind: input, shape index: {}]
  %s1 = inlined_call_operand.vmem [shape: f32[8,1], index: 1, kind: input, shape index: {}]
  %s2 = inlined_call_operand.vmem [shape: f32[8,1], index: 2, kind: input, shape index: {}]
  %s3 = inlined_call_operand.vmem [shape: f32[8,64], index: 3, kind: output, shape index: {}]
  %s4 = sld [smem:[#allocation0]]
  $region22: #{up_forward.7} parent=0
    _
  %s6 = ssub.s32 1, %s4
  %s7 = scalar_select 0, %s6, %s4
  // Predicated region
  $region2: #{up_forward.7} parent=0 // pred_check
    _
  $region3: #{up_forward.7} parent=0 // pred_check_branch
    %9 = sbr.rel (0) target = $region5
  $region4: #{up_forward.7} parent=0 // pred_region
    _
  $region5: #{up_forward.7} parent=0 // pred_fallthru
    _
  // Predicated region
  $region6: #{up_forward.7} parent=0 // pred_check
    _
  $region7: #{up_forward.7} parent=0 // pred_check_branch
    %11 = sbr.rel (0) target = $region9
  $region8: #{up_forward.7} parent=0 // pred_region
    _
  $region9: #{up_forward.7} parent=0 // pred_fallthru
    _
  // Predicated region
  $region10: #{up_forward.7} parent=0 // pred_check
    _
  $region11: #{up_forward.7} parent=0 // pred_check_branch
    %13 = sbr.rel (0) target = $region13
  $region12: #{up_forward.7} parent=0 // pred_region
    _
  $region13: #{up_forward.7} parent=0 // pred_fallthru
    _
  %v14 = vld [vmem:[%s0] sm:$0xff]
  %v15 = vld [vmem:[%s1] sm:$0xff]
  %17 = vset.pattern.permute.xlu0 0
  %18 = vperm.xlu0 %17, %v15
  %v19 = vpop.permute.xlu0 %18
  %v21 = vmul.f32 %v14, %v19
  %v22 = vld [vmem:[%s2] sm:$0xff]
  %24 = vset.pattern.permute.xlu0 0
  %25 = vperm.xlu0 %24, %v22
  %v26 = vpop.permute.xlu0 %25
  %v28 = vadd.f32 %v21, %v26
  %v29 = vmax.f32 %v28, 0.0
  %vm30 = vcmask 523264
  %31 = vst.msk [vmem:[%s3] sm:$0xff] %vm30, %v29
  // Predicated region
  $region14: #{up_forward.7} parent=0 // pred_check
    _
  $region15: #{up_forward.7} parent=0 // pred_check_branch
    %33 = sbr.rel (0) target = $region17
  $region16: #{up_forward.7} parent=0 // pred_region
    _
  $region17: #{up_forward.7} parent=0 // pred_fallthru
    _
  // Predicated region
  $region18: #{up_forward.7} parent=0 // pred_check
    _
  $region19: #{up_forward.7} parent=0 // pred_check_branch
    %35 = sbr.rel (0) target = $region21
  $region20: #{up_forward.7} parent=0 // pred_region
    _
  $region21: #{up_forward.7} parent=0 // pred_fallthru
    _

// kernel: up_forward.9
$region0: #{up_forward.9}
  #allocation0 [shape = 'u32[]', space=smem, size = 0x4, offset = 0x4, fixed_abs, tag = 'smem constant byte address 0x4 - core index']
  #allocation1 [shape = 'u32[144,128]{1,0:T(1,128)}', space=vmem, size = 0x12000, scoped, tag = 'internal scratch']
  %s0 = inlined_call_operand.vmem [shape: f32[8,256], index: 0, kind: input, shape index: {}]
  %s1 = inlined_call_operand.vmem [shape: f32[8,1], index: 1, kind: input, shape index: {}]
  %s2 = inlined_call_operand.vmem [shape: f32[8,1], index: 2, kind: input, shape index: {}]
  %s3 = inlined_call_operand.vmem [shape: f32[8,256], index: 3, kind: output, shape index: {}]
  %s4 = sld [smem:[#allocation0]]
  $region22: #{up_forward.9} parent=0
    _
  %s6 = ssub.s32 1, %s4
  %s7 = scalar_select 0, %s6, %s4
  // Predicated region
  $region2: #{up_forward.9} parent=0 // pred_check
    _
  $region3: #{up_forward.9} parent=0 // pred_check_branch
    %9 = sbr.rel (0) target = $region5
  $region4: #{up_forward.9} parent=0 // pred_region
    _
  $region5: #{up_forward.9} parent=0 // pred_fallthru
    _
  // Predicated region
  $region6: #{up_forward.9} parent=0 // pred_check
    _
  $region7: #{up_forward.9} parent=0 // pred_check_branch
    %11 = sbr.rel (0) target = $region9
  $region8: #{up_forward.9} parent=0 // pred_region
    _
  $region9: #{up_forward.9} parent=0 // pred_fallthru
    _
  // Predicated region
  $region10: #{up_forward.9} parent=0 // pred_check
    _
  $region11: #{up_forward.9} parent=0 // pred_check_branch
    %13 = sbr.rel (0) target = $region13
  $region12: #{up_forward.9} parent=0 // pred_region
    _
  $region13: #{up_forward.9} parent=0 // pred_fallthru
    _
  %v14 = vld [vmem:[%s0] sm:$0xff]
  %v15 = vld [vmem:[%s0 + $0x8] sm:$0xff]
  %v16 = vld [vmem:[%s1] sm:$0xff]
  %18 = vset.pattern.permute.xlu0 0
  %19 = vperm.xlu0 %18, %v16
  %v20 = vpop.permute.xlu0 %19
  %v22 = vmul.f32 %v14, %v20
  %v23 = vmul.f32 %v15, %v20
  %v24 = vld [vmem:[%s2] sm:$0xff]
  %26 = vset.pattern.permute.xlu0 0
  %27 = vperm.xlu0 %26, %v24
  %v28 = vpop.permute.xlu0 %27
  %v30 = vadd.f32 %v22, %v28
  %v31 = vadd.f32 %v23, %v28
  %v32 = vmax.f32 %v30, 0.0
  %v33 = vmax.f32 %v31, 0.0
  %34 = vst [vmem:[%s3] sm:$0xff] %v32
  %35 = vst [vmem:[%s3 + $0x8] sm:$0xff] %v33
  // Predicated region
  $region14: #{up_forward.9} parent=0 // pred_check
    _
  $region15: #{up_forward.9} parent=0 // pred_check_branch
    %37 = sbr.rel (0) target = $region17
  $region16: #{up_forward.9} parent=0 // pred_region
    _
  $region17: #{up_forward.9} parent=0 // pred_fallthru
    _
  // Predicated region
  $region18: #{up_forward.9} parent=0 // pred_check
    _
  $region19: #{up_forward.9} parent=0 // pred_check_branch
    %39 = sbr.rel (0) target = $region21
  $region20: #{up_forward.9} parent=0 // pred_region
    _
  $region21: #{up_forward.9} parent=0 // pred_fallthru
    _

// kernel: up_forward.6
$region0: #{up_forward.6}
  #allocation0 [shape = 'u32[]', space=smem, size = 0x4, offset = 0x4, fixed_abs, tag = 'smem constant byte address 0x4 - core index']
  #allocation1 [shape = 'u32[144,128]{1,0:T(1,128)}', space=vmem, size = 0x12000, scoped, tag = 'internal scratch']
  %s0 = inlined_call_operand.vmem [shape: f32[2,8,82], index: 0, kind: input, shape index: {}]
  %s1 = inlined_call_operand.vmem [shape: f32[9,4,8], index: 1, kind: input, shape index: {}]
  %s2 = inlined_call_operand.vmem [shape: f32[4,1], index: 2, kind: input, shape index: {}]
  %s3 = inlined_call_operand.vmem [shape: f32[1,64], index: 3, kind: input, shape index: {}]
  %s4 = inlined_call_operand.vmem [shape: f32[1,64], index: 4, kind: input, shape index: {}]
  %s5 = inlined_call_operand.vmem [shape: f32[2,4,64], index: 5, kind: output, shape index: {0}]
  %s6 = inlined_call_operand.vmem [shape: f32[2,4,1], index: 6, kind: output, shape index: {1}]
  %s7 = inlined_call_operand.vmem [shape: f32[2,4,1], index: 7, kind: output, shape index: {2}]
  %8 = xla_tuple %s5, %s6, %s7
  %s9 = sld [smem:[#allocation0]]
  $region69: #{up_forward.6} parent=0
    _
  %s11 = ssub.s32 1, %s9
  %s12 = scalar_select 0, %s11, %s9
  loop: start=0, step=1, limit=4
  $region2: #{up_forward.6} parent=0 // loop_pre_header
    _
  $region3: #{up_forward.6} parent=0 // loop_header
    %s14 = sphi 0, %s18
    %p15 = scmp.ge.s32.totalorder %s14, 4
    %s24 = sphi 0, %s26
    %s27 = sphi 0, %s24
    %s28 = sphi 0, %s27
    %s44 = sphi 0, %s28
    %s48 = sphi 0, %s48
    %s50 = sphi 0, %s48
    %s51 = sphi 0, %s50
    %s65 = sphi 0, %s51
    %s69 = sphi 0, %s69
    %s71 = sphi 0, %s69
    %s72 = sphi 0, %s71
    %s86 = sphi 0, %s72
    %s90 = sphi 0, %s90
    %s92 = sphi 0, %s90
    %s93 = sphi 0, %s92
    %s107 = sphi 0, %s93
    %s111 = sphi 0, %s111
    %s113 = sphi 0, %s111
    %s114 = sphi 0, %s113
    %s128 = sphi 0, %s114
    %s134 = sphi 0, %s136
    %s137 = sphi 0, %s134
    %s138 = sphi 0, %s137
    %s154 = sphi 0, %s138
    %s160 = sphi 0, %s162
    %s163 = sphi 0, %s160
    %s164 = sphi 0, %s163
    %s180 = sphi 0, %s164
    %s186 = sphi 0, %s188
    %s189 = sphi 0, %s186
    %s190 = sphi 0, %s189
    %s206 = sphi 0, %s190
  $region4: #{up_forward.6} parent=0 // loop_header_branch
    %17 = sbr.rel (%p15) target = $region8
  $region5: #{up_forward.6} parent=0 // loop_body
    %s19 = ssub.s32 %s14, 1
    %s20 = ssub.s32 %s14, 2
    %s21 = sadd.s32 %s14, 1
    %s22 = ssub.s32 %s14, %s21
    %p23 = scmp.eq.s32.totalorder %s22, 0
    %s25 = sadd.s32 %s24, 1
    %s26 = scalar_select %p23, %s24, %s25
    %p29 = pneg %p23
    %p30 = scmp.eq.s32.totalorder %s14, 1
    %p31 = por %p29, %p30
    %p32 = scmp.ne.s32.totalorder %s24, %s27
    %p33 = scmp.eq.s32.totalorder %s14, 0
    %p34 = por %p32, %p33
    %p35 = scmp.ne.s32.totalorder %s24, %s27
    %p36 = scmp.eq.s32.totalorder %s19, 1
    %p37 = por %p35, %p36
    %p38 = scmp.ne.s32.totalorder %s27, %s28
    %p39 = scmp.eq.s32.totalorder %s19, 0
    %p40 = por %p38, %p39
    %p41 = scmp.ne.s32.totalorder %s27, %s28
    %p42 = scmp.eq.s32.totalorder %s20, 1
    %p43 = por %p41, %p42
    %p45 = scmp.ne.s32.totalorder %s28, %s44
    %p46 = scmp.eq.s32.totalorder %s20, 0
    %p47 = por %p45, %p46
    %s49 = sadd.s32 %s48, 1
    %p52 = scmp.eq.s32.totalorder %s14, 1
    %p53 = scmp.ne.s32.totalorder %s48, %s50
    %p54 = scmp.eq.s32.totalorder %s14, 0
    %p55 = por %p53, %p54
    %p56 = scmp.ne.s32.totalorder %s48, %s50
    %p57 = scmp.eq.s32.totalorder %s19, 1
    %p58 = por %p56, %p57
    %p59 = scmp.ne.s32.totalorder %s50, %s51
    %p60 = scmp.eq.s32.totalorder %s19, 0
    %p61 = por %p59, %p60
    %p62 = scmp.ne.s32.totalorder %s50, %s51
    %p63 = scmp.eq.s32.totalorder %s20, 1
    %p64 = por %p62, %p63
    %p66 = scmp.ne.s32.totalorder %s51, %s65
    %p67 = scmp.eq.s32.totalorder %s20, 0
    %p68 = por %p66, %p67
    %s70 = sadd.s32 %s69, 1
    %p73 = scmp.eq.s32.totalorder %s14, 1
    %p74 = scmp.ne.s32.totalorder %s69, %s71
    %p75 = scmp.eq.s32.totalorder %s14, 0
    %p76 = por %p74, %p75
    %p77 = scmp.ne.s32.totalorder %s69, %s71
    %p78 = scmp.eq.s32.totalorder %s19, 1
    %p79 = por %p77, %p78
    %p80 = scmp.ne.s32.totalorder %s71, %s72
    %p81 = scmp.eq.s32.totalorder %s19, 0
    %p82 = por %p80, %p81
    %p83 = scmp.ne.s32.totalorder %s71, %s72
    %p84 = scmp.eq.s32.totalorder %s20, 1
    %p85 = por %p83, %p84
    %p87 = scmp.ne.s32.totalorder %s72, %s86
    %p88 = scmp.eq.s32.totalorder %s20, 0
    %p89 = por %p87, %p88
    %s91 = sadd.s32 %s90, 1
    %p94 = scmp.eq.s32.totalorder %s14, 1
    %p95 = scmp.ne.s32.totalorder %s90, %s92
    %p96 = scmp.eq.s32.totalorder %s14, 0
    %p97 = por %p95, %p96
    %p98 = scmp.ne.s32.totalorder %s90, %s92
    %p99 = scmp.eq.s32.totalorder %s19, 1
    %p100 = por %p98, %p99
    %p101 = scmp.ne.s32.totalorder %s92, %s93
    %p102 = scmp.eq.s32.totalorder %s19, 0
    %p103 = por %p101, %p102
    %p104 = scmp.ne.s32.totalorder %s92, %s93
    %p105 = scmp.eq.s32.totalorder %s20, 1
    %p106 = por %p104, %p105
    %p108 = scmp.ne.s32.totalorder %s93, %s107
    %p109 = scmp.eq.s32.totalorder %s20, 0
    %p110 = por %p108, %p109
    %s112 = sadd.s32 %s111, 1
    %p115 = scmp.eq.s32.totalorder %s14, 1
    %p116 = scmp.ne.s32.totalorder %s111, %s113
    %p117 = scmp.eq.s32.totalorder %s14, 0
    %p118 = por %p116, %p117
    %p119 = scmp.ne.s32.totalorder %s111, %s113
    %p120 = scmp.eq.s32.totalorder %s19, 1
    %p121 = por %p119, %p120
    %p122 = scmp.ne.s32.totalorder %s113, %s114
    %p123 = scmp.eq.s32.totalorder %s19, 0
    %p124 = por %p122, %p123
    %p125 = scmp.ne.s32.totalorder %s113, %s114
    %p126 = scmp.eq.s32.totalorder %s20, 1
    %p127 = por %p125, %p126
    %p129 = scmp.ne.s32.totalorder %s114, %s128
    %p130 = scmp.eq.s32.totalorder %s20, 0
    %p131 = por %p129, %p130
    %s132 = ssub.s32 %s14, %s21
    %p133 = scmp.eq.s32.totalorder %s132, 0
    %s135 = sadd.s32 %s134, 1
    %s136 = scalar_select %p133, %s134, %s135
    %p139 = pneg %p133
    %p140 = scmp.eq.s32.totalorder %s14, 1
    %p141 = por %p139, %p140
    %p142 = scmp.ne.s32.totalorder %s134, %s137
    %p143 = scmp.eq.s32.totalorder %s14, 0
    %p144 = por %p142, %p143
    %p145 = scmp.ne.s32.totalorder %s134, %s137
    %p146 = scmp.eq.s32.totalorder %s19, 1
    %p147 = por %p145, %p146
    %p148 = scmp.ne.s32.totalorder %s137, %s138
    %p149 = scmp.eq.s32.totalorder %s19, 0
    %p150 = por %p148, %p149
    %p151 = scmp.ne.s32.totalorder %s137, %s138
    %p152 = scmp.eq.s32.totalorder %s20, 1
    %p153 = por %p151, %p152
    %p155 = scmp.ne.s32.totalorder %s138, %s154
    %p156 = scmp.eq.s32.totalorder %s20, 0
    %p157 = por %p155, %p156
    %s158 = ssub.s32 %s14, %s21
    %p159 = scmp.eq.s32.totalorder %s158, 0
    %s161 = sadd.s32 %s160, 1
    %s162 = scalar_select %p159, %s160, %s161
    %p165 = pneg %p159
    %p166 = scmp.eq.s32.totalorder %s14, 1
    %p167 = por %p165, %p166
    %p168 = scmp.ne.s32.totalorder %s160, %s163
    %p169 = scmp.eq.s32.totalorder %s14, 0
    %p170 = por %p168, %p169
    %p171 = scmp.ne.s32.totalorder %s160, %s163
    %p172 = scmp.eq.s32.totalorder %s19, 1
    %p173 = por %p171, %p172
    %p174 = scmp.ne.s32.totalorder %s163, %s164
    %p175 = scmp.eq.s32.totalorder %s19, 0
    %p176 = por %p174, %p175
    %p177 = scmp.ne.s32.totalorder %s163, %s164
    %p178 = scmp.eq.s32.totalorder %s20, 1
    %p179 = por %p177, %p178
    %p181 = scmp.ne.s32.totalorder %s164, %s180
    %p182 = scmp.eq.s32.totalorder %s20, 0
    %p183 = por %p181, %p182
    %s184 = ssub.s32 %s14, %s21
    %p185 = scmp.eq.s32.totalorder %s184, 0
    %s187 = sadd.s32 %s186, 1
    %s188 = scalar_select %p185, %s186, %s187
    %p191 = pneg %p185
    %p192 = scmp.eq.s32.totalorder %s14, 1
    %p193 = por %p191, %p192
    %p194 = scmp.ne.s32.totalorder %s186, %s189
    %p195 = scmp.eq.s32.totalorder %s14, 0
    %p196 = por %p194, %p195
    %p197 = scmp.ne.s32.totalorder %s186, %s189
    %p198 = scmp.eq.s32.totalorder %s19, 1
    %p199 = por %p197, %p198
    %p200 = scmp.ne.s32.totalorder %s189, %s190
    %p201 = scmp.eq.s32.totalorder %s19, 0
    %p202 = por %p200, %p201
    %p203 = scmp.ne.s32.totalorder %s189, %s190
    %p204 = scmp.eq.s32.totalorder %s20, 1
    %p205 = por %p203, %p204
    %p207 = scmp.ne.s32.totalorder %s190, %s206
    %p208 = scmp.eq.s32.totalorder %s20, 0
    %p209 = por %p207, %p208
    %p210 = scmp.le.s32.totalorder 1, %s14
    %p211 = scmp.lt.s32.totalorder %s14, 3
    %p212 = pnand %p210, %p211
    %p213 = pneg %p212
    // Predicated region
    $region9: #{up_forward.6} parent=5 // pred_check
      _
    $region10: #{up_forward.6} parent=5 // pred_check_branch
      %215 = sbr.rel (%p212) target = $region12
    $region11: #{up_forward.6} parent=5 // pred_region
      %s216 = ssub.s32 %s14, 1
      // Predicated region
      $region13: #{up_forward.6} parent=11 // pred_check
        %p217 = pneg %p61
      $region14: #{up_forward.6} parent=11 // pred_check_branch
        %219 = sbr.rel (%p217) target = $region16
      $region15: #{up_forward.6} parent=11 // pred_region
        _
      $region16: #{up_forward.6} parent=11 // pred_fallthru
        _
      // Predicated region
      $region17: #{up_forward.6} parent=11 // pred_check
        %p220 = pneg %p82
      $region18: #{up_forward.6} parent=11 // pred_check_branch
        %222 = sbr.rel (%p220) target = $region20
      $region19: #{up_forward.6} parent=11 // pred_region
        _
      $region20: #{up_forward.6} parent=11 // pred_fallthru
        _
      // Predicated region
      $region21: #{up_forward.6} parent=11 // pred_check
        %p223 = pneg %p103
      $region22: #{up_forward.6} parent=11 // pred_check_branch
        %225 = sbr.rel (%p223) target = $region24
      $region23: #{up_forward.6} parent=11 // pred_region
        _
      $region24: #{up_forward.6} parent=11 // pred_fallthru
        _
      // Predicated region
      $region25: #{up_forward.6} parent=11 // pred_check
        %p226 = pneg %p124
      $region26: #{up_forward.6} parent=11 // pred_check_branch
        %228 = sbr.rel (%p226) target = $region28
      $region27: #{up_forward.6} parent=11 // pred_region
        _
      $region28: #{up_forward.6} parent=11 // pred_fallthru
        _
    $region12: #{up_forward.6} parent=5 // pred_fallthru
      _
    %p229 = scmp.lt.s32.totalorder %s14, 2
    // Predicated region
    $region29: #{up_forward.6} parent=5 // pred_check
      %p230 = pneg %p229
    $region30: #{up_forward.6} parent=5 // pred_check_branch
      %232 = sbr.rel (%p230) target = $region32
    $region31: #{up_forward.6} parent=5 // pred_region
      // Predicated region
      $region33: #{up_forward.6} parent=31 // pred_check
        %p233 = pneg %p34
      $region34: #{up_forward.6} parent=31 // pred_check_branch
        %235 = sbr.rel (%p233) target = $region36
      $region35: #{up_forward.6} parent=31 // pred_region
        %p236 = scmp.lt.s32.totalorder %s14, 1
        %s237 = scalar_select %p236, %s14, 1
        %s238 = smul.addr %s237, 8
        %s239 = scalar_lea.vmem %s0, %s238
      $region36: #{up_forward.6} parent=31 // pred_fallthru
        _
    $region32: #{up_forward.6} parent=5 // pred_fallthru
      _
    %p240 = scmp.le.s32.totalorder 1, %s14
    %p241 = scmp.lt.s32.totalorder %s14, 3
    %p242 = pnand %p240, %p241
    %p243 = pneg %p242
    // Predicated region
    $region37: #{up_forward.6} parent=5 // pred_check
      _
    $region38: #{up_forward.6} parent=5 // pred_check_branch
      %245 = sbr.rel (%p242) target = $region40
    $region39: #{up_forward.6} parent=5 // pred_region
      %s246 = ssub.s32 %s14, 1
      %p247 = scmp.lt.s32.totalorder %s19, 1
      %s248 = scalar_select %p247, %s19, 1
      %s249 = smul.addr %s248, 8
      %s250 = scalar_lea.vmem %s0, %s249
      %p251 = pneg %p40
      %p252 = pneg %p37
      %p253 = pneg %p61
      %p254 = pneg %p58
      %p255 = pneg %p82
      %p256 = pneg %p79
      %p257 = pneg %p103
      %p258 = pneg %p100
      %p259 = pneg %p124
      %p260 = pneg %p121
      %p261 = pneg %p150
      %p262 = pneg %p147
      %p263 = scmp.lt.s32.totalorder %s19, 1
      %s264 = scalar_select %p263, %s19, 1
      %s265 = smul.addr %s264, 4
      %s266 = scalar_lea.vmem %s5, %s265
      %p267 = pneg %p176
      %p268 = pneg %p173
      %p269 = scmp.lt.s32.totalorder %s19, 1
      %s270 = scalar_select %p269, %s19, 1
      %s271 = smul.addr %s270, 4
      %s272 = scalar_lea.vmem %s6, %s271
      %p273 = pneg %p202
      %p274 = pneg %p199
      %p275 = scmp.lt.s32.totalorder %s19, 1
      %s276 = scalar_select %p275, %s19, 1
      %s277 = smul.addr %s276, 4
      %s278 = scalar_lea.vmem %s7, %s277
      %p279 = scmp.lt.s32.totalorder %s19, 1
      %s280 = scalar_select %p279, %s19, 1
      %s281 = smul.addr %s280, 8
      %s282 = scalar_lea.vmem %s0, %s281
      %p283 = scmp.lt.s32.totalorder %s19, 1
      %s284 = scalar_select %p283, %s19, 1
      %s285 = smul.addr %s284, 4
      %s286 = scalar_lea.vmem %s5, %s285
      %p287 = scmp.lt.s32.totalorder %s19, 1
      %s288 = scalar_select %p287, %s19, 1
      %s289 = smul.addr %s288, 4
      %s290 = scalar_lea.vmem %s6, %s289
      %p291 = scmp.lt.s32.totalorder %s19, 1
      %s292 = scalar_select %p291, %s19, 1
      %s293 = smul.addr %s292, 4
      %s294 = scalar_lea.vmem %s7, %s293
      %v295 = vld [vmem:[%s3] sm:$0x1]
      %v296 = vld [vmem:[%s4] sm:$0x1]
      %v297 = vld [vmem:[%s282] sm:$0xff]
      %v299 = vlaneseq
      %v300 = vshrl.u32 %v299, 7
      %v301 = vsub.s32 0, %v300
      %v302 = vrot.slane %v295, %v301
      %v304 = vmul.f32 %v297, %v302
      %v305 = vld [vmem:[%s1] sm:$0xf]
      %s306 = scalar_lea.vmem %s1, 4
      %v307 = vld [vmem:[%s306] sm:$0xf]
      %309 = vrot.lane.b32.xlu0 %v297, 127
      %v310 = vpop.permute.xlu0 %309
      %vm312 = vcmask 64512
      %v314 = vsel %vm312, %v307, 0
      %316 = vmatprep.subr.mxu0 0.0
      %317 = vmatpush1.msra.mxu0 %v310
      %318 = vmatprep.subr.mxu0 0.0
      %319 = vmatpush1.msra.mxu0 0.0
      %320 = vmatprep.subr.mxu0 0.0
      %321 = vmatpush1.msra.mxu0 0.0
      %322 = vmatprep.subr.mxu0 0.0
      %323 = vmatpush1.msra.mxu0 0.0
      %324 = vmatprep.subr.mxu0 0.0
      %325 = vmatpush1.msra.mxu0 0.0
      %326 = vmatprep.subr.mxu0 0.0
      %327 = vmatpush1.msra.mxu0 0.0
      %328 = vmatprep.subr.mxu0 0.0
      %329 = vmatpush1.msra.mxu0 0.0
      %330 = vmatprep.subr.mxu0 0.0
      %331 = vmatpush1.msra.mxu0 0.0
      %332 = vmatprep.subr.mxu0 0.0
      %333 = vmatpush1.msra.mxu0 0.0
      %334 = vmatprep.subr.mxu0 0.0
      %335 = vmatpush1.msra.mxu0 0.0
      %336 = vmatprep.subr.mxu0 0.0
      %337 = vmatpush1.msra.mxu0 0.0
      %338 = vmatprep.subr.mxu0 0.0
      %339 = vmatpush1.msra.mxu0 0.0
      %340 = vmatprep.subr.mxu0 0.0
      %341 = vmatpush1.msra.mxu0 0.0
      %342 = vmatprep.subr.mxu0 0.0
      %343 = vmatpush1.msra.mxu0 0.0
      %344 = vmatprep.subr.mxu0 0.0
      %345 = vmatpush1.msra.mxu0 0.0
      %346 = vmatprep.subr.mxu0 0.0
      %347 = vmatpush1.msra.mxu0 0.0
      %348 = vmatprep.subr.mxu0 0.0
      %349 = vmatpush1.msra.mxu0 0.0
      %350 = vmatprep.subr.mxu0 0.0
      %351 = vmatpush1.msra.mxu0 0.0
      %352 = vmatprep.subr.mxu0 0.0
      %353 = vmatpush1.msra.mxu0 0.0
      %354 = vmatprep.subr.mxu0 0.0
      %355 = vmatpush1.msra.mxu0 0.0
      %356 = vmatprep.subr.mxu0 0.0
      %357 = vmatpush1.msra.mxu0 0.0
      %358 = vmatprep.subr.mxu0 0.0
      %359 = vmatpush1.msra.mxu0 0.0
      %360 = vmatprep.subr.mxu0 0.0
      %361 = vmatpush1.msra.mxu0 0.0
      %362 = vmatprep.subr.mxu0 0.0
      %363 = vmatpush1.msra.mxu0 0.0
      %364 = vmatprep.subr.mxu0 0.0
      %365 = vmatpush1.msra.mxu0 0.0
      %366 = vmatprep.subr.mxu0 0.0
      %367 = vmatpush1.msra.mxu0 0.0
      %368 = vmatprep.subr.mxu0 0.0
      %369 = vmatpush1.msra.mxu0 0.0
      %370 = vmatprep.subr.mxu0 0.0
      %371 = vmatpush1.msra.mxu0 0.0
      %372 = vmatprep.subr.mxu0 0.0
      %373 = vmatpush1.msra.mxu0 0.0
      %374 = vmatprep.subr.mxu0 0.0
      %375 = vmatpush1.msra.mxu0 0.0
      %376 = vmatprep.subr.mxu0 0.0
      %377 = vmatpush1.msra.mxu0 0.0
      %378 = vmatprep.subr.mxu0 0.0
      %379 = vmatpush1.msra.mxu0 0.0
      %380 = vmatprep.mubr.f32.mxu0 0.0
      %381 = vmatmul.mubr.f32.gmra.mrb[0].mxu0 %v314
      %v382 = vpop.f32.mrb[0].mxu0
      %v383 = vadd.f32 0.0, %v382
      %v384 = vpop.f32.mrb[0].mxu0
      %385 = vdwg.mxu0
      %v387 = vsel %vm312, %v305, 0
      %389 = vmatprep.subr.mxu0 0.0
      %390 = vmatpush1.msra.mxu0 %v304
      %391 = vmatprep.subr.mxu0 0.0
      %392 = vmatpush1.msra.mxu0 0.0
      %393 = vmatprep.subr.mxu0 0.0
      %394 = vmatpush1.msra.mxu0 0.0
      %395 = vmatprep.subr.mxu0 0.0
      %396 = vmatpush1.msra.mxu0 0.0
      %397 = vmatprep.subr.mxu0 0.0
      %398 = vmatpush1.msra.mxu0 0.0
      %399 = vmatprep.subr.mxu0 0.0
      %400 = vmatpush1.msra.mxu0 0.0
      %401 = vmatprep.subr.mxu0 0.0
      %402 = vmatpush1.msra.mxu0 0.0
      %403 = vmatprep.subr.mxu0 0.0
      %404 = vmatpush1.msra.mxu0 0.0
      %405 = vmatprep.subr.mxu0 0.0
      %406 = vmatpush1.msra.mxu0 0.0
      %407 = vmatprep.subr.mxu0 0.0
      %408 = vmatpush1.msra.mxu0 0.0
      %409 = vmatprep.subr.mxu0 0.0
      %410 = vmatpush1.msra.mxu0 0.0
      %411 = vmatprep.subr.mxu0 0.0
      %412 = vmatpush1.msra.mxu0 0.0
      %413 = vmatprep.subr.mxu0 0.0
      %414 = vmatpush1.msra.mxu0 0.0
      %415 = vmatprep.subr.mxu0 0.0
      %416 = vmatpush1.msra.mxu0 0.0
      %417 = vmatprep.subr.mxu0 0.0
      %418 = vmatpush1.msra.mxu0 0.0
      %419 = vmatprep.subr.mxu0 0.0
      %420 = vmatpush1.msra.mxu0 0.0
      %421 = vmatprep.subr.mxu0 0.0
      %422 = vmatpush1.msra.mxu0 0.0
      %423 = vmatprep.subr.mxu0 0.0
      %424 = vmatpush1.msra.mxu0 0.0
      %425 = vmatprep.subr.mxu0 0.0
      %426 = vmatpush1.msra.mxu0 0.0
      %427 = vmatprep.subr.mxu0 0.0
      %428 = vmatpush1.msra.mxu0 0.0
      %429 = vmatprep.subr.mxu0 0.0
      %430 = vmatpush1.msra.mxu0 0.0
      %431 = vmatprep.subr.mxu0 0.0
      %432 = vmatpush1.msra.mxu0 0.0
      %433 = vmatprep.subr.mxu0 0.0
      %434 = vmatpush1.msra.mxu0 0.0
      %435 = vmatprep.subr.mxu0 0.0
      %436 = vmatpush1.msra.mxu0 0.0
      %437 = vmatprep.subr.mxu0 0.0
      %438 = vmatpush1.msra.mxu0 0.0
      %439 = vmatprep.subr.mxu0 0.0
      %440 = vmatpush1.msra.mxu0 0.0
      %441 = vmatprep.subr.mxu0 0.0
      %442 = vmatpush1.msra.mxu0 0.0
      %443 = vmatprep.subr.mxu0 0.0
      %444 = vmatpush1.msra.mxu0 0.0
      %445 = vmatprep.subr.mxu0 0.0
      %446 = vmatpush1.msra.mxu0 0.0
      %447 = vmatprep.subr.mxu0 0.0
      %448 = vmatpush1.msra.mxu0 0.0
      %449 = vmatprep.subr.mxu0 0.0
      %450 = vmatpush1.msra.mxu0 0.0
      %451 = vmatprep.subr.mxu0 0.0
      %452 = vmatpush1.msra.mxu0 0.0
      %453 = vmatprep.mubr.f32.mxu0 0.0
      %454 = vmatmul.mubr.f32.gmra.mrb[0].mxu0 %v387
      %v455 = vpop.f32.mrb[0].mxu0
      %v456 = vadd.f32 %v383, %v455
      %v457 = vpop.f32.mrb[0].mxu0
      %458 = vdwg.mxu0
      %v460 = vlaneseq
      %v461 = vshrl.u32 %v460, 7
      %v462 = vsub.s32 0, %v461
      %v463 = vrot.slane %v296, %v462
      %464 = vrot.lane.b32.xlu0 %v463, 2
      %v465 = vpop.permute.xlu0 %464
      %v467 = vmul.f32 %v297, %v465
      %s468 = scalar_lea.vmem %s1, 8
      %v469 = vld [vmem:[%s468] sm:$0xf]
      %471 = vrot.lane.b32.xlu0 %v467, 126
      %v472 = vpop.permute.xlu0 %471
      %v475 = vsel %vm312, %v469, 0
      %477 = vmatprep.subr.mxu0 0.0
      %478 = vmatpush1.msra.mxu0 %v472
      %479 = vmatprep.subr.mxu0 0.0
      %480 = vmatpush1.msra.mxu0 0.0
      %481 = vmatprep.subr.mxu0 0.0
      %482 = vmatpush1.msra.mxu0 0.0
      %483 = vmatprep.subr.mxu0 0.0
      %484 = vmatpush1.msra.mxu0 0.0
      %485 = vmatprep.subr.mxu0 0.0
      %486 = vmatpush1.msra.mxu0 0.0
      %487 = vmatprep.subr.mxu0 0.0
      %488 = vmatpush1.msra.mxu0 0.0
      %489 = vmatprep.subr.mxu0 0.0
      %490 = vmatpush1.msra.mxu0 0.0
      %491 = vmatprep.subr.mxu0 0.0
      %492 = vmatpush1.msra.mxu0 0.0
      %493 = vmatprep.subr.mxu0 0.0
      %494 = vmatpush1.msra.mxu0 0.0
      %495 = vmatprep.subr.mxu0 0.0
      %496 = vmatpush1.msra.mxu0 0.0
      %497 = vmatprep.subr.mxu0 0.0
      %498 = vmatpush1.msra.mxu0 0.0
      %499 = vmatprep.subr.mxu0 0.0
      %500 = vmatpush1.msra.mxu0 0.0
      %501 = vmatprep.subr.mxu0 0.0
      %502 = vmatpush1.msra.mxu0 0.0
      %503 = vmatprep.subr.mxu0 0.0
      %504 = vmatpush1.msra.mxu0 0.0
      %505 = vmatprep.subr.mxu0 0.0
      %506 = vmatpush1.msra.mxu0 0.0
      %507 = vmatprep.subr.mxu0 0.0
      %508 = vmatpush1.msra.mxu0 0.0
      %509 = vmatprep.subr.mxu0 0.0
      %510 = vmatpush1.msra.mxu0 0.0
      %511 = vmatprep.subr.mxu0 0.0
      %512 = vmatpush1.msra.mxu0 0.0
      %513 = vmatprep.subr.mxu0 0.0
      %514 = vmatpush1.msra.mxu0 0.0
      %515 = vmatprep.subr.mxu0 0.0
      %516 = vmatpush1.msra.mxu0 0.0
      %517 = vmatprep.subr.mxu0 0.0
      %518 = vmatpush1.msra.mxu0 0.0
      %519 = vmatprep.subr.mxu0 0.0
      %520 = vmatpush1.msra.mxu0 0.0
      %521 = vmatprep.subr.mxu0 0.0
      %522 = vmatpush1.msra.mxu0 0.0
      %523 = vmatprep.subr.mxu0 0.0
      %524 = vmatpush1.msra.mxu0 0.0
      %525 = vmatprep.subr.mxu0 0.0
      %526 = vmatpush1.msra.mxu0 0.0
      %527 = vmatprep.subr.mxu0 0.0
      %528 = vmatpush1.msra.mxu0 0.0
      %529 = vmatprep.subr.mxu0 0.0
      %530 = vmatpush1.msra.mxu0 0.0
      %531 = vmatprep.subr.mxu0 0.0
      %532 = vmatpush1.msra.mxu0 0.0
      %533 = vmatprep.subr.mxu0 0.0
      %534 = vmatpush1.msra.mxu0 0.0
      %535 = vmatprep.subr.mxu0 0.0
      %536 = vmatpush1.msra.mxu0 0.0
      %537 = vmatprep.subr.mxu0 0.0
      %538 = vmatpush1.msra.mxu0 0.0
      %539 = vmatprep.subr.mxu0 0.0
      %540 = vmatpush1.msra.mxu0 0.0
      %541 = vmatprep.mubr.f32.mxu0 0.0
      %542 = vmatmul.mubr.f32.gmra.mrb[0].mxu0 %v475
      %v543 = vpop.f32.mrb[0].mxu0
      %v544 = vadd.f32 0.0, %v543
      %v545 = vpop.f32.mrb[0].mxu0
      %546 = vdwg.mxu0
      %v547 = vadd.f32 %v456, %v544
      %548 = vrot.lane.b32.xlu0 %v302, 8
      %v549 = vpop.permute.xlu0 %548
      %v551 = vmul.f32 %v297, %v549
      %s552 = scalar_lea.vmem %s1, 12
      %v553 = vld [vmem:[%s552] sm:$0xf]
      %555 = vrot.lane.b32.xlu0 %v551, 120
      %v556 = vpop.permute.xlu0 %555
      %v559 = vsel %vm312, %v553, 0
      %561 = vmatprep.subr.mxu0 0.0
      %562 = vmatpush1.msra.mxu0 %v556
      %563 = vmatprep.subr.mxu0 0.0
      %564 = vmatpush1.msra.mxu0 0.0
      %565 = vmatprep.subr.mxu0 0.0
      %566 = vmatpush1.msra.mxu0 0.0
      %567 = vmatprep.subr.mxu0 0.0
      %568 = vmatpush1.msra.mxu0 0.0
      %569 = vmatprep.subr.mxu0 0.0
      %570 = vmatpush1.msra.mxu0 0.0
      %571 = vmatprep.subr.mxu0 0.0
      %572 = vmatpush1.msra.mxu0 0.0
      %573 = vmatprep.subr.mxu0 0.0
      %574 = vmatpush1.msra.mxu0 0.0
      %575 = vmatprep.subr.mxu0 0.0
      %576 = vmatpush1.msra.mxu0 0.0
      %577 = vmatprep.subr.mxu0 0.0
      %578 = vmatpush1.msra.mxu0 0.0
      %579 = vmatprep.subr.mxu0 0.0
      %580 = vmatpush1.msra.mxu0 0.0
      %581 = vmatprep.subr.mxu0 0.0
      %582 = vmatpush1.msra.mxu0 0.0
      %583 = vmatprep.subr.mxu0 0.0
      %584 = vmatpush1.msra.mxu0 0.0
      %585 = vmatprep.subr.mxu0 0.0
      %586 = vmatpush1.msra.mxu0 0.0
      %587 = vmatprep.subr.mxu0 0.0
      %588 = vmatpush1.msra.mxu0 0.0
      %589 = vmatprep.subr.mxu0 0.0
      %590 = vmatpush1.msra.mxu0 0.0
      %591 = vmatprep.subr.mxu0 0.0
      %592 = vmatpush1.msra.mxu0 0.0
      %593 = vmatprep.subr.mxu0 0.0
      %594 = vmatpush1.msra.mxu0 0.0
      %595 = vmatprep.subr.mxu0 0.0
      %596 = vmatpush1.msra.mxu0 0.0
      %597 = vmatprep.subr.mxu0 0.0
      %598 = vmatpush1.msra.mxu0 0.0
      %599 = vmatprep.subr.mxu0 0.0
      %600 = vmatpush1.msra.mxu0 0.0
      %601 = vmatprep.subr.mxu0 0.0
      %602 = vmatpush1.msra.mxu0 0.0
      %603 = vmatprep.subr.mxu0 0.0
      %604 = vmatpush1.msra.mxu0 0.0
      %605 = vmatprep.subr.mxu0 0.0
      %606 = vmatpush1.msra.mxu0 0.0
      %607 = vmatprep.subr.mxu0 0.0
      %608 = vmatpush1.msra.mxu0 0.0
      %609 = vmatprep.subr.mxu0 0.0
      %610 = vmatpush1.msra.mxu0 0.0
      %611 = vmatprep.subr.mxu0 0.0
      %612 = vmatpush1.msra.mxu0 0.0
      %613 = vmatprep.subr.mxu0 0.0
      %614 = vmatpush1.msra.mxu0 0.0
      %615 = vmatprep.subr.mxu0 0.0
      %616 = vmatpush1.msra.mxu0 0.0
      %617 = vmatprep.subr.mxu0 0.0
      %618 = vmatpush1.msra.mxu0 0.0
      %619 = vmatprep.subr.mxu0 0.0
      %620 = vmatpush1.msra.mxu0 0.0
      %621 = vmatprep.subr.mxu0 0.0
      %622 = vmatpush1.msra.mxu0 0.0
      %623 = vmatprep.subr.mxu0 0.0
      %624 = vmatpush1.msra.mxu0 0.0
      %625 = vmatprep.mubr.f32.mxu0 0.0
      %626 = vmatmul.mubr.f32.gmra.mrb[0].mxu0 %v559
      %v627 = vpop.f32.mrb[0].mxu0
      %v628 = vadd.f32 0.0, %v627
      %v629 = vpop.f32.mrb[0].mxu0
      %630 = vdwg.mxu0
      %v631 = vadd.f32 %v547, %v628
      %s632 = scalar_lea.vmem %s1, 16
      %v633 = vld [vmem:[%s632] sm:$0xf]
      %634 = vrot.lane.b32.xlu0 %v297, 119
      %v635 = vpop.permute.xlu0 %634
      %v638 = vsel %vm312, %v633, 0
      %640 = vmatprep.subr.mxu0 0.0
      %641 = vmatpush1.msra.mxu0 %v635
      %642 = vmatprep.subr.mxu0 0.0
      %643 = vmatpush1.msra.mxu0 0.0
      %644 = vmatprep.subr.mxu0 0.0
      %645 = vmatpush1.msra.mxu0 0.0
      %646 = vmatprep.subr.mxu0 0.0
      %647 = vmatpush1.msra.mxu0 0.0
      %648 = vmatprep.subr.mxu0 0.0
      %649 = vmatpush1.msra.mxu0 0.0
      %650 = vmatprep.subr.mxu0 0.0
      %651 = vmatpush1.msra.mxu0 0.0
      %652 = vmatprep.subr.mxu0 0.0
      %653 = vmatpush1.msra.mxu0 0.0
      %654 = vmatprep.subr.mxu0 0.0
      %655 = vmatpush1.msra.mxu0 0.0
      %656 = vmatprep.subr.mxu0 0.0
      %657 = vmatpush1.msra.mxu0 0.0
      %658 = vmatprep.subr.mxu0 0.0
      %659 = vmatpush1.msra.mxu0 0.0
      %660 = vmatprep.subr.mxu0 0.0
      %661 = vmatpush1.msra.mxu0 0.0
      %662 = vmatprep.subr.mxu0 0.0
      %663 = vmatpush1.msra.mxu0 0.0
      %664 = vmatprep.subr.mxu0 0.0
      %665 = vmatpush1.msra.mxu0 0.0
      %666 = vmatprep.subr.mxu0 0.0
      %667 = vmatpush1.msra.mxu0 0.0
      %668 = vmatprep.subr.mxu0 0.0
      %669 = vmatpush1.msra.mxu0 0.0
      %670 = vmatprep.subr.mxu0 0.0
      %671 = vmatpush1.msra.mxu0 0.0
      %672 = vmatprep.subr.mxu0 0.0
      %673 = vmatpush1.msra.mxu0 0.0
      %674 = vmatprep.subr.mxu0 0.0
      %675 = vmatpush1.msra.mxu0 0.0
      %676 = vmatprep.subr.mxu0 0.0
      %677 = vmatpush1.msra.mxu0 0.0
      %678 = vmatprep.subr.mxu0 0.0
      %679 = vmatpush1.msra.mxu0 0.0
      %680 = vmatprep.subr.mxu0 0.0
      %681 = vmatpush1.msra.mxu0 0.0
      %682 = vmatprep.subr.mxu0 0.0
      %683 = vmatpush1.msra.mxu0 0.0
      %684 = vmatprep.subr.mxu0 0.0
      %685 = vmatpush1.msra.mxu0 0.0
      %686 = vmatprep.subr.mxu0 0.0
      %687 = vmatpush1.msra.mxu0 0.0
      %688 = vmatprep.subr.mxu0 0.0
      %689 = vmatpush1.msra.mxu0 0.0
      %690 = vmatprep.subr.mxu0 0.0
      %691 = vmatpush1.msra.mxu0 0.0
      %692 = vmatprep.subr.mxu0 0.0
      %693 = vmatpush1.msra.mxu0 0.0
      %694 = vmatprep.subr.mxu0 0.0
      %695 = vmatpush1.msra.mxu0 0.0
      %696 = vmatprep.subr.mxu0 0.0
      %697 = vmatpush1.msra.mxu0 0.0
      %698 = vmatprep.subr.mxu0 0.0
      %699 = vmatpush1.msra.mxu0 0.0
      %700 = vmatprep.subr.mxu0 0.0
      %701 = vmatpush1.msra.mxu0 0.0
      %702 = vmatprep.subr.mxu0 0.0
      %703 = vmatpush1.msra.mxu0 0.0
      %704 = vmatprep.mubr.f32.mxu0 0.0
      %705 = vmatmul.mubr.f32.gmra.mrb[0].mxu0 %v638
      %v706 = vpop.f32.mrb[0].mxu0
      %v707 = vadd.f32 0.0, %v706
      %v708 = vpop.f32.mrb[0].mxu0
      %709 = vdwg.mxu0
      %v710 = vadd.f32 %v631, %v707
      %711 = vrot.lane.b32.xlu0 %v463, 10
      %v712 = vpop.permute.xlu0 %711
      %v714 = vmul.f32 %v297, %v712
      %s715 = scalar_lea.vmem %s1, 20
      %v716 = vld [vmem:[%s715] sm:$0xf]
      %718 = vrot.lane.b32.xlu0 %v714, 118
      %v719 = vpop.permute.xlu0 %718
      %v722 = vsel %vm312, %v716, 0
      %724 = vmatprep.subr.mxu0 0.0
      %725 = vmatpush1.msra.mxu0 %v719
      %726 = vmatprep.subr.mxu0 0.0
      %727 = vmatpush1.msra.mxu0 0.0
      %728 = vmatprep.subr.mxu0 0.0
      %729 = vmatpush1.msra.mxu0 0.0
      %730 = vmatprep.subr.mxu0 0.0
      %731 = vmatpush1.msra.mxu0 0.0
      %732 = vmatprep.subr.mxu0 0.0
      %733 = vmatpush1.msra.mxu0 0.0
      %734 = vmatprep.subr.mxu0 0.0
      %735 = vmatpush1.msra.mxu0 0.0
      %736 = vmatprep.subr.mxu0 0.0
      %737 = vmatpush1.msra.mxu0 0.0
      %738 = vmatprep.subr.mxu0 0.0
      %739 = vmatpush1.msra.mxu0 0.0
      %740 = vmatprep.subr.mxu0 0.0
      %741 = vmatpush1.msra.mxu0 0.0
      %742 = vmatprep.subr.mxu0 0.0
      %743 = vmatpush1.msra.mxu0 0.0
      %744 = vmatprep.subr.mxu0 0.0
      %745 = vmatpush1.msra.mxu0 0.0
      %746 = vmatprep.subr.mxu0 0.0
      %747 = vmatpush1.msra.mxu0 0.0
      %748 = vmatprep.subr.mxu0 0.0
      %749 = vmatpush1.msra.mxu0 0.0
      %750 = vmatprep.subr.mxu0 0.0
      %751 = vmatpush1.msra.mxu0 0.0
      %752 = vmatprep.subr.mxu0 0.0
      %753 = vmatpush1.msra.mxu0 0.0
      %754 = vmatprep.subr.mxu0 0.0
      %755 = vmatpush1.msra.mxu0 0.0
      %756 = vmatprep.subr.mxu0 0.0
      %757 = vmatpush1.msra.mxu0 0.0
      %758 = vmatprep.subr.mxu0 0.0
      %759 = vmatpush1.msra.mxu0 0.0
      %760 = vmatprep.subr.mxu0 0.0
      %761 = vmatpush1.msra.mxu0 0.0
      %762 = vmatprep.subr.mxu0 0.0
      %763 = vmatpush1.msra.mxu0 0.0
      %764 = vmatprep.subr.mxu0 0.0
      %765 = vmatpush1.msra.mxu0 0.0
      %766 = vmatprep.subr.mxu0 0.0
      %767 = vmatpush1.msra.mxu0 0.0
      %768 = vmatprep.subr.mxu0 0.0
      %769 = vmatpush1.msra.mxu0 0.0
      %770 = vmatprep.subr.mxu0 0.0
      %771 = vmatpush1.msra.mxu0 0.0
      %772 = vmatprep.subr.mxu0 0.0
      %773 = vmatpush1.msra.mxu0 0.0
      %774 = vmatprep.subr.mxu0 0.0
      %775 = vmatpush1.msra.mxu0 0.0
      %776 = vmatprep.subr.mxu0 0.0
      %777 = vmatpush1.msra.mxu0 0.0
      %778 = vmatprep.subr.mxu0 0.0
      %779 = vmatpush1.msra.mxu0 0.0
      %780 = vmatprep.subr.mxu0 0.0
      %781 = vmatpush1.msra.mxu0 0.0
      %782 = vmatprep.subr.mxu0 0.0
      %783 = vmatpush1.msra.mxu0 0.0
      %784 = vmatprep.subr.mxu0 0.0
      %785 = vmatpush1.msra.mxu0 0.0
      %786 = vmatprep.subr.mxu0 0.0
      %787 = vmatpush1.msra.mxu0 0.0
      %788 = vmatprep.mubr.f32.mxu0 0.0
      %789 = vmatmul.mubr.f32.gmra.mrb[0].mxu0 %v722
      %v790 = vpop.f32.mrb[0].mxu0
      %v791 = vadd.f32 0.0, %v790
      %v792 = vpop.f32.mrb[0].mxu0
      %793 = vdwg.mxu0
      %v794 = vadd.f32 %v710, %v791
      %795 = vrot.lane.b32.xlu0 %v302, 16
      %v796 = vpop.permute.xlu0 %795
      %v798 = vmul.f32 %v297, %v796
      %s799 = scalar_lea.vmem %s1, 24
      %v800 = vld [vmem:[%s799] sm:$0xf]
      %802 = vrot.lane.b32.xlu0 %v798, 112
      %v803 = vpop.permute.xlu0 %802
      %v806 = vsel %vm312, %v800, 0
      %808 = vmatprep.subr.mxu0 0.0
      %809 = vmatpush1.msra.mxu0 %v803
      %810 = vmatprep.subr.mxu0 0.0
      %811 = vmatpush1.msra.mxu0 0.0
      %812 = vmatprep.subr.mxu0 0.0
      %813 = vmatpush1.msra.mxu0 0.0
      %814 = vmatprep.subr.mxu0 0.0
      %815 = vmatpush1.msra.mxu0 0.0
      %816 = vmatprep.subr.mxu0 0.0
      %817 = vmatpush1.msra.mxu0 0.0
      %818 = vmatprep.subr.mxu0 0.0
      %819 = vmatpush1.msra.mxu0 0.0
      %820 = vmatprep.subr.mxu0 0.0
      %821 = vmatpush1.msra.mxu0 0.0
      %822 = vmatprep.subr.mxu0 0.0
      %823 = vmatpush1.msra.mxu0 0.0
      %824 = vmatprep.subr.mxu0 0.0
      %825 = vmatpush1.msra.mxu0 0.0
      %826 = vmatprep.subr.mxu0 0.0
      %827 = vmatpush1.msra.mxu0 0.0
      %828 = vmatprep.subr.mxu0 0.0
      %829 = vmatpush1.msra.mxu0 0.0
      %830 = vmatprep.subr.mxu0 0.0
      %831 = vmatpush1.msra.mxu0 0.0
      %832 = vmatprep.subr.mxu0 0.0
      %833 = vmatpush1.msra.mxu0 0.0
      %834 = vmatprep.subr.mxu0 0.0
      %835 = vmatpush1.msra.mxu0 0.0
      %836 = vmatprep.subr.mxu0 0.0
      %837 = vmatpush1.msra.mxu0 0.0
      %838 = vmatprep.subr.mxu0 0.0
      %839 = vmatpush1.msra.mxu0 0.0
      %840 = vmatprep.subr.mxu0 0.0
      %841 = vmatpush1.msra.mxu0 0.0
      %842 = vmatprep.subr.mxu0 0.0
      %843 = vmatpush1.msra.mxu0 0.0
      %844 = vmatprep.subr.mxu0 0.0
      %845 = vmatpush1.msra.mxu0 0.0
      %846 = vmatprep.subr.mxu0 0.0
      %847 = vmatpush1.msra.mxu0 0.0
      %848 = vmatprep.subr.mxu0 0.0
      %849 = vmatpush1.msra.mxu0 0.0
      %850 = vmatprep.subr.mxu0 0.0
      %851 = vmatpush1.msra.mxu0 0.0
      %852 = vmatprep.subr.mxu0 0.0
      %853 = vmatpush1.msra.mxu0 0.0
      %854 = vmatprep.subr.mxu0 0.0
      %855 = vmatpush1.msra.mxu0 0.0
      %856 = vmatprep.subr.mxu0 0.0
      %857 = vmatpush1.msra.mxu0 0.0
      %858 = vmatprep.subr.mxu0 0.0
      %859 = vmatpush1.msra.mxu0 0.0
      %860 = vmatprep.subr.mxu0 0.0
      %861 = vmatpush1.msra.mxu0 0.0
      %862 = vmatprep.subr.mxu0 0.0
      %863 = vmatpush1.msra.mxu0 0.0
      %864 = vmatprep.subr.mxu0 0.0
      %865 = vmatpush1.msra.mxu0 0.0
      %866 = vmatprep.subr.mxu0 0.0
      %867 = vmatpush1.msra.mxu0 0.0
      %868 = vmatprep.subr.mxu0 0.0
      %869 = vmatpush1.msra.mxu0 0.0
      %870 = vmatprep.subr.mxu0 0.0
      %871 = vmatpush1.msra.mxu0 0.0
      %872 = vmatprep.mubr.f32.mxu0 0.0
      %873 = vmatmul.mubr.f32.gmra.mrb[0].mxu0 %v806
      %v874 = vpop.f32.mrb[0].mxu0
      %v875 = vadd.f32 0.0, %v874
      %v876 = vpop.f32.mrb[0].mxu0
      %877 = vdwg.mxu0
      %v878 = vadd.f32 %v794, %v875
      %s879 = scalar_lea.vmem %s1, 28
      %v880 = vld [vmem:[%s879] sm:$0xf]
      %881 = vrot.lane.b32.xlu0 %v297, 111
      %v882 = vpop.permute.xlu0 %881
      %v885 = vsel %vm312, %v880, 0
      %887 = vmatprep.subr.mxu0 0.0
      %888 = vmatpush1.msra.mxu0 %v882
      %889 = vmatprep.subr.mxu0 0.0
      %890 = vmatpush1.msra.mxu0 0.0
      %891 = vmatprep.subr.mxu0 0.0
      %892 = vmatpush1.msra.mxu0 0.0
      %893 = vmatprep.subr.mxu0 0.0
      %894 = vmatpush1.msra.mxu0 0.0
      %895 = vmatprep.subr.mxu0 0.0
      %896 = vmatpush1.msra.mxu0 0.0
      %897 = vmatprep.subr.mxu0 0.0
      %898 = vmatpush1.msra.mxu0 0.0
      %899 = vmatprep.subr.mxu0 0.0
      %900 = vmatpush1.msra.mxu0 0.0
      %901 = vmatprep.subr.mxu0 0.0
      %902 = vmatpush1.msra.mxu0 0.0
      %903 = vmatprep.subr.mxu0 0.0
      %904 = vmatpush1.msra.mxu0 0.0
      %905 = vmatprep.subr.mxu0 0.0
      %906 = vmatpush1.msra.mxu0 0.0
      %907 = vmatprep.subr.mxu0 0.0
      %908 = vmatpush1.msra.mxu0 0.0
      %909 = vmatprep.subr.mxu0 0.0
      %910 = vmatpush1.msra.mxu0 0.0
      %911 = vmatprep.subr.mxu0 0.0
      %912 = vmatpush1.msra.mxu0 0.0
      %913 = vmatprep.subr.mxu0 0.0
      %914 = vmatpush1.msra.mxu0 0.0
      %915 = vmatprep.subr.mxu0 0.0
      %916 = vmatpush1.msra.mxu0 0.0
      %917 = vmatprep.subr.mxu0 0.0
      %918 = vmatpush1.msra.mxu0 0.0
      %919 = vmatprep.subr.mxu0 0.0
      %920 = vmatpush1.msra.mxu0 0.0
      %921 = vmatprep.subr.mxu0 0.0
      %922 = vmatpush1.msra.mxu0 0.0
      %923 = vmatprep.subr.mxu0 0.0
      %924 = vmatpush1.msra.mxu0 0.0
      %925 = vmatprep.subr.mxu0 0.0
      %926 = vmatpush1.msra.mxu0 0.0
      %927 = vmatprep.subr.mxu0 0.0
      %928 = vmatpush1.msra.mxu0 0.0
      %929 = vmatprep.subr.mxu0 0.0
      %930 = vmatpush1.msra.mxu0 0.0
      %931 = vmatprep.subr.mxu0 0.0
      %932 = vmatpush1.msra.mxu0 0.0
      %933 = vmatprep.subr.mxu0 0.0
      %934 = vmatpush1.msra.mxu0 0.0
      %935 = vmatprep.subr.mxu0 0.0
      %936 = vmatpush1.msra.mxu0 0.0
      %937 = vmatprep.subr.mxu0 0.0
      %938 = vmatpush1.msra.mxu0 0.0
      %939 = vmatprep.subr.mxu0 0.0
      %940 = vmatpush1.msra.mxu0 0.0
      %941 = vmatprep.subr.mxu0 0.0
      %942 = vmatpush1.msra.mxu0 0.0
      %943 = vmatprep.subr.mxu0 0.0
      %944 = vmatpush1.msra.mxu0 0.0
      %945 = vmatprep.subr.mxu0 0.0
      %946 = vmatpush1.msra.mxu0 0.0
      %947 = vmatprep.subr.mxu0 0.0
      %948 = vmatpush1.msra.mxu0 0.0
      %949 = vmatprep.subr.mxu0 0.0
      %950 = vmatpush1.msra.mxu0 0.0
      %951 = vmatprep.mubr.f32.mxu0 0.0
      %952 = vmatmul.mubr.f32.gmra.mrb[0].mxu0 %v885
      %v953 = vpop.f32.mrb[0].mxu0
      %v954 = vadd.f32 0.0, %v953
      %v955 = vpop.f32.mrb[0].mxu0
      %956 = vdwg.mxu0
      %v957 = vadd.f32 %v878, %v954
      %958 = vrot.lane.b32.xlu0 %v463, 18
      %v959 = vpop.permute.xlu0 %958
      %v961 = vmul.f32 %v297, %v959
      %s962 = scalar_lea.vmem %s1, 32
      %v963 = vld [vmem:[%s962] sm:$0xf]
      %965 = vrot.lane.b32.xlu0 %v961, 110
      %v966 = vpop.permute.xlu0 %965
      %v969 = vsel %vm312, %v963, 0
      %971 = vmatprep.subr.mxu0 0.0
      %972 = vmatpush1.msra.mxu0 %v966
      %973 = vmatprep.subr.mxu0 0.0
      %974 = vmatpush1.msra.mxu0 0.0
      %975 = vmatprep.subr.mxu0 0.0
      %976 = vmatpush1.msra.mxu0 0.0
      %977 = vmatprep.subr.mxu0 0.0
      %978 = vmatpush1.msra.mxu0 0.0
      %979 = vmatprep.subr.mxu0 0.0
      %980 = vmatpush1.msra.mxu0 0.0
      %981 = vmatprep.subr.mxu0 0.0
      %982 = vmatpush1.msra.mxu0 0.0
      %983 = vmatprep.subr.mxu0 0.0
      %984 = vmatpush1.msra.mxu0 0.0
      %985 = vmatprep.subr.mxu0 0.0
      %986 = vmatpush1.msra.mxu0 0.0
      %987 = vmatprep.subr.mxu0 0.0
      %988 = vmatpush1.msra.mxu0 0.0
      %989 = vmatprep.subr.mxu0 0.0
      %990 = vmatpush1.msra.mxu0 0.0
      %991 = vmatprep.subr.mxu0 0.0
      %992 = vmatpush1.msra.mxu0 0.0
      %993 = vmatprep.subr.mxu0 0.0
      %994 = vmatpush1.msra.mxu0 0.0
      %995 = vmatprep.subr.mxu0 0.0
      %996 = vmatpush1.msra.mxu0 0.0
      %997 = vmatprep.subr.mxu0 0.0
      %998 = vmatpush1.msra.mxu0 0.0
      %999 = vmatprep.subr.mxu0 0.0
      %1000 = vmatpush1.msra.mxu0 0.0
      %1001 = vmatprep.subr.mxu0 0.0
      %1002 = vmatpush1.msra.mxu0 0.0
      %1003 = vmatprep.subr.mxu0 0.0
      %1004 = vmatpush1.msra.mxu0 0.0
      %1005 = vmatprep.subr.mxu0 0.0
      %1006 = vmatpush1.msra.mxu0 0.0
      %1007 = vmatprep.subr.mxu0 0.0
      %1008 = vmatpush1.msra.mxu0 0.0
      %1009 = vmatprep.subr.mxu0 0.0
      %1010 = vmatpush1.msra.mxu0 0.0
      %1011 = vmatprep.subr.mxu0 0.0
      %1012 = vmatpush1.msra.mxu0 0.0
      %1013 = vmatprep.subr.mxu0 0.0
      %1014 = vmatpush1.msra.mxu0 0.0
      %1015 = vmatprep.subr.mxu0 0.0
      %1016 = vmatpush1.msra.mxu0 0.0
      %1017 = vmatprep.subr.mxu0 0.0
      %1018 = vmatpush1.msra.mxu0 0.0
      %1019 = vmatprep.subr.mxu0 0.0
      %1020 = vmatpush1.msra.mxu0 0.0
      %1021 = vmatprep.subr.mxu0 0.0
      %1022 = vmatpush1.msra.mxu0 0.0
      %1023 = vmatprep.subr.mxu0 0.0
      %1024 = vmatpush1.msra.mxu0 0.0
      %1025 = vmatprep.subr.mxu0 0.0
      %1026 = vmatpush1.msra.mxu0 0.0
      %1027 = vmatprep.subr.mxu0 0.0
      %1028 = vmatpush1.msra.mxu0 0.0
      %1029 = vmatprep.subr.mxu0 0.0
      %1030 = vmatpush1.msra.mxu0 0.0
      %1031 = vmatprep.subr.mxu0 0.0
      %1032 = vmatpush1.msra.mxu0 0.0
      %1033 = vmatprep.subr.mxu0 0.0
      %1034 = vmatpush1.msra.mxu0 0.0
      %1035 = vmatprep.mubr.f32.mxu0 0.0
      %1036 = vmatmul.mubr.f32.gmra.mrb[0].mxu0 %v969
      %v1037 = vpop.f32.mrb[0].mxu0
      %v1038 = vadd.f32 0.0, %v1037
      %v1039 = vpop.f32.mrb[0].mxu0
      %1040 = vdwg.mxu0
      %v1041 = vadd.f32 %v957, %v1038
      %v1042 = vld [vmem:[%s2] sm:$0xf]
      %1044 = vset.pattern.permute.xlu0 0
      %1045 = vperm.xlu0 %1044, %v1042
      %v1046 = vpop.permute.xlu0 %1045
      %v1048 = vadd.f32 %v1041, %v1046
      %vm1049 = vcmask 519168
      %1050 = vst.msk [vmem:[%s286] sm:$0xf] %vm1049, %v1048
      %v1051 = vsel %vm1049, %v1048, 0.0
      %1052 = vadd.xlane.f32.xlu0 %v1051
      %v1053 = vpop.xlane.xlu0 %1052
      %vm1054 = vcmask 3072
      %1055 = vst.msk [vmem:[%s290] sm:$0xf] %vm1054, %v1053
      %v1056 = vmul.f32 %v1048, %v1048
      %v1057 = vsel %vm1049, %v1056, 0.0
      %1058 = vadd.xlane.f32.xlu0 %v1057
      %v1059 = vpop.xlane.xlu0 %1058
      %1060 = vst.msk [vmem:[%s294] sm:$0xf] %vm1054, %v1059
      %p1061 = scmp.lt.s32.totalorder %s19, 1
      %s1062 = scalar_select %p1061, %s19, 1
      %s1063 = smul.addr %s1062, 4
      %s1064 = scalar_lea.vmem %s5, %s1063
      %p1065 = scmp.lt.s32.totalorder %s19, 1
      %s1066 = scalar_select %p1065, %s19, 1
      %s1067 = smul.addr %s1066, 4
      %s1068 = scalar_lea.vmem %s6, %s1067
      %p1069 = scmp.lt.s32.totalorder %s19, 1
      %s1070 = scalar_select %p1069, %s19, 1
      %s1071 = smul.addr %s1070, 4
      %s1072 = scalar_lea.vmem %s7, %s1071
      // Predicated region
      $region41: #{up_forward.6} parent=39 // pred_check
        %p1073 = pneg %p147
      $region42: #{up_forward.6} parent=39 // pred_check_branch
        %1075 = sbr.rel (%p1073) target = $region44
      $region43: #{up_forward.6} parent=39 // pred_region
        _
      $region44: #{up_forward.6} parent=39 // pred_fallthru
        _
      // Predicated region
      $region45: #{up_forward.6} parent=39 // pred_check
        %p1076 = pneg %p173
      $region46: #{up_forward.6} parent=39 // pred_check_branch
        %1078 = sbr.rel (%p1076) target = $region48
      $region47: #{up_forward.6} parent=39 // pred_region
        _
      $region48: #{up_forward.6} parent=39 // pred_fallthru
        _
      // Predicated region
      $region49: #{up_forward.6} parent=39 // pred_check
        %p1079 = pneg %p199
      $region50: #{up_forward.6} parent=39 // pred_check_branch
        %1081 = sbr.rel (%p1079) target = $region52
      $region51: #{up_forward.6} parent=39 // pred_region
        _
      $region52: #{up_forward.6} parent=39 // pred_fallthru
        _
    $region40: #{up_forward.6} parent=5 // pred_fallthru
      _
    %p1082 = scmp.le.s32.totalorder 2, %s14
    // Predicated region
    $region53: #{up_forward.6} parent=5 // pred_check
      %p1083 = pneg %p1082
    $region54: #{up_forward.6} parent=5 // pred_check_branch
      %1085 = sbr.rel (%p1083) target = $region56
    $region55: #{up_forward.6} parent=5 // pred_region
      %s1086 = ssub.s32 %s14, 2
      // Predicated region
      $region57: #{up_forward.6} parent=55 // pred_check
        %p1087 = pneg %p153
      $region58: #{up_forward.6} parent=55 // pred_check_branch
        %1089 = sbr.rel (%p1087) target = $region60
      $region59: #{up_forward.6} parent=55 // pred_region
        %p1090 = scmp.lt.s32.totalorder %s20, 1
        %s1091 = scalar_select %p1090, %s20, 1
        %s1092 = smul.addr %s1091, 4
        %s1093 = scalar_lea.vmem %s5, %s1092
      $region60: #{up_forward.6} parent=55 // pred_fallthru
        _
      // Predicated region
      $region61: #{up_forward.6} parent=55 // pred_check
        %p1094 = pneg %p179
      $region62: #{up_forward.6} parent=55 // pred_check_branch
        %1096 = sbr.rel (%p1094) target = $region64
      $region63: #{up_forward.6} parent=55 // pred_region
        %p1097 = scmp.lt.s32.totalorder %s20, 1
        %s1098 = scalar_select %p1097, %s20, 1
        %s1099 = smul.addr %s1098, 4
        %s1100 = scalar_lea.vmem %s6, %s1099
      $region64: #{up_forward.6} parent=55 // pred_fallthru
        _
      // Predicated region
      $region65: #{up_forward.6} parent=55 // pred_check
        %p1101 = pneg %p205
      $region66: #{up_forward.6} parent=55 // pred_check_branch
        %1103 = sbr.rel (%p1101) target = $region68
      $region67: #{up_forward.6} parent=55 // pred_region
        %p1104 = scmp.lt.s32.totalorder %s20, 1
        %s1105 = scalar_select %p1104, %s20, 1
        %s1106 = smul.addr %s1105, 4
        %s1107 = scalar_lea.vmem %s7, %s1106
      $region68: #{up_forward.6} parent=55 // pred_fallthru
        _
    $region56: #{up_forward.6} parent=5 // pred_fallthru
      _
  $region6: #{up_forward.6} parent=0 // loop_footer
    %s18 = sadd.s32 1, %s14
  $region7: #{up_forward.6} parent=0 // loop_footer_branch
    %13 = sbr.rel target = $region3
  $region8: #{up_forward.6} parent=0 // loop_exit
    _

// kernel: up_forward.8
$region0: #{up_forward.8}
  #allocation0 [shape = 'u32[]', space=smem, size = 0x4, offset = 0x4, fixed_abs, tag = 'smem constant byte address 0x4 - core index']
  #allocation1 [shape = 'u32[144,128]{1,0:T(1,128)}', space=vmem, size = 0x12000, scoped, tag = 'internal scratch']
  %s0 = inlined_call_operand.vmem [shape: f32[2,4,290], index: 0, kind: input, shape index: {}]
  %s1 = inlined_call_operand.vmem [shape: f32[2,4,290], index: 1, kind: input, shape index: {}]
  %s2 = inlined_call_operand.vmem [shape: f32[9,4,4], index: 2, kind: input, shape index: {}]
  %s3 = inlined_call_operand.vmem [shape: f32[9,4,4], index: 3, kind: input, shape index: {}]
  %s4 = inlined_call_operand.vmem [shape: f32[4,1], index: 4, kind: input, shape index: {}]
  %s5 = inlined_call_operand.vmem [shape: f32[1,256], index: 5, kind: input, shape index: {}]
  %s6 = inlined_call_operand.vmem [shape: f32[1,256], index: 6, kind: input, shape index: {}]
  %s7 = inlined_call_operand.vmem [shape: f32[2,4,256], index: 7, kind: output, shape index: {0}]
  %s8 = inlined_call_operand.vmem [shape: f32[2,4,1], index: 8, kind: output, shape index: {1}]
  %s9 = inlined_call_operand.vmem [shape: f32[2,4,1], index: 9, kind: output, shape index: {2}]
  %10 = xla_tuple %s7, %s8, %s9
  %s11 = sld [smem:[#allocation0]]
  $region77: #{up_forward.8} parent=0
    _
  %s13 = ssub.s32 1, %s11
  %s14 = scalar_select 0, %s13, %s11
  loop: start=0, step=1, limit=4
  $region2: #{up_forward.8} parent=0 // loop_pre_header
    _
  $region3: #{up_forward.8} parent=0 // loop_header
    %s16 = sphi 0, %s20
    %p17 = scmp.ge.s32.totalorder %s16, 4
    %s26 = sphi 0, %s28
    %s29 = sphi 0, %s26
    %s30 = sphi 0, %s29
    %s46 = sphi 0, %s30
    %s52 = sphi 0, %s54
    %s55 = sphi 0, %s52
    %s56 = sphi 0, %s55
    %s72 = sphi 0, %s56
    %s76 = sphi 0, %s76
    %s78 = sphi 0, %s76
    %s79 = sphi 0, %s78
    %s93 = sphi 0, %s79
    %s97 = sphi 0, %s97
    %s99 = sphi 0, %s97
    %s100 = sphi 0, %s99
    %s114 = sphi 0, %s100
    %s118 = sphi 0, %s118
    %s120 = sphi 0, %s118
    %s121 = sphi 0, %s120
    %s135 = sphi 0, %s121
    %s139 = sphi 0, %s139
    %s141 = sphi 0, %s139
    %s142 = sphi 0, %s141
    %s156 = sphi 0, %s142
    %s160 = sphi 0, %s160
    %s162 = sphi 0, %s160
    %s163 = sphi 0, %s162
    %s177 = sphi 0, %s163
    %s183 = sphi 0, %s185
    %s186 = sphi 0, %s183
    %s187 = sphi 0, %s186
    %s203 = sphi 0, %s187
    %s209 = sphi 0, %s211
    %s212 = sphi 0, %s209
    %s213 = sphi 0, %s212
    %s229 = sphi 0, %s213
    %s235 = sphi 0, %s237
    %s238 = sphi 0, %s235
    %s239 = sphi 0, %s238
    %s255 = sphi 0, %s239
  $region4: #{up_forward.8} parent=0 // loop_header_branch
    %19 = sbr.rel (%p17) target = $region8
  $region5: #{up_forward.8} parent=0 // loop_body
    %s21 = ssub.s32 %s16, 1
    %s22 = ssub.s32 %s16, 2
    %s23 = sadd.s32 %s16, 1
    %s24 = ssub.s32 %s16, %s23
    %p25 = scmp.eq.s32.totalorder %s24, 0
    %s27 = sadd.s32 %s26, 1
    %s28 = scalar_select %p25, %s26, %s27
    %p31 = pneg %p25
    %p32 = scmp.eq.s32.totalorder %s16, 1
    %p33 = por %p31, %p32
    %p34 = scmp.ne.s32.totalorder %s26, %s29
    %p35 = scmp.eq.s32.totalorder %s16, 0
    %p36 = por %p34, %p35
    %p37 = scmp.ne.s32.totalorder %s26, %s29
    %p38 = scmp.eq.s32.totalorder %s21, 1
    %p39 = por %p37, %p38
    %p40 = scmp.ne.s32.totalorder %s29, %s30
    %p41 = scmp.eq.s32.totalorder %s21, 0
    %p42 = por %p40, %p41
    %p43 = scmp.ne.s32.totalorder %s29, %s30
    %p44 = scmp.eq.s32.totalorder %s22, 1
    %p45 = por %p43, %p44
    %p47 = scmp.ne.s32.totalorder %s30, %s46
    %p48 = scmp.eq.s32.totalorder %s22, 0
    %p49 = por %p47, %p48
    %s50 = ssub.s32 %s16, %s23
    %p51 = scmp.eq.s32.totalorder %s50, 0
    %s53 = sadd.s32 %s52, 1
    %s54 = scalar_select %p51, %s52, %s53
    %p57 = pneg %p51
    %p58 = scmp.eq.s32.totalorder %s16, 1
    %p59 = por %p57, %p58
    %p60 = scmp.ne.s32.totalorder %s52, %s55
    %p61 = scmp.eq.s32.totalorder %s16, 0
    %p62 = por %p60, %p61
    %p63 = scmp.ne.s32.totalorder %s52, %s55
    %p64 = scmp.eq.s32.totalorder %s21, 1
    %p65 = por %p63, %p64
    %p66 = scmp.ne.s32.totalorder %s55, %s56
    %p67 = scmp.eq.s32.totalorder %s21, 0
    %p68 = por %p66, %p67
    %p69 = scmp.ne.s32.totalorder %s55, %s56
    %p70 = scmp.eq.s32.totalorder %s22, 1
    %p71 = por %p69, %p70
    %p73 = scmp.ne.s32.totalorder %s56, %s72
    %p74 = scmp.eq.s32.totalorder %s22, 0
    %p75 = por %p73, %p74
    %s77 = sadd.s32 %s76, 1
    %p80 = scmp.eq.s32.totalorder %s16, 1
    %p81 = scmp.ne.s32.totalorder %s76, %s78
    %p82 = scmp.eq.s32.totalorder %s16, 0
    %p83 = por %p81, %p82
    %p84 = scmp.ne.s32.totalorder %s76, %s78
    %p85 = scmp.eq.s32.totalorder %s21, 1
    %p86 = por %p84, %p85
    %p87 = scmp.ne.s32.totalorder %s78, %s79
    %p88 = scmp.eq.s32.totalorder %s21, 0
    %p89 = por %p87, %p88
    %p90 = scmp.ne.s32.totalorder %s78, %s79
    %p91 = scmp.eq.s32.totalorder %s22, 1
    %p92 = por %p90, %p91
    %p94 = scmp.ne.s32.totalorder %s79, %s93
    %p95 = scmp.eq.s32.totalorder %s22, 0
    %p96 = por %p94, %p95
    %s98 = sadd.s32 %s97, 1
    %p101 = scmp.eq.s32.totalorder %s16, 1
    %p102 = scmp.ne.s32.totalorder %s97, %s99
    %p103 = scmp.eq.s32.totalorder %s16, 0
    %p104 = por %p102, %p103
    %p105 = scmp.ne.s32.totalorder %s97, %s99
    %p106 = scmp.eq.s32.totalorder %s21, 1
    %p107 = por %p105, %p106
    %p108 = scmp.ne.s32.totalorder %s99, %s100
    %p109 = scmp.eq.s32.totalorder %s21, 0
    %p110 = por %p108, %p109
    %p111 = scmp.ne.s32.totalorder %s99, %s100
    %p112 = scmp.eq.s32.totalorder %s22, 1
    %p113 = por %p111, %p112
    %p115 = scmp.ne.s32.totalorder %s100, %s114
    %p116 = scmp.eq.s32.totalorder %s22, 0
    %p117 = por %p115, %p116
    %s119 = sadd.s32 %s118, 1
    %p122 = scmp.eq.s32.totalorder %s16, 1
    %p123 = scmp.ne.s32.totalorder %s118, %s120
    %p124 = scmp.eq.s32.totalorder %s16, 0
    %p125 = por %p123, %p124
    %p126 = scmp.ne.s32.totalorder %s118, %s120
    %p127 = scmp.eq.s32.totalorder %s21, 1
    %p128 = por %p126, %p127
    %p129 = scmp.ne.s32.totalorder %s120, %s121
    %p130 = scmp.eq.s32.totalorder %s21, 0
    %p131 = por %p129, %p130
    %p132 = scmp.ne.s32.totalorder %s120, %s121
    %p133 = scmp.eq.s32.totalorder %s22, 1
    %p134 = por %p132, %p133
    %p136 = scmp.ne.s32.totalorder %s121, %s135
    %p137 = scmp.eq.s32.totalorder %s22, 0
    %p138 = por %p136, %p137
    %s140 = sadd.s32 %s139, 1
    %p143 = scmp.eq.s32.totalorder %s16, 1
    %p144 = scmp.ne.s32.totalorder %s139, %s141
    %p145 = scmp.eq.s32.totalorder %s16, 0
    %p146 = por %p144, %p145
    %p147 = scmp.ne.s32.totalorder %s139, %s141
    %p148 = scmp.eq.s32.totalorder %s21, 1
    %p149 = por %p147, %p148
    %p150 = scmp.ne.s32.totalorder %s141, %s142
    %p151 = scmp.eq.s32.totalorder %s21, 0
    %p152 = por %p150, %p151
    %p153 = scmp.ne.s32.totalorder %s141, %s142
    %p154 = scmp.eq.s32.totalorder %s22, 1
    %p155 = por %p153, %p154
    %p157 = scmp.ne.s32.totalorder %s142, %s156
    %p158 = scmp.eq.s32.totalorder %s22, 0
    %p159 = por %p157, %p158
    %s161 = sadd.s32 %s160, 1
    %p164 = scmp.eq.s32.totalorder %s16, 1
    %p165 = scmp.ne.s32.totalorder %s160, %s162
    %p166 = scmp.eq.s32.totalorder %s16, 0
    %p167 = por %p165, %p166
    %p168 = scmp.ne.s32.totalorder %s160, %s162
    %p169 = scmp.eq.s32.totalorder %s21, 1
    %p170 = por %p168, %p169
    %p171 = scmp.ne.s32.totalorder %s162, %s163
    %p172 = scmp.eq.s32.totalorder %s21, 0
    %p173 = por %p171, %p172
    %p174 = scmp.ne.s32.totalorder %s162, %s163
    %p175 = scmp.eq.s32.totalorder %s22, 1
    %p176 = por %p174, %p175
    %p178 = scmp.ne.s32.totalorder %s163, %s177
    %p179 = scmp.eq.s32.totalorder %s22, 0
    %p180 = por %p178, %p179
    %s181 = ssub.s32 %s16, %s23
    %p182 = scmp.eq.s32.totalorder %s181, 0
    %s184 = sadd.s32 %s183, 1
    %s185 = scalar_select %p182, %s183, %s184
    %p188 = pneg %p182
    %p189 = scmp.eq.s32.totalorder %s16, 1
    %p190 = por %p188, %p189
    %p191 = scmp.ne.s32.totalorder %s183, %s186
    %p192 = scmp.eq.s32.totalorder %s16, 0
    %p193 = por %p191, %p192
    %p194 = scmp.ne.s32.totalorder %s183, %s186
    %p195 = scmp.eq.s32.totalorder %s21, 1
    %p196 = por %p194, %p195
    %p197 = scmp.ne.s32.totalorder %s186, %s187
    %p198 = scmp.eq.s32.totalorder %s21, 0
    %p199 = por %p197, %p198
    %p200 = scmp.ne.s32.totalorder %s186, %s187
    %p201 = scmp.eq.s32.totalorder %s22, 1
    %p202 = por %p200, %p201
    %p204 = scmp.ne.s32.totalorder %s187, %s203
    %p205 = scmp.eq.s32.totalorder %s22, 0
    %p206 = por %p204, %p205
    %s207 = ssub.s32 %s16, %s23
    %p208 = scmp.eq.s32.totalorder %s207, 0
    %s210 = sadd.s32 %s209, 1
    %s211 = scalar_select %p208, %s209, %s210
    %p214 = pneg %p208
    %p215 = scmp.eq.s32.totalorder %s16, 1
    %p216 = por %p214, %p215
    %p217 = scmp.ne.s32.totalorder %s209, %s212
    %p218 = scmp.eq.s32.totalorder %s16, 0
    %p219 = por %p217, %p218
    %p220 = scmp.ne.s32.totalorder %s209, %s212
    %p221 = scmp.eq.s32.totalorder %s21, 1
    %p222 = por %p220, %p221
    %p223 = scmp.ne.s32.totalorder %s212, %s213
    %p224 = scmp.eq.s32.totalorder %s21, 0
    %p225 = por %p223, %p224
    %p226 = scmp.ne.s32.totalorder %s212, %s213
    %p227 = scmp.eq.s32.totalorder %s22, 1
    %p228 = por %p226, %p227
    %p230 = scmp.ne.s32.totalorder %s213, %s229
    %p231 = scmp.eq.s32.totalorder %s22, 0
    %p232 = por %p230, %p231
    %s233 = ssub.s32 %s16, %s23
    %p234 = scmp.eq.s32.totalorder %s233, 0
    %s236 = sadd.s32 %s235, 1
    %s237 = scalar_select %p234, %s235, %s236
    %p240 = pneg %p234
    %p241 = scmp.eq.s32.totalorder %s16, 1
    %p242 = por %p240, %p241
    %p243 = scmp.ne.s32.totalorder %s235, %s238
    %p244 = scmp.eq.s32.totalorder %s16, 0
    %p245 = por %p243, %p244
    %p246 = scmp.ne.s32.totalorder %s235, %s238
    %p247 = scmp.eq.s32.totalorder %s21, 1
    %p248 = por %p246, %p247
    %p249 = scmp.ne.s32.totalorder %s238, %s239
    %p250 = scmp.eq.s32.totalorder %s21, 0
    %p251 = por %p249, %p250
    %p252 = scmp.ne.s32.totalorder %s238, %s239
    %p253 = scmp.eq.s32.totalorder %s22, 1
    %p254 = por %p252, %p253
    %p256 = scmp.ne.s32.totalorder %s239, %s255
    %p257 = scmp.eq.s32.totalorder %s22, 0
    %p258 = por %p256, %p257
    %p259 = scmp.le.s32.totalorder 1, %s16
    %p260 = scmp.lt.s32.totalorder %s16, 3
    %p261 = pnand %p259, %p260
    %p262 = pneg %p261
    // Predicated region
    $region9: #{up_forward.8} parent=5 // pred_check
      _
    $region10: #{up_forward.8} parent=5 // pred_check_branch
      %264 = sbr.rel (%p261) target = $region12
    $region11: #{up_forward.8} parent=5 // pred_region
      %s265 = ssub.s32 %s16, 1
      // Predicated region
      $region13: #{up_forward.8} parent=11 // pred_check
        %p266 = pneg %p89
      $region14: #{up_forward.8} parent=11 // pred_check_branch
        %268 = sbr.rel (%p266) target = $region16
      $region15: #{up_forward.8} parent=11 // pred_region
        _
      $region16: #{up_forward.8} parent=11 // pred_fallthru
        _
      // Predicated region
      $region17: #{up_forward.8} parent=11 // pred_check
        %p269 = pneg %p110
      $region18: #{up_forward.8} parent=11 // pred_check_branch
        %271 = sbr.rel (%p269) target = $region20
      $region19: #{up_forward.8} parent=11 // pred_region
        _
      $region20: #{up_forward.8} parent=11 // pred_fallthru
        _
      // Predicated region
      $region21: #{up_forward.8} parent=11 // pred_check
        %p272 = pneg %p131
      $region22: #{up_forward.8} parent=11 // pred_check_branch
        %274 = sbr.rel (%p272) target = $region24
      $region23: #{up_forward.8} parent=11 // pred_region
        _
      $region24: #{up_forward.8} parent=11 // pred_fallthru
        _
      // Predicated region
      $region25: #{up_forward.8} parent=11 // pred_check
        %p275 = pneg %p152
      $region26: #{up_forward.8} parent=11 // pred_check_branch
        %277 = sbr.rel (%p275) target = $region28
      $region27: #{up_forward.8} parent=11 // pred_region
        _
      $region28: #{up_forward.8} parent=11 // pred_fallthru
        _
      // Predicated region
      $region29: #{up_forward.8} parent=11 // pred_check
        %p278 = pneg %p173
      $region30: #{up_forward.8} parent=11 // pred_check_branch
        %280 = sbr.rel (%p278) target = $region32
      $region31: #{up_forward.8} parent=11 // pred_region
        _
      $region32: #{up_forward.8} parent=11 // pred_fallthru
        _
    $region12: #{up_forward.8} parent=5 // pred_fallthru
      _
    %p281 = scmp.lt.s32.totalorder %s16, 2
    // Predicated region
    $region33: #{up_forward.8} parent=5 // pred_check
      %p282 = pneg %p281
    $region34: #{up_forward.8} parent=5 // pred_check_branch
      %284 = sbr.rel (%p282) target = $region36
    $region35: #{up_forward.8} parent=5 // pred_region
      // Predicated region
      $region37: #{up_forward.8} parent=35 // pred_check
        %p285 = pneg %p36
      $region38: #{up_forward.8} parent=35 // pred_check_branch
        %287 = sbr.rel (%p285) target = $region40
      $region39: #{up_forward.8} parent=35 // pred_region
        %p288 = scmp.lt.s32.totalorder %s16, 1
        %s289 = scalar_select %p288, %s16, 1
        %s290 = smul.addr %s289, 3
        %s291 = smul.addr %s290, 4
        %s292 = scalar_lea.vmem %s0, %s291
      $region40: #{up_forward.8} parent=35 // pred_fallthru
        _
      // Predicated region
      $region41: #{up_forward.8} parent=35 // pred_check
        %p293 = pneg %p62
      $region42: #{up_forward.8} parent=35 // pred_check_branch
        %295 = sbr.rel (%p293) target = $region44
      $region43: #{up_forward.8} parent=35 // pred_region
        %p296 = scmp.lt.s32.totalorder %s16, 1
        %s297 = scalar_select %p296, %s16, 1
        %s298 = smul.addr %s297, 3
        %s299 = smul.addr %s298, 4
        %s300 = scalar_lea.vmem %s1, %s299
      $region44: #{up_forward.8} parent=35 // pred_fallthru
        _
    $region36: #{up_forward.8} parent=5 // pred_fallthru
      _
    %p301 = scmp.le.s32.totalorder 1, %s16
    %p302 = scmp.lt.s32.totalorder %s16, 3
    %p303 = pnand %p301, %p302
    %p304 = pneg %p303
    // Predicated region
    $region45: #{up_forward.8} parent=5 // pred_check
      _
    $region46: #{up_forward.8} parent=5 // pred_check_branch
      %306 = sbr.rel (%p303) target = $region48
    $region47: #{up_forward.8} parent=5 // pred_region
      %s307 = ssub.s32 %s16, 1
      %p308 = scmp.lt.s32.totalorder %s21, 1
      %s309 = scalar_select %p308, %s21, 1
      %s310 = smul.addr %s309, 3
      %s311 = smul.addr %s310, 4
      %s312 = scalar_lea.vmem %s0, %s311
      %p313 = pneg %p42
      %p314 = pneg %p39
      %p315 = scmp.lt.s32.totalorder %s21, 1
      %s316 = scalar_select %p315, %s21, 1
      %s317 = smul.addr %s316, 3
      %s318 = smul.addr %s317, 4
      %s319 = scalar_lea.vmem %s1, %s318
      %p320 = pneg %p68
      %p321 = pneg %p65
      %p322 = pneg %p89
      %p323 = pneg %p86
      %p324 = pneg %p110
      %p325 = pneg %p107
      %p326 = pneg %p131
      %p327 = pneg %p128
      %p328 = pneg %p152
      %p329 = pneg %p149
      %p330 = pneg %p173
      %p331 = pneg %p170
      %p332 = pneg %p199
      %p333 = pneg %p196
      %p334 = scmp.lt.s32.totalorder %s21, 1
      %s335 = scalar_select %p334, %s21, 1
      %s336 = smul.addr %s335, 2
      %s337 = smul.addr %s336, 4
      %s338 = scalar_lea.vmem %s7, %s337
      %p339 = pneg %p225
      %p340 = pneg %p222
      %p341 = scmp.lt.s32.totalorder %s21, 1
      %s342 = scalar_select %p341, %s21, 1
      %s343 = smul.addr %s342, 4
      %s344 = scalar_lea.vmem %s8, %s343
      %p345 = pneg %p251
      %p346 = pneg %p248
      %p347 = scmp.lt.s32.totalorder %s21, 1
      %s348 = scalar_select %p347, %s21, 1
      %s349 = smul.addr %s348, 4
      %s350 = scalar_lea.vmem %s9, %s349
      %p351 = scmp.lt.s32.totalorder %s21, 1
      %s352 = scalar_select %p351, %s21, 1
      %s353 = smul.addr %s352, 3
      %s354 = smul.addr %s353, 4
      %s355 = scalar_lea.vmem %s0, %s354
      %p356 = scmp.lt.s32.totalorder %s21, 1
      %s357 = scalar_select %p356, %s21, 1
      %s358 = smul.addr %s357, 3
      %s359 = smul.addr %s358, 4
      %s360 = scalar_lea.vmem %s1, %s359
      %p361 = scmp.lt.s32.totalorder %s21, 1
      %s362 = scalar_select %p361, %s21, 1
      %s363 = smul.addr %s362, 2
      %s364 = smul.addr %s363, 4
      %s365 = scalar_lea.vmem %s7, %s364
      %p366 = scmp.lt.s32.totalorder %s21, 1
      %s367 = scalar_select %p366, %s21, 1
      %s368 = smul.addr %s367, 4
      %s369 = scalar_lea.vmem %s8, %s368
      %p370 = scmp.lt.s32.totalorder %s21, 1
      %s371 = scalar_select %p370, %s21, 1
      %s372 = smul.addr %s371, 4
      %s373 = scalar_lea.vmem %s9, %s372
      %v374 = vld [vmem:[%s5] sm:$0x3]
      %v375 = vld [vmem:[%s6] sm:$0x3]
      %v376 = vld [vmem:[%s355] sm:$0xff]
      %v378 = vlaneseq
      %v379 = vshrl.u32 %v378, 7
      %v380 = vsub.s32 0, %v379
      %v381 = vrot.slane %v374, %v380
      %v382 = vlaneseq
      %v383 = vshrl.u32 %v382, 7
      %v384 = vsub.s32 1, %v383
      %v385 = vrot.slane %v374, %v384
      %v386 = vcombine.low %v381, %v385
      %v388 = vmul.f32 %v376, %v386
      %v389 = vld [vmem:[%s2] sm:$0xf]
      %v390 = vld [vmem:[%s355 + $0x8] sm:$0xf]
      %s391 = scalar_lea.vmem %s2, 4
      %v392 = vld [vmem:[%s391] sm:$0xf]
      %v395 = vcombine.high %v376, %v376
      %396 = vrot.lane.b32.xlu0 %v376, 127
      %v397 = vpop.permute.xlu0 %396
      %398 = vrot.lane.b32.xlu0 %v395, 127
      %v399 = vpop.permute.xlu0 %398
      %400 = vrot.lane.b32.xlu0 %v390, 127
      %v401 = vpop.permute.xlu0 %400
      %vm402 = vcmask 1039360
      %v403 = vsel %vm402, %v397, %v399
      %v404 = vsel %vm402, %v399, %v401
      %vm405 = vcmask 31744
      %v407 = vsel %vm405, %v392, 0
      %vm409 = vcmask 1043456
      %v410 = vsel %vm409, %v403, 0
      %v412 = vsel %vm409, %v404, 0
      %414 = vmatprep.subr.mxu0 %v412
      %415 = vmatpush1.msra.mxu0 %v410
      %416 = vmatprep.subr.mxu0 0.0
      %417 = vmatpush1.msra.mxu0 0.0
      %418 = vmatprep.subr.mxu0 0.0
      %419 = vmatpush1.msra.mxu0 0.0
      %420 = vmatprep.subr.mxu0 0.0
      %421 = vmatpush1.msra.mxu0 0.0
      %422 = vmatprep.subr.mxu0 0.0
      %423 = vmatpush1.msra.mxu0 0.0
      %424 = vmatprep.subr.mxu0 0.0
      %425 = vmatpush1.msra.mxu0 0.0
      %426 = vmatprep.subr.mxu0 0.0
      %427 = vmatpush1.msra.mxu0 0.0
      %428 = vmatprep.subr.mxu0 0.0
      %429 = vmatpush1.msra.mxu0 0.0
      %430 = vmatprep.subr.mxu0 0.0
      %431 = vmatpush1.msra.mxu0 0.0
      %432 = vmatprep.subr.mxu0 0.0
      %433 = vmatpush1.msra.mxu0 0.0
      %434 = vmatprep.subr.mxu0 0.0
      %435 = vmatpush1.msra.mxu0 0.0
      %436 = vmatprep.subr.mxu0 0.0
      %437 = vmatpush1.msra.mxu0 0.0
      %438 = vmatprep.subr.mxu0 0.0
      %439 = vmatpush1.msra.mxu0 0.0
      %440 = vmatprep.subr.mxu0 0.0
      %441 = vmatpush1.msra.mxu0 0.0
      %442 = vmatprep.subr.mxu0 0.0
      %443 = vmatpush1.msra.mxu0 0.0
      %444 = vmatprep.subr.mxu0 0.0
      %445 = vmatpush1.msra.mxu0 0.0
      %446 = vmatprep.subr.mxu0 0.0
      %447 = vmatpush1.msra.mxu0 0.0
      %448 = vmatprep.subr.mxu0 0.0
      %449 = vmatpush1.msra.mxu0 0.0
      %450 = vmatprep.subr.mxu0 0.0
      %451 = vmatpush1.msra.mxu0 0.0
      %452 = vmatprep.subr.mxu0 0.0
      %453 = vmatpush1.msra.mxu0 0.0
      %454 = vmatprep.subr.mxu0 0.0
      %455 = vmatpush1.msra.mxu0 0.0
      %456 = vmatprep.subr.mxu0 0.0
      %457 = vmatpush1.msra.mxu0 0.0
      %458 = vmatprep.subr.mxu0 0.0
      %459 = vmatpush1.msra.mxu0 0.0
      %460 = vmatprep.subr.mxu0 0.0
      %461 = vmatpush1.msra.mxu0 0.0
      %462 = vmatprep.subr.mxu0 0.0
      %463 = vmatpush1.msra.mxu0 0.0
      %464 = vmatprep.subr.mxu0 0.0
      %465 = vmatpush1.msra.mxu0 0.0
      %466 = vmatprep.subr.mxu0 0.0
      %467 = vmatpush1.msra.mxu0 0.0
      %468 = vmatprep.subr.mxu0 0.0
      %469 = vmatpush1.msra.mxu0 0.0
      %470 = vmatprep.subr.mxu0 0.0
      %471 = vmatpush1.msra.mxu0 0.0
      %472 = vmatprep.subr.mxu0 0.0
      %473 = vmatpush1.msra.mxu0 0.0
      %474 = vmatprep.subr.mxu0 0.0
      %475 = vmatpush1.msra.mxu0 0.0
      %476 = vmatprep.subr.mxu0 0.0
      %477 = vmatpush1.msra.mxu0 0.0
      %478 = vmatprep.mubr.f32.mxu0 0.0
      %479 = vmatmul.mubr.f32.gmra.mrb[0].mxu0 %v407
      %v480 = vpop.f32.mrb[0].mxu0
      %v481 = vadd.f32 0.0, %v480
      %v482 = vpop.f32.mrb[0].mxu0
      %v483 = vadd.f32 0.0, %v482
      %484 = vdwg.mxu0
      %v486 = vcombine.high %v388, %v388
      %v488 = vsel %vm405, %v389, 0
      %v490 = vsel %vm409, %v388, 0
      %v492 = vsel %vm409, %v486, 0
      %494 = vmatprep.subr.mxu0 %v492
      %495 = vmatpush1.msra.mxu0 %v490
      %496 = vmatprep.subr.mxu0 0.0
      %497 = vmatpush1.msra.mxu0 0.0
      %498 = vmatprep.subr.mxu0 0.0
      %499 = vmatpush1.msra.mxu0 0.0
      %500 = vmatprep.subr.mxu0 0.0
      %501 = vmatpush1.msra.mxu0 0.0
      %502 = vmatprep.subr.mxu0 0.0
      %503 = vmatpush1.msra.mxu0 0.0
      %504 = vmatprep.subr.mxu0 0.0
      %505 = vmatpush1.msra.mxu0 0.0
      %506 = vmatprep.subr.mxu0 0.0
      %507 = vmatpush1.msra.mxu0 0.0
      %508 = vmatprep.subr.mxu0 0.0
      %509 = vmatpush1.msra.mxu0 0.0
      %510 = vmatprep.subr.mxu0 0.0
      %511 = vmatpush1.msra.mxu0 0.0
      %512 = vmatprep.subr.mxu0 0.0
      %513 = vmatpush1.msra.mxu0 0.0
      %514 = vmatprep.subr.mxu0 0.0
      %515 = vmatpush1.msra.mxu0 0.0
      %516 = vmatprep.subr.mxu0 0.0
      %517 = vmatpush1.msra.mxu0 0.0
      %518 = vmatprep.subr.mxu0 0.0
      %519 = vmatpush1.msra.mxu0 0.0
      %520 = vmatprep.subr.mxu0 0.0
      %521 = vmatpush1.msra.mxu0 0.0
      %522 = vmatprep.subr.mxu0 0.0
      %523 = vmatpush1.msra.mxu0 0.0
      %524 = vmatprep.subr.mxu0 0.0
      %525 = vmatpush1.msra.mxu0 0.0
      %526 = vmatprep.subr.mxu0 0.0
      %527 = vmatpush1.msra.mxu0 0.0
      %528 = vmatprep.subr.mxu0 0.0
      %529 = vmatpush1.msra.mxu0 0.0
      %530 = vmatprep.subr.mxu0 0.0
      %531 = vmatpush1.msra.mxu0 0.0
      %532 = vmatprep.subr.mxu0 0.0
      %533 = vmatpush1.msra.mxu0 0.0
      %534 = vmatprep.subr.mxu0 0.0
      %535 = vmatpush1.msra.mxu0 0.0
      %536 = vmatprep.subr.mxu0 0.0
      %537 = vmatpush1.msra.mxu0 0.0
      %538 = vmatprep.subr.mxu0 0.0
      %539 = vmatpush1.msra.mxu0 0.0
      %540 = vmatprep.subr.mxu0 0.0
      %541 = vmatpush1.msra.mxu0 0.0
      %542 = vmatprep.subr.mxu0 0.0
      %543 = vmatpush1.msra.mxu0 0.0
      %544 = vmatprep.subr.mxu0 0.0
      %545 = vmatpush1.msra.mxu0 0.0
      %546 = vmatprep.subr.mxu0 0.0
      %547 = vmatpush1.msra.mxu0 0.0
      %548 = vmatprep.subr.mxu0 0.0
      %549 = vmatpush1.msra.mxu0 0.0
      %550 = vmatprep.subr.mxu0 0.0
      %551 = vmatpush1.msra.mxu0 0.0
      %552 = vmatprep.subr.mxu0 0.0
      %553 = vmatpush1.msra.mxu0 0.0
      %554 = vmatprep.subr.mxu0 0.0
      %555 = vmatpush1.msra.mxu0 0.0
      %556 = vmatprep.subr.mxu0 0.0
      %557 = vmatpush1.msra.mxu0 0.0
      %558 = vmatprep.mubr.f32.mxu0 0.0
      %559 = vmatmul.mubr.f32.gmra.mrb[0].mxu0 %v488
      %v560 = vpop.f32.mrb[0].mxu0
      %v561 = vadd.f32 %v481, %v560
      %v562 = vpop.f32.mrb[0].mxu0
      %v563 = vadd.f32 %v483, %v562
      %564 = vdwg.mxu0
      %v565 = vld [vmem:[%s355] sm:$0xff]
      %v566 = vld [vmem:[%s355 + $0x8] sm:$0xf]
      %v568 = vlaneseq
      %v569 = vshrl.u32 %v568, 7
      %v570 = vsub.s32 0, %v569
      %v571 = vrot.slane %v375, %v570
      %v572 = vlaneseq
      %v573 = vshrl.u32 %v572, 7
      %v574 = vsub.s32 1, %v573
      %v575 = vrot.slane %v375, %v574
      %v576 = vcombine.low %v571, %v575
      %577 = vrot.lane.b32.xlu0 %v576, 2
      %v578 = vpop.permute.xlu0 %577
      %v579 = vrot.slane %v578, 4
      %vm580 = vcmask 15360
      %v581 = vsel %vm580, %v579, %v578
      %v584 = vmul.f32 %v565, %v581
      %v585 = vmul.f32 %v566, %v579
      %s586 = scalar_lea.vmem %s2, 8
      %v587 = vld [vmem:[%s586] sm:$0xf]
      %v590 = vcombine.high %v584, %v584
      %591 = vrot.lane.b32.xlu0 %v584, 126
      %v592 = vpop.permute.xlu0 %591
      %593 = vrot.lane.b32.xlu0 %v590, 126
      %v594 = vpop.permute.xlu0 %593
      %595 = vrot.lane.b32.xlu0 %v585, 126
      %v596 = vpop.permute.xlu0 %595
      %vm597 = vcmask 1031168
      %v598 = vsel %vm597, %v592, %v594
      %v599 = vsel %vm597, %v594, %v596
      %v601 = vsel %vm405, %v587, 0
      %v603 = vsel %vm409, %v598, 0
      %v605 = vsel %vm409, %v599, 0
      %607 = vmatprep.subr.mxu0 %v605
      %608 = vmatpush1.msra.mxu0 %v603
      %609 = vmatprep.subr.mxu0 0.0
      %610 = vmatpush1.msra.mxu0 0.0
      %611 = vmatprep.subr.mxu0 0.0
      %612 = vmatpush1.msra.mxu0 0.0
      %613 = vmatprep.subr.mxu0 0.0
      %614 = vmatpush1.msra.mxu0 0.0
      %615 = vmatprep.subr.mxu0 0.0
      %616 = vmatpush1.msra.mxu0 0.0
      %617 = vmatprep.subr.mxu0 0.0
      %618 = vmatpush1.msra.mxu0 0.0
      %619 = vmatprep.subr.mxu0 0.0
      %620 = vmatpush1.msra.mxu0 0.0
      %621 = vmatprep.subr.mxu0 0.0
      %622 = vmatpush1.msra.mxu0 0.0
      %623 = vmatprep.subr.mxu0 0.0
      %624 = vmatpush1.msra.mxu0 0.0
      %625 = vmatprep.subr.mxu0 0.0
      %626 = vmatpush1.msra.mxu0 0.0
      %627 = vmatprep.subr.mxu0 0.0
      %628 = vmatpush1.msra.mxu0 0.0
      %629 = vmatprep.subr.mxu0 0.0
      %630 = vmatpush1.msra.mxu0 0.0
      %631 = vmatprep.subr.mxu0 0.0
      %632 = vmatpush1.msra.mxu0 0.0
      %633 = vmatprep.subr.mxu0 0.0
      %634 = vmatpush1.msra.mxu0 0.0
      %635 = vmatprep.subr.mxu0 0.0
      %636 = vmatpush1.msra.mxu0 0.0
      %637 = vmatprep.subr.mxu0 0.0
      %638 = vmatpush1.msra.mxu0 0.0
      %639 = vmatprep.subr.mxu0 0.0
      %640 = vmatpush1.msra.mxu0 0.0
      %641 = vmatprep.subr.mxu0 0.0
      %642 = vmatpush1.msra.mxu0 0.0
      %643 = vmatprep.subr.mxu0 0.0
      %644 = vmatpush1.msra.mxu0 0.0
      %645 = vmatprep.subr.mxu0 0.0
      %646 = vmatpush1.msra.mxu0 0.0
      %647 = vmatprep.subr.mxu0 0.0
      %648 = vmatpush1.msra.mxu0 0.0
      %649 = vmatprep.subr.mxu0 0.0
      %650 = vmatpush1.msra.mxu0 0.0
      %651 = vmatprep.subr.mxu0 0.0
      %652 = vmatpush1.msra.mxu0 0.0
      %653 = vmatprep.subr.mxu0 0.0
      %654 = vmatpush1.msra.mxu0 0.0
      %655 = vmatprep.subr.mxu0 0.0
      %656 = vmatpush1.msra.mxu0 0.0
      %657 = vmatprep.subr.mxu0 0.0
      %658 = vmatpush1.msra.mxu0 0.0
      %659 = vmatprep.subr.mxu0 0.0
      %660 = vmatpush1.msra.mxu0 0.0
      %661 = vmatprep.subr.mxu0 0.0
      %662 = vmatpush1.msra.mxu0 0.0
      %663 = vmatprep.subr.mxu0 0.0
      %664 = vmatpush1.msra.mxu0 0.0
      %665 = vmatprep.subr.mxu0 0.0
      %666 = vmatpush1.msra.mxu0 0.0
      %667 = vmatprep.subr.mxu0 0.0
      %668 = vmatpush1.msra.mxu0 0.0
      %669 = vmatprep.subr.mxu0 0.0
      %670 = vmatpush1.msra.mxu0 0.0
      %671 = vmatprep.mubr.f32.mxu0 0.0
      %672 = vmatmul.mubr.f32.gmra.mrb[0].mxu0 %v601
      %v673 = vpop.f32.mrb[0].mxu0
      %v674 = vadd.f32 0.0, %v673
      %v675 = vpop.f32.mrb[0].mxu0
      %v676 = vadd.f32 0.0, %v675
      %677 = vdwg.mxu0
      %v678 = vadd.f32 %v561, %v674
      %v679 = vadd.f32 %v563, %v676
      %v680 = vld [vmem:[%s355] sm:$0xff]
      %v681 = vld [vmem:[%s355 + $0x8] sm:$0xf]
      %682 = vrot.lane.b32.xlu0 %v386, 16
      %v683 = vpop.permute.xlu0 %682
      %v684 = vrot.slane %v683, 4
      %vm685 = vcmask 130048
      %v686 = vsel %vm685, %v684, %v683
      %v689 = vmul.f32 %v680, %v686
      %v690 = vmul.f32 %v681, %v684
      %s691 = scalar_lea.vmem %s2, 12
      %v692 = vld [vmem:[%s691] sm:$0xf]
      %v695 = vcombine.high %v689, %v689
      %696 = vrot.lane.b32.xlu0 %v689, 112
      %v697 = vpop.permute.xlu0 %696
      %698 = vrot.lane.b32.xlu0 %v695, 112
      %v699 = vpop.permute.xlu0 %698
      %700 = vrot.lane.b32.xlu0 %v690, 112
      %v701 = vpop.permute.xlu0 %700
      %vm702 = vcmask 916480
      %v703 = vsel %vm702, %v697, %v699
      %v704 = vsel %vm702, %v699, %v701
      %v706 = vsel %vm405, %v692, 0
      %v708 = vsel %vm409, %v703, 0
      %v710 = vsel %vm409, %v704, 0
      %712 = vmatprep.subr.mxu0 %v710
      %713 = vmatpush1.msra.mxu0 %v708
      %714 = vmatprep.subr.mxu0 0.0
      %715 = vmatpush1.msra.mxu0 0.0
      %716 = vmatprep.subr.mxu0 0.0
      %717 = vmatpush1.msra.mxu0 0.0
      %718 = vmatprep.subr.mxu0 0.0
      %719 = vmatpush1.msra.mxu0 0.0
      %720 = vmatprep.subr.mxu0 0.0
      %721 = vmatpush1.msra.mxu0 0.0
      %722 = vmatprep.subr.mxu0 0.0
      %723 = vmatpush1.msra.mxu0 0.0
      %724 = vmatprep.subr.mxu0 0.0
      %725 = vmatpush1.msra.mxu0 0.0
      %726 = vmatprep.subr.mxu0 0.0
      %727 = vmatpush1.msra.mxu0 0.0
      %728 = vmatprep.subr.mxu0 0.0
      %729 = vmatpush1.msra.mxu0 0.0
      %730 = vmatprep.subr.mxu0 0.0
      %731 = vmatpush1.msra.mxu0 0.0
      %732 = vmatprep.subr.mxu0 0.0
      %733 = vmatpush1.msra.mxu0 0.0
      %734 = vmatprep.subr.mxu0 0.0
      %735 = vmatpush1.msra.mxu0 0.0
      %736 = vmatprep.subr.mxu0 0.0
      %737 = vmatpush1.msra.mxu0 0.0
      %738 = vmatprep.subr.mxu0 0.0
      %739 = vmatpush1.msra.mxu0 0.0
      %740 = vmatprep.subr.mxu0 0.0
      %741 = vmatpush1.msra.mxu0 0.0
      %742 = vmatprep.subr.mxu0 0.0
      %743 = vmatpush1.msra.mxu0 0.0
      %744 = vmatprep.subr.mxu0 0.0
      %745 = vmatpush1.msra.mxu0 0.0
      %746 = vmatprep.subr.mxu0 0.0
      %747 = vmatpush1.msra.mxu0 0.0
      %748 = vmatprep.subr.mxu0 0.0
      %749 = vmatpush1.msra.mxu0 0.0
      %750 = vmatprep.subr.mxu0 0.0
      %751 = vmatpush1.msra.mxu0 0.0
      %752 = vmatprep.subr.mxu0 0.0
      %753 = vmatpush1.msra.mxu0 0.0
      %754 = vmatprep.subr.mxu0 0.0
      %755 = vmatpush1.msra.mxu0 0.0
      %756 = vmatprep.subr.mxu0 0.0
      %757 = vmatpush1.msra.mxu0 0.0
      %758 = vmatprep.subr.mxu0 0.0
      %759 = vmatpush1.msra.mxu0 0.0
      %760 = vmatprep.subr.mxu0 0.0
      %761 = vmatpush1.msra.mxu0 0.0
      %762 = vmatprep.subr.mxu0 0.0
      %763 = vmatpush1.msra.mxu0 0.0
      %764 = vmatprep.subr.mxu0 0.0
      %765 = vmatpush1.msra.mxu0 0.0
      %766 = vmatprep.subr.mxu0 0.0
      %767 = vmatpush1.msra.mxu0 0.0
      %768 = vmatprep.subr.mxu0 0.0
      %769 = vmatpush1.msra.mxu0 0.0
      %770 = vmatprep.subr.mxu0 0.0
      %771 = vmatpush1.msra.mxu0 0.0
      %772 = vmatprep.subr.mxu0 0.0
      %773 = vmatpush1.msra.mxu0 0.0
      %774 = vmatprep.subr.mxu0 0.0
      %775 = vmatpush1.msra.mxu0 0.0
      %776 = vmatprep.mubr.f32.mxu0 0.0
      %777 = vmatmul.mubr.f32.gmra.mrb[0].mxu0 %v706
      %v778 = vpop.f32.mrb[0].mxu0
      %v779 = vadd.f32 0.0, %v778
      %v780 = vpop.f32.mrb[0].mxu0
      %v781 = vadd.f32 0.0, %v780
      %782 = vdwg.mxu0
      %v783 = vadd.f32 %v678, %v779
      %v784 = vadd.f32 %v679, %v781
      %v785 = vld [vmem:[%s355] sm:$0xff]
      %v786 = vld [vmem:[%s355 + $0x8] sm:$0xf]
      %s787 = scalar_lea.vmem %s2, 16
      %v788 = vld [vmem:[%s787] sm:$0xf]
      %v791 = vcombine.high %v785, %v785
      %792 = vrot.lane.b32.xlu0 %v785, 111
      %v793 = vpop.permute.xlu0 %792
      %794 = vrot.lane.b32.xlu0 %v791, 111
      %v795 = vpop.permute.xlu0 %794
      %796 = vrot.lane.b32.xlu0 %v786, 111
      %v797 = vpop.permute.xlu0 %796
      %vm798 = vcmask 908288
      %v799 = vsel %vm798, %v793, %v795
      %v800 = vsel %vm798, %v795, %v797
      %v802 = vsel %vm405, %v788, 0
      %v804 = vsel %vm409, %v799, 0
      %v806 = vsel %vm409, %v800, 0
      %808 = vmatprep.subr.mxu0 %v806
      %809 = vmatpush1.msra.mxu0 %v804
      %810 = vmatprep.subr.mxu0 0.0
      %811 = vmatpush1.msra.mxu0 0.0
      %812 = vmatprep.subr.mxu0 0.0
      %813 = vmatpush1.msra.mxu0 0.0
      %814 = vmatprep.subr.mxu0 0.0
      %815 = vmatpush1.msra.mxu0 0.0
      %816 = vmatprep.subr.mxu0 0.0
      %817 = vmatpush1.msra.mxu0 0.0
      %818 = vmatprep.subr.mxu0 0.0
      %819 = vmatpush1.msra.mxu0 0.0
      %820 = vmatprep.subr.mxu0 0.0
      %821 = vmatpush1.msra.mxu0 0.0
      %822 = vmatprep.subr.mxu0 0.0
      %823 = vmatpush1.msra.mxu0 0.0
      %824 = vmatprep.subr.mxu0 0.0
      %825 = vmatpush1.msra.mxu0 0.0
      %826 = vmatprep.subr.mxu0 0.0
      %827 = vmatpush1.msra.mxu0 0.0
      %828 = vmatprep.subr.mxu0 0.0
      %829 = vmatpush1.msra.mxu0 0.0
      %830 = vmatprep.subr.mxu0 0.0
      %831 = vmatpush1.msra.mxu0 0.0
      %832 = vmatprep.subr.mxu0 0.0
      %833 = vmatpush1.msra.mxu0 0.0
      %834 = vmatprep.subr.mxu0 0.0
      %835 = vmatpush1.msra.mxu0 0.0
      %836 = vmatprep.subr.mxu0 0.0
      %837 = vmatpush1.msra.mxu0 0.0
      %838 = vmatprep.subr.mxu0 0.0
      %839 = vmatpush1.msra.mxu0 0.0
      %840 = vmatprep.subr.mxu0 0.0
      %841 = vmatpush1.msra.mxu0 0.0
      %842 = vmatprep.subr.mxu0 0.0
      %843 = vmatpush1.msra.mxu0 0.0
      %844 = vmatprep.subr.mxu0 0.0
      %845 = vmatpush1.msra.mxu0 0.0
      %846 = vmatprep.subr.mxu0 0.0
      %847 = vmatpush1.msra.mxu0 0.0
      %848 = vmatprep.subr.mxu0 0.0
      %849 = vmatpush1.msra.mxu0 0.0
      %850 = vmatprep.subr.mxu0 0.0
      %851 = vmatpush1.msra.mxu0 0.0
      %852 = vmatprep.subr.mxu0 0.0
      %853 = vmatpush1.msra.mxu0 0.0
      %854 = vmatprep.subr.mxu0 0.0
      %855 = vmatpush1.msra.mxu0 0.0
      %856 = vmatprep.subr.mxu0 0.0
      %857 = vmatpush1.msra.mxu0 0.0
      %858 = vmatprep.subr.mxu0 0.0
      %859 = vmatpush1.msra.mxu0 0.0
      %860 = vmatprep.subr.mxu0 0.0
      %861 = vmatpush1.msra.mxu0 0.0
      %862 = vmatprep.subr.mxu0 0.0
      %863 = vmatpush1.msra.mxu0 0.0
      %864 = vmatprep.subr.mxu0 0.0
      %865 = vmatpush1.msra.mxu0 0.0
      %866 = vmatprep.subr.mxu0 0.0
      %867 = vmatpush1.msra.mxu0 0.0
      %868 = vmatprep.subr.mxu0 0.0
      %869 = vmatpush1.msra.mxu0 0.0
      %870 = vmatprep.subr.mxu0 0.0
      %871 = vmatpush1.msra.mxu0 0.0
      %872 = vmatprep.mubr.f32.mxu0 0.0
      %873 = vmatmul.mubr.f32.gmra.mrb[0].mxu0 %v802
      %v874 = vpop.f32.mrb[0].mxu0
      %v875 = vadd.f32 0.0, %v874
      %v876 = vpop.f32.mrb[0].mxu0
      %v877 = vadd.f32 0.0, %v876
      %878 = vdwg.mxu0
      %v879 = vadd.f32 %v783, %v875
      %v880 = vadd.f32 %v784, %v877
      %v881 = vld [vmem:[%s355] sm:$0xff]
      %v882 = vld [vmem:[%s355 + $0x8] sm:$0xf]
      %883 = vrot.lane.b32.xlu0 %v576, 18
      %v884 = vpop.permute.xlu0 %883
      %v885 = vrot.slane %v884, 4
      %vm886 = vcmask 146432
      %v887 = vsel %vm886, %v885, %v884
      %v890 = vmul.f32 %v881, %v887
      %v891 = vmul.f32 %v882, %v885
      %s892 = scalar_lea.vmem %s2, 20
      %v893 = vld [vmem:[%s892] sm:$0xf]
      %v896 = vcombine.high %v890, %v890
      %897 = vrot.lane.b32.xlu0 %v890, 110
      %v898 = vpop.permute.xlu0 %897
      %899 = vrot.lane.b32.xlu0 %v896, 110
      %v900 = vpop.permute.xlu0 %899
      %901 = vrot.lane.b32.xlu0 %v891, 110
      %v902 = vpop.permute.xlu0 %901
      %vm903 = vcmask 900096
      %v904 = vsel %vm903, %v898, %v900
      %v905 = vsel %vm903, %v900, %v902
      %v907 = vsel %vm405, %v893, 0
      %v909 = vsel %vm409, %v904, 0
      %v911 = vsel %vm409, %v905, 0
      %913 = vmatprep.subr.mxu0 %v911
      %914 = vmatpush1.msra.mxu0 %v909
      %915 = vmatprep.subr.mxu0 0.0
      %916 = vmatpush1.msra.mxu0 0.0
      %917 = vmatprep.subr.mxu0 0.0
      %918 = vmatpush1.msra.mxu0 0.0
      %919 = vmatprep.subr.mxu0 0.0
      %920 = vmatpush1.msra.mxu0 0.0
      %921 = vmatprep.subr.mxu0 0.0
      %922 = vmatpush1.msra.mxu0 0.0
      %923 = vmatprep.subr.mxu0 0.0
      %924 = vmatpush1.msra.mxu0 0.0
      %925 = vmatprep.subr.mxu0 0.0
      %926 = vmatpush1.msra.mxu0 0.0
      %927 = vmatprep.subr.mxu0 0.0
      %928 = vmatpush1.msra.mxu0 0.0
      %929 = vmatprep.subr.mxu0 0.0
      %930 = vmatpush1.msra.mxu0 0.0
      %931 = vmatprep.subr.mxu0 0.0
      %932 = vmatpush1.msra.mxu0 0.0
      %933 = vmatprep.subr.mxu0 0.0
      %934 = vmatpush1.msra.mxu0 0.0
      %935 = vmatprep.subr.mxu0 0.0
      %936 = vmatpush1.msra.mxu0 0.0
      %937 = vmatprep.subr.mxu0 0.0
      %938 = vmatpush1.msra.mxu0 0.0
      %939 = vmatprep.subr.mxu0 0.0
      %940 = vmatpush1.msra.mxu0 0.0
      %941 = vmatprep.subr.mxu0 0.0
      %942 = vmatpush1.msra.mxu0 0.0
      %943 = vmatprep.subr.mxu0 0.0
      %944 = vmatpush1.msra.mxu0 0.0
      %945 = vmatprep.subr.mxu0 0.0
      %946 = vmatpush1.msra.mxu0 0.0
      %947 = vmatprep.subr.mxu0 0.0
      %948 = vmatpush1.msra.mxu0 0.0
      %949 = vmatprep.subr.mxu0 0.0
      %950 = vmatpush1.msra.mxu0 0.0
      %951 = vmatprep.subr.mxu0 0.0
      %952 = vmatpush1.msra.mxu0 0.0
      %953 = vmatprep.subr.mxu0 0.0
      %954 = vmatpush1.msra.mxu0 0.0
      %955 = vmatprep.subr.mxu0 0.0
      %956 = vmatpush1.msra.mxu0 0.0
      %957 = vmatprep.subr.mxu0 0.0
      %958 = vmatpush1.msra.mxu0 0.0
      %959 = vmatprep.subr.mxu0 0.0
      %960 = vmatpush1.msra.mxu0 0.0
      %961 = vmatprep.subr.mxu0 0.0
      %962 = vmatpush1.msra.mxu0 0.0
      %963 = vmatprep.subr.mxu0 0.0
      %964 = vmatpush1.msra.mxu0 0.0
      %965 = vmatprep.subr.mxu0 0.0
      %966 = vmatpush1.msra.mxu0 0.0
      %967 = vmatprep.subr.mxu0 0.0
      %968 = vmatpush1.msra.mxu0 0.0
      %969 = vmatprep.subr.mxu0 0.0
      %970 = vmatpush1.msra.mxu0 0.0
      %971 = vmatprep.subr.mxu0 0.0
      %972 = vmatpush1.msra.mxu0 0.0
      %973 = vmatprep.subr.mxu0 0.0
      %974 = vmatpush1.msra.mxu0 0.0
      %975 = vmatprep.subr.mxu0 0.0
      %976 = vmatpush1.msra.mxu0 0.0
      %977 = vmatprep.mubr.f32.mxu0 0.0
      %978 = vmatmul.mubr.f32.gmra.mrb[0].mxu0 %v907
      %v979 = vpop.f32.mrb[0].mxu0
      %v980 = vadd.f32 0.0, %v979
      %v981 = vpop.f32.mrb[0].mxu0
      %v982 = vadd.f32 0.0, %v981
      %983 = vdwg.mxu0
      %v984 = vadd.f32 %v879, %v980
      %v985 = vadd.f32 %v880, %v982
      %v986 = vld [vmem:[%s355] sm:$0xff]
      %v987 = vld [vmem:[%s355 + $0x8] sm:$0xf]
      %988 = vrot.lane.b32.xlu0 %v386, 32
      %v989 = vpop.permute.xlu0 %988
      %v990 = vrot.slane %v989, 4
      %vm991 = vcmask 261120
      %v992 = vsel %vm991, %v990, %v989
      %v995 = vmul.f32 %v986, %v992
      %v996 = vmul.f32 %v987, %v990
      %s997 = scalar_lea.vmem %s2, 24
      %v998 = vld [vmem:[%s997] sm:$0xf]
      %v1001 = vcombine.high %v995, %v995
      %1002 = vrot.lane.b32.xlu0 %v995, 96
      %v1003 = vpop.permute.xlu0 %1002
      %1004 = vrot.lane.b32.xlu0 %v1001, 96
      %v1005 = vpop.permute.xlu0 %1004
      %1006 = vrot.lane.b32.xlu0 %v996, 96
      %v1007 = vpop.permute.xlu0 %1006
      %vm1008 = vcmask 785408
      %v1009 = vsel %vm1008, %v1003, %v1005
      %v1010 = vsel %vm1008, %v1005, %v1007
      %v1012 = vsel %vm405, %v998, 0
      %v1014 = vsel %vm409, %v1009, 0
      %v1016 = vsel %vm409, %v1010, 0
      %1018 = vmatprep.subr.mxu0 %v1016
      %1019 = vmatpush1.msra.mxu0 %v1014
      %1020 = vmatprep.subr.mxu0 0.0
      %1021 = vmatpush1.msra.mxu0 0.0
      %1022 = vmatprep.subr.mxu0 0.0
      %1023 = vmatpush1.msra.mxu0 0.0
      %1024 = vmatprep.subr.mxu0 0.0
      %1025 = vmatpush1.msra.mxu0 0.0
      %1026 = vmatprep.subr.mxu0 0.0
      %1027 = vmatpush1.msra.mxu0 0.0
      %1028 = vmatprep.subr.mxu0 0.0
      %1029 = vmatpush1.msra.mxu0 0.0
      %1030 = vmatprep.subr.mxu0 0.0
      %1031 = vmatpush1.msra.mxu0 0.0
      %1032 = vmatprep.subr.mxu0 0.0
      %1033 = vmatpush1.msra.mxu0 0.0
      %1034 = vmatprep.subr.mxu0 0.0
      %1035 = vmatpush1.msra.mxu0 0.0
      %1036 = vmatprep.subr.mxu0 0.0
      %1037 = vmatpush1.msra.mxu0 0.0
      %1038 = vmatprep.subr.mxu0 0.0
      %1039 = vmatpush1.msra.mxu0 0.0
      %1040 = vmatprep.subr.mxu0 0.0
      %1041 = vmatpush1.msra.mxu0 0.0
      %1042 = vmatprep.subr.mxu0 0.0
      %1043 = vmatpush1.msra.mxu0 0.0
      %1044 = vmatprep.subr.mxu0 0.0
      %1045 = vmatpush1.msra.mxu0 0.0
      %1046 = vmatprep.subr.mxu0 0.0
      %1047 = vmatpush1.msra.mxu0 0.0
      %1048 = vmatprep.subr.mxu0 0.0
      %1049 = vmatpush1.msra.mxu0 0.0
      %1050 = vmatprep.subr.mxu0 0.0
      %1051 = vmatpush1.msra.mxu0 0.0
      %1052 = vmatprep.subr.mxu0 0.0
      %1053 = vmatpush1.msra.mxu0 0.0
      %1054 = vmatprep.subr.mxu0 0.0
      %1055 = vmatpush1.msra.mxu0 0.0
      %1056 = vmatprep.subr.mxu0 0.0
      %1057 = vmatpush1.msra.mxu0 0.0
      %1058 = vmatprep.subr.mxu0 0.0
      %1059 = vmatpush1.msra.mxu0 0.0
      %1060 = vmatprep.subr.mxu0 0.0
      %1061 = vmatpush1.msra.mxu0 0.0
      %1062 = vmatprep.subr.mxu0 0.0
      %1063 = vmatpush1.msra.mxu0 0.0
      %1064 = vmatprep.subr.mxu0 0.0
      %1065 = vmatpush1.msra.mxu0 0.0
      %1066 = vmatprep.subr.mxu0 0.0
      %1067 = vmatpush1.msra.mxu0 0.0
      %1068 = vmatprep.subr.mxu0 0.0
      %1069 = vmatpush1.msra.mxu0 0.0
      %1070 = vmatprep.subr.mxu0 0.0
      %1071 = vmatpush1.msra.mxu0 0.0
      %1072 = vmatprep.subr.mxu0 0.0
      %1073 = vmatpush1.msra.mxu0 0.0
      %1074 = vmatprep.subr.mxu0 0.0
      %1075 = vmatpush1.msra.mxu0 0.0
      %1076 = vmatprep.subr.mxu0 0.0
      %1077 = vmatpush1.msra.mxu0 0.0
      %1078 = vmatprep.subr.mxu0 0.0
      %1079 = vmatpush1.msra.mxu0 0.0
      %1080 = vmatprep.subr.mxu0 0.0
      %1081 = vmatpush1.msra.mxu0 0.0
      %1082 = vmatprep.mubr.f32.mxu0 0.0
      %1083 = vmatmul.mubr.f32.gmra.mrb[0].mxu0 %v1012
      %v1084 = vpop.f32.mrb[0].mxu0
      %v1085 = vadd.f32 0.0, %v1084
      %v1086 = vpop.f32.mrb[0].mxu0
      %v1087 = vadd.f32 0.0, %v1086
      %1088 = vdwg.mxu0
      %v1089 = vadd.f32 %v984, %v1085
      %v1090 = vadd.f32 %v985, %v1087
      %v1091 = vld [vmem:[%s355] sm:$0xff]
      %v1092 = vld [vmem:[%s355 + $0x8] sm:$0xf]
      %s1093 = scalar_lea.vmem %s2, 28
      %v1094 = vld [vmem:[%s1093] sm:$0xf]
      %v1097 = vcombine.high %v1091, %v1091
      %1098 = vrot.lane.b32.xlu0 %v1091, 95
      %v1099 = vpop.permute.xlu0 %1098
      %1100 = vrot.lane.b32.xlu0 %v1097, 95
      %v1101 = vpop.permute.xlu0 %1100
      %1102 = vrot.lane.b32.xlu0 %v1092, 95
      %v1103 = vpop.permute.xlu0 %1102
      %vm1104 = vcmask 777216
      %v1105 = vsel %vm1104, %v1099, %v1101
      %v1106 = vsel %vm1104, %v1101, %v1103
      %v1108 = vsel %vm405, %v1094, 0
      %v1110 = vsel %vm409, %v1105, 0
      %v1112 = vsel %vm409, %v1106, 0
      %1114 = vmatprep.subr.mxu0 %v1112
      %1115 = vmatpush1.msra.mxu0 %v1110
      %1116 = vmatprep.subr.mxu0 0.0
      %1117 = vmatpush1.msra.mxu0 0.0
      %1118 = vmatprep.subr.mxu0 0.0
      %1119 = vmatpush1.msra.mxu0 0.0
      %1120 = vmatprep.subr.mxu0 0.0
      %1121 = vmatpush1.msra.mxu0 0.0
      %1122 = vmatprep.subr.mxu0 0.0
      %1123 = vmatpush1.msra.mxu0 0.0
      %1124 = vmatprep.subr.mxu0 0.0
      %1125 = vmatpush1.msra.mxu0 0.0
      %1126 = vmatprep.subr.mxu0 0.0
      %1127 = vmatpush1.msra.mxu0 0.0
      %1128 = vmatprep.subr.mxu0 0.0
      %1129 = vmatpush1.msra.mxu0 0.0
      %1130 = vmatprep.subr.mxu0 0.0
      %1131 = vmatpush1.msra.mxu0 0.0
      %1132 = vmatprep.subr.mxu0 0.0
      %1133 = vmatpush1.msra.mxu0 0.0
      %1134 = vmatprep.subr.mxu0 0.0
      %1135 = vmatpush1.msra.mxu0 0.0
      %1136 = vmatprep.subr.mxu0 0.0
      %1137 = vmatpush1.msra.mxu0 0.0
      %1138 = vmatprep.subr.mxu0 0.0
      %1139 = vmatpush1.msra.mxu0 0.0
      %1140 = vmatprep.subr.mxu0 0.0
      %1141 = vmatpush1.msra.mxu0 0.0
      %1142 = vmatprep.subr.mxu0 0.0
      %1143 = vmatpush1.msra.mxu0 0.0
      %1144 = vmatprep.subr.mxu0 0.0
      %1145 = vmatpush1.msra.mxu0 0.0
      %1146 = vmatprep.subr.mxu0 0.0
      %1147 = vmatpush1.msra.mxu0 0.0
      %1148 = vmatprep.subr.mxu0 0.0
      %1149 = vmatpush1.msra.mxu0 0.0
      %1150 = vmatprep.subr.mxu0 0.0
      %1151 = vmatpush1.msra.mxu0 0.0
      %1152 = vmatprep.subr.mxu0 0.0
      %1153 = vmatpush1.msra.mxu0 0.0
      %1154 = vmatprep.subr.mxu0 0.0
      %1155 = vmatpush1.msra.mxu0 0.0
      %1156 = vmatprep.subr.mxu0 0.0
      %1157 = vmatpush1.msra.mxu0 0.0
      %1158 = vmatprep.subr.mxu0 0.0
      %1159 = vmatpush1.msra.mxu0 0.0
      %1160 = vmatprep.subr.mxu0 0.0
      %1161 = vmatpush1.msra.mxu0 0.0
      %1162 = vmatprep.subr.mxu0 0.0
      %1163 = vmatpush1.msra.mxu0 0.0
      %1164 = vmatprep.subr.mxu0 0.0
      %1165 = vmatpush1.msra.mxu0 0.0
      %1166 = vmatprep.subr.mxu0 0.0
      %1167 = vmatpush1.msra.mxu0 0.0
      %1168 = vmatprep.subr.mxu0 0.0
      %1169 = vmatpush1.msra.mxu0 0.0
      %1170 = vmatprep.subr.mxu0 0.0
      %1171 = vmatpush1.msra.mxu0 0.0
      %1172 = vmatprep.subr.mxu0 0.0
      %1173 = vmatpush1.msra.mxu0 0.0
      %1174 = vmatprep.subr.mxu0 0.0
      %1175 = vmatpush1.msra.mxu0 0.0
      %1176 = vmatprep.subr.mxu0 0.0
      %1177 = vmatpush1.msra.mxu0 0.0
      %1178 = vmatprep.mubr.f32.mxu0 0.0
      %1179 = vmatmul.mubr.f32.gmra.mrb[0].mxu0 %v1108
      %v1180 = vpop.f32.mrb[0].mxu0
      %v1181 = vadd.f32 0.0, %v1180
      %v1182 = vpop.f32.mrb[0].mxu0
      %v1183 = vadd.f32 0.0, %v1182
      %1184 = vdwg.mxu0
      %v1185 = vadd.f32 %v1089, %v1181
      %v1186 = vadd.f32 %v1090, %v1183
      %v1187 = vld [vmem:[%s355] sm:$0xff]
      %v1188 = vld [vmem:[%s355 + $0x8] sm:$0xf]
      %1189 = vrot.lane.b32.xlu0 %v576, 34
      %v1190 = vpop.permute.xlu0 %1189
      %v1191 = vrot.slane %v1190, 4
      %vm1192 = vcmask 277504
      %v1193 = vsel %vm1192, %v1191, %v1190
      %v1196 = vmul.f32 %v1187, %v1193
      %v1197 = vmul.f32 %v1188, %v1191
      %s1198 = scalar_lea.vmem %s2, 32
      %v1199 = vld [vmem:[%s1198] sm:$0xf]
      %v1202 = vcombine.high %v1196, %v1196
      %1203 = vrot.lane.b32.xlu0 %v1196, 94
      %v1204 = vpop.permute.xlu0 %1203
      %1205 = vrot.lane.b32.xlu0 %v1202, 94
      %v1206 = vpop.permute.xlu0 %1205
      %1207 = vrot.lane.b32.xlu0 %v1197, 94
      %v1208 = vpop.permute.xlu0 %1207
      %vm1209 = vcmask 769024
      %v1210 = vsel %vm1209, %v1204, %v1206
      %v1211 = vsel %vm1209, %v1206, %v1208
      %v1213 = vsel %vm405, %v1199, 0
      %v1215 = vsel %vm409, %v1210, 0
      %v1217 = vsel %vm409, %v1211, 0
      %1219 = vmatprep.subr.mxu0 %v1217
      %1220 = vmatpush1.msra.mxu0 %v1215
      %1221 = vmatprep.subr.mxu0 0.0
      %1222 = vmatpush1.msra.mxu0 0.0
      %1223 = vmatprep.subr.mxu0 0.0
      %1224 = vmatpush1.msra.mxu0 0.0
      %1225 = vmatprep.subr.mxu0 0.0
      %1226 = vmatpush1.msra.mxu0 0.0
      %1227 = vmatprep.subr.mxu0 0.0
      %1228 = vmatpush1.msra.mxu0 0.0
      %1229 = vmatprep.subr.mxu0 0.0
      %1230 = vmatpush1.msra.mxu0 0.0
      %1231 = vmatprep.subr.mxu0 0.0
      %1232 = vmatpush1.msra.mxu0 0.0
      %1233 = vmatprep.subr.mxu0 0.0
      %1234 = vmatpush1.msra.mxu0 0.0
      %1235 = vmatprep.subr.mxu0 0.0
      %1236 = vmatpush1.msra.mxu0 0.0
      %1237 = vmatprep.subr.mxu0 0.0
      %1238 = vmatpush1.msra.mxu0 0.0
      %1239 = vmatprep.subr.mxu0 0.0
      %1240 = vmatpush1.msra.mxu0 0.0
      %1241 = vmatprep.subr.mxu0 0.0
      %1242 = vmatpush1.msra.mxu0 0.0
      %1243 = vmatprep.subr.mxu0 0.0
      %1244 = vmatpush1.msra.mxu0 0.0
      %1245 = vmatprep.subr.mxu0 0.0
      %1246 = vmatpush1.msra.mxu0 0.0
      %1247 = vmatprep.subr.mxu0 0.0
      %1248 = vmatpush1.msra.mxu0 0.0
      %1249 = vmatprep.subr.mxu0 0.0
      %1250 = vmatpush1.msra.mxu0 0.0
      %1251 = vmatprep.subr.mxu0 0.0
      %1252 = vmatpush1.msra.mxu0 0.0
      %1253 = vmatprep.subr.mxu0 0.0
      %1254 = vmatpush1.msra.mxu0 0.0
      %1255 = vmatprep.subr.mxu0 0.0
      %1256 = vmatpush1.msra.mxu0 0.0
      %1257 = vmatprep.subr.mxu0 0.0
      %1258 = vmatpush1.msra.mxu0 0.0
      %1259 = vmatprep.subr.mxu0 0.0
      %1260 = vmatpush1.msra.mxu0 0.0
      %1261 = vmatprep.subr.mxu0 0.0
      %1262 = vmatpush1.msra.mxu0 0.0
      %1263 = vmatprep.subr.mxu0 0.0
      %1264 = vmatpush1.msra.mxu0 0.0
      %1265 = vmatprep.subr.mxu0 0.0
      %1266 = vmatpush1.msra.mxu0 0.0
      %1267 = vmatprep.subr.mxu0 0.0
      %1268 = vmatpush1.msra.mxu0 0.0
      %1269 = vmatprep.subr.mxu0 0.0
      %1270 = vmatpush1.msra.mxu0 0.0
      %1271 = vmatprep.subr.mxu0 0.0
      %1272 = vmatpush1.msra.mxu0 0.0
      %1273 = vmatprep.subr.mxu0 0.0
      %1274 = vmatpush1.msra.mxu0 0.0
      %1275 = vmatprep.subr.mxu0 0.0
      %1276 = vmatpush1.msra.mxu0 0.0
      %1277 = vmatprep.subr.mxu0 0.0
      %1278 = vmatpush1.msra.mxu0 0.0
      %1279 = vmatprep.subr.mxu0 0.0
      %1280 = vmatpush1.msra.mxu0 0.0
      %1281 = vmatprep.subr.mxu0 0.0
      %1282 = vmatpush1.msra.mxu0 0.0
      %1283 = vmatprep.mubr.f32.mxu0 0.0
      %1284 = vmatmul.mubr.f32.gmra.mrb[0].mxu0 %v1213
      %v1285 = vpop.f32.mrb[0].mxu0
      %v1286 = vadd.f32 0.0, %v1285
      %v1287 = vpop.f32.mrb[0].mxu0
      %v1288 = vadd.f32 0.0, %v1287
      %1289 = vdwg.mxu0
      %v1290 = vadd.f32 %v1185, %v1286
      %v1291 = vadd.f32 %v1186, %v1288
      %v1292 = vld [vmem:[%s360] sm:$0xff]
      %v1293 = vmul.f32 %v1292, %v386
      %v1294 = vld [vmem:[%s3] sm:$0xf]
      %v1296 = vcombine.high %v1293, %v1293
      %v1298 = vsel %vm405, %v1294, 0
      %v1300 = vsel %vm409, %v1293, 0
      %v1302 = vsel %vm409, %v1296, 0
      %1304 = vmatprep.subr.mxu0 %v1302
      %1305 = vmatpush1.msra.mxu0 %v1300
      %1306 = vmatprep.subr.mxu0 0.0
      %1307 = vmatpush1.msra.mxu0 0.0
      %1308 = vmatprep.subr.mxu0 0.0
      %1309 = vmatpush1.msra.mxu0 0.0
      %1310 = vmatprep.subr.mxu0 0.0
      %1311 = vmatpush1.msra.mxu0 0.0
      %1312 = vmatprep.subr.mxu0 0.0
      %1313 = vmatpush1.msra.mxu0 0.0
      %1314 = vmatprep.subr.mxu0 0.0
      %1315 = vmatpush1.msra.mxu0 0.0
      %1316 = vmatprep.subr.mxu0 0.0
      %1317 = vmatpush1.msra.mxu0 0.0
      %1318 = vmatprep.subr.mxu0 0.0
      %1319 = vmatpush1.msra.mxu0 0.0
      %1320 = vmatprep.subr.mxu0 0.0
      %1321 = vmatpush1.msra.mxu0 0.0
      %1322 = vmatprep.subr.mxu0 0.0
      %1323 = vmatpush1.msra.mxu0 0.0
      %1324 = vmatprep.subr.mxu0 0.0
      %1325 = vmatpush1.msra.mxu0 0.0
      %1326 = vmatprep.subr.mxu0 0.0
      %1327 = vmatpush1.msra.mxu0 0.0
      %1328 = vmatprep.subr.mxu0 0.0
      %1329 = vmatpush1.msra.mxu0 0.0
      %1330 = vmatprep.subr.mxu0 0.0
      %1331 = vmatpush1.msra.mxu0 0.0
      %1332 = vmatprep.subr.mxu0 0.0
      %1333 = vmatpush1.msra.mxu0 0.0
      %1334 = vmatprep.subr.mxu0 0.0
      %1335 = vmatpush1.msra.mxu0 0.0
      %1336 = vmatprep.subr.mxu0 0.0
      %1337 = vmatpush1.msra.mxu0 0.0
      %1338 = vmatprep.subr.mxu0 0.0
      %1339 = vmatpush1.msra.mxu0 0.0
      %1340 = vmatprep.subr.mxu0 0.0
      %1341 = vmatpush1.msra.mxu0 0.0
      %1342 = vmatprep.subr.mxu0 0.0
      %1343 = vmatpush1.msra.mxu0 0.0
      %1344 = vmatprep.subr.mxu0 0.0
      %1345 = vmatpush1.msra.mxu0 0.0
      %1346 = vmatprep.subr.mxu0 0.0
      %1347 = vmatpush1.msra.mxu0 0.0
      %1348 = vmatprep.subr.mxu0 0.0
      %1349 = vmatpush1.msra.mxu0 0.0
      %1350 = vmatprep.subr.mxu0 0.0
      %1351 = vmatpush1.msra.mxu0 0.0
      %1352 = vmatprep.subr.mxu0 0.0
      %1353 = vmatpush1.msra.mxu0 0.0
      %1354 = vmatprep.subr.mxu0 0.0
      %1355 = vmatpush1.msra.mxu0 0.0
      %1356 = vmatprep.subr.mxu0 0.0
      %1357 = vmatpush1.msra.mxu0 0.0
      %1358 = vmatprep.subr.mxu0 0.0
      %1359 = vmatpush1.msra.mxu0 0.0
      %1360 = vmatprep.subr.mxu0 0.0
      %1361 = vmatpush1.msra.mxu0 0.0
      %1362 = vmatprep.subr.mxu0 0.0
      %1363 = vmatpush1.msra.mxu0 0.0
      %1364 = vmatprep.subr.mxu0 0.0
      %1365 = vmatpush1.msra.mxu0 0.0
      %1366 = vmatprep.subr.mxu0 0.0
      %1367 = vmatpush1.msra.mxu0 0.0
      %1368 = vmatprep.mubr.f32.mxu0 0.0
      %1369 = vmatmul.mubr.f32.gmra.mrb[0].mxu0 %v1298
      %v1370 = vpop.f32.mrb[0].mxu0
      %v1371 = vadd.f32 0.0, %v1370
      %v1372 = vpop.f32.mrb[0].mxu0
      %v1373 = vadd.f32 0.0, %v1372
      %1374 = vdwg.mxu0
      %v1375 = vadd.f32 %v1290, %v1371
      %v1376 = vadd.f32 %v1291, %v1373
      %v1377 = vld [vmem:[%s360] sm:$0xff]
      %v1378 = vld [vmem:[%s360 + $0x8] sm:$0xf]
      %s1379 = scalar_lea.vmem %s3, 4
      %v1380 = vld [vmem:[%s1379] sm:$0xf]
      %v1383 = vcombine.high %v1377, %v1377
      %1384 = vrot.lane.b32.xlu0 %v1377, 127
      %v1385 = vpop.permute.xlu0 %1384
      %1386 = vrot.lane.b32.xlu0 %v1383, 127
      %v1387 = vpop.permute.xlu0 %1386
      %1388 = vrot.lane.b32.xlu0 %v1378, 127
      %v1389 = vpop.permute.xlu0 %1388
      %v1390 = vsel %vm402, %v1385, %v1387
      %v1391 = vsel %vm402, %v1387, %v1389
      %v1393 = vsel %vm405, %v1380, 0
      %v1395 = vsel %vm409, %v1390, 0
      %v1397 = vsel %vm409, %v1391, 0
      %1399 = vmatprep.subr.mxu0 %v1397
      %1400 = vmatpush1.msra.mxu0 %v1395
      %1401 = vmatprep.subr.mxu0 0.0
      %1402 = vmatpush1.msra.mxu0 0.0
      %1403 = vmatprep.subr.mxu0 0.0
      %1404 = vmatpush1.msra.mxu0 0.0
      %1405 = vmatprep.subr.mxu0 0.0
      %1406 = vmatpush1.msra.mxu0 0.0
      %1407 = vmatprep.subr.mxu0 0.0
      %1408 = vmatpush1.msra.mxu0 0.0
      %1409 = vmatprep.subr.mxu0 0.0
      %1410 = vmatpush1.msra.mxu0 0.0
      %1411 = vmatprep.subr.mxu0 0.0
      %1412 = vmatpush1.msra.mxu0 0.0
      %1413 = vmatprep.subr.mxu0 0.0
      %1414 = vmatpush1.msra.mxu0 0.0
      %1415 = vmatprep.subr.mxu0 0.0
      %1416 = vmatpush1.msra.mxu0 0.0
      %1417 = vmatprep.subr.mxu0 0.0
      %1418 = vmatpush1.msra.mxu0 0.0
      %1419 = vmatprep.subr.mxu0 0.0
      %1420 = vmatpush1.msra.mxu0 0.0
      %1421 = vmatprep.subr.mxu0 0.0
      %1422 = vmatpush1.msra.mxu0 0.0
      %1423 = vmatprep.subr.mxu0 0.0
      %1424 = vmatpush1.msra.mxu0 0.0
      %1425 = vmatprep.subr.mxu0 0.0
      %1426 = vmatpush1.msra.mxu0 0.0
      %1427 = vmatprep.subr.mxu0 0.0
      %1428 = vmatpush1.msra.mxu0 0.0
      %1429 = vmatprep.subr.mxu0 0.0
      %1430 = vmatpush1.msra.mxu0 0.0
      %1431 = vmatprep.subr.mxu0 0.0
      %1432 = vmatpush1.msra.mxu0 0.0
      %1433 = vmatprep.subr.mxu0 0.0
      %1434 = vmatpush1.msra.mxu0 0.0
      %1435 = vmatprep.subr.mxu0 0.0
      %1436 = vmatpush1.msra.mxu0 0.0
      %1437 = vmatprep.subr.mxu0 0.0
      %1438 = vmatpush1.msra.mxu0 0.0
      %1439 = vmatprep.subr.mxu0 0.0
      %1440 = vmatpush1.msra.mxu0 0.0
      %1441 = vmatprep.subr.mxu0 0.0
      %1442 = vmatpush1.msra.mxu0 0.0
      %1443 = vmatprep.subr.mxu0 0.0
      %1444 = vmatpush1.msra.mxu0 0.0
      %1445 = vmatprep.subr.mxu0 0.0
      %1446 = vmatpush1.msra.mxu0 0.0
      %1447 = vmatprep.subr.mxu0 0.0
      %1448 = vmatpush1.msra.mxu0 0.0
      %1449 = vmatprep.subr.mxu0 0.0
      %1450 = vmatpush1.msra.mxu0 0.0
      %1451 = vmatprep.subr.mxu0 0.0
      %1452 = vmatpush1.msra.mxu0 0.0
      %1453 = vmatprep.subr.mxu0 0.0
      %1454 = vmatpush1.msra.mxu0 0.0
      %1455 = vmatprep.subr.mxu0 0.0
      %1456 = vmatpush1.msra.mxu0 0.0
      %1457 = vmatprep.subr.mxu0 0.0
      %1458 = vmatpush1.msra.mxu0 0.0
      %1459 = vmatprep.subr.mxu0 0.0
      %1460 = vmatpush1.msra.mxu0 0.0
      %1461 = vmatprep.subr.mxu0 0.0
      %1462 = vmatpush1.msra.mxu0 0.0
      %1463 = vmatprep.mubr.f32.mxu0 0.0
      %1464 = vmatmul.mubr.f32.gmra.mrb[0].mxu0 %v1393
      %v1465 = vpop.f32.mrb[0].mxu0
      %v1466 = vadd.f32 0.0, %v1465
      %v1467 = vpop.f32.mrb[0].mxu0
      %v1468 = vadd.f32 0.0, %v1467
      %1469 = vdwg.mxu0
      %v1470 = vadd.f32 %v1375, %v1466
      %v1471 = vadd.f32 %v1376, %v1468
      %v1472 = vld [vmem:[%s360] sm:$0xff]
      %v1473 = vld [vmem:[%s360 + $0x8] sm:$0xf]
      %v1474 = vmul.f32 %v1472, %v581
      %v1475 = vmul.f32 %v1473, %v579
      %s1476 = scalar_lea.vmem %s3, 8
      %v1477 = vld [vmem:[%s1476] sm:$0xf]
      %v1480 = vcombine.high %v1474, %v1474
      %1481 = vrot.lane.b32.xlu0 %v1474, 126
      %v1482 = vpop.permute.xlu0 %1481
      %1483 = vrot.lane.b32.xlu0 %v1480, 126
      %v1484 = vpop.permute.xlu0 %1483
      %1485 = vrot.lane.b32.xlu0 %v1475, 126
      %v1486 = vpop.permute.xlu0 %1485
      %v1487 = vsel %vm597, %v1482, %v1484
      %v1488 = vsel %vm597, %v1484, %v1486
      %v1490 = vsel %vm405, %v1477, 0
      %v1492 = vsel %vm409, %v1487, 0
      %v1494 = vsel %vm409, %v1488, 0
      %1496 = vmatprep.subr.mxu0 %v1494
      %1497 = vmatpush1.msra.mxu0 %v1492
      %1498 = vmatprep.subr.mxu0 0.0
      %1499 = vmatpush1.msra.mxu0 0.0
      %1500 = vmatprep.subr.mxu0 0.0
      %1501 = vmatpush1.msra.mxu0 0.0
      %1502 = vmatprep.subr.mxu0 0.0
      %1503 = vmatpush1.msra.mxu0 0.0
      %1504 = vmatprep.subr.mxu0 0.0
      %1505 = vmatpush1.msra.mxu0 0.0
      %1506 = vmatprep.subr.mxu0 0.0
      %1507 = vmatpush1.msra.mxu0 0.0
      %1508 = vmatprep.subr.mxu0 0.0
      %1509 = vmatpush1.msra.mxu0 0.0
      %1510 = vmatprep.subr.mxu0 0.0
      %1511 = vmatpush1.msra.mxu0 0.0
      %1512 = vmatprep.subr.mxu0 0.0
      %1513 = vmatpush1.msra.mxu0 0.0
      %1514 = vmatprep.subr.mxu0 0.0
      %1515 = vmatpush1.msra.mxu0 0.0
      %1516 = vmatprep.subr.mxu0 0.0
      %1517 = vmatpush1.msra.mxu0 0.0
      %1518 = vmatprep.subr.mxu0 0.0
      %1519 = vmatpush1.msra.mxu0 0.0
      %1520 = vmatprep.subr.mxu0 0.0
      %1521 = vmatpush1.msra.mxu0 0.0
      %1522 = vmatprep.subr.mxu0 0.0
      %1523 = vmatpush1.msra.mxu0 0.0
      %1524 = vmatprep.subr.mxu0 0.0
      %1525 = vmatpush1.msra.mxu0 0.0
      %1526 = vmatprep.subr.mxu0 0.0
      %1527 = vmatpush1.msra.mxu0 0.0
      %1528 = vmatprep.subr.mxu0 0.0
      %1529 = vmatpush1.msra.mxu0 0.0
      %1530 = vmatprep.subr.mxu0 0.0
      %1531 = vmatpush1.msra.mxu0 0.0
      %1532 = vmatprep.subr.mxu0 0.0
      %1533 = vmatpush1.msra.mxu0 0.0
      %1534 = vmatprep.subr.mxu0 0.0
      %1535 = vmatpush1.msra.mxu0 0.0
      %1536 = vmatprep.subr.mxu0 0.0
      %1537 = vmatpush1.msra.mxu0 0.0
      %1538 = vmatprep.subr.mxu0 0.0
      %1539 = vmatpush1.msra.mxu0 0.0
      %1540 = vmatprep.subr.mxu0 0.0
      %1541 = vmatpush1.msra.mxu0 0.0
      %1542 = vmatprep.subr.mxu0 0.0
      %1543 = vmatpush1.msra.mxu0 0.0
      %1544 = vmatprep.subr.mxu0 0.0
      %1545 = vmatpush1.msra.mxu0 0.0
      %1546 = vmatprep.subr.mxu0 0.0
      %1547 = vmatpush1.msra.mxu0 0.0
      %1548 = vmatprep.subr.mxu0 0.0
      %1549 = vmatpush1.msra.mxu0 0.0
      %1550 = vmatprep.subr.mxu0 0.0
      %1551 = vmatpush1.msra.mxu0 0.0
      %1552 = vmatprep.subr.mxu0 0.0
      %1553 = vmatpush1.msra.mxu0 0.0
      %1554 = vmatprep.subr.mxu0 0.0
      %1555 = vmatpush1.msra.mxu0 0.0
      %1556 = vmatprep.subr.mxu0 0.0
      %1557 = vmatpush1.msra.mxu0 0.0
      %1558 = vmatprep.subr.mxu0 0.0
      %1559 = vmatpush1.msra.mxu0 0.0
      %1560 = vmatprep.mubr.f32.mxu0 0.0
      %1561 = vmatmul.mubr.f32.gmra.mrb[0].mxu0 %v1490
      %v1562 = vpop.f32.mrb[0].mxu0
      %v1563 = vadd.f32 0.0, %v1562
      %v1564 = vpop.f32.mrb[0].mxu0
      %v1565 = vadd.f32 0.0, %v1564
      %1566 = vdwg.mxu0
      %v1567 = vadd.f32 %v1470, %v1563
      %v1568 = vadd.f32 %v1471, %v1565
      %v1569 = vld [vmem:[%s360] sm:$0xff]
      %v1570 = vld [vmem:[%s360 + $0x8] sm:$0xf]
      %v1571 = vmul.f32 %v1569, %v686
      %v1572 = vmul.f32 %v1570, %v684
      %s1573 = scalar_lea.vmem %s3, 12
      %v1574 = vld [vmem:[%s1573] sm:$0xf]
      %v1577 = vcombine.high %v1571, %v1571
      %1578 = vrot.lane.b32.xlu0 %v1571, 112
      %v1579 = vpop.permute.xlu0 %1578
      %1580 = vrot.lane.b32.xlu0 %v1577, 112
      %v1581 = vpop.permute.xlu0 %1580
      %1582 = vrot.lane.b32.xlu0 %v1572, 112
      %v1583 = vpop.permute.xlu0 %1582
      %v1584 = vsel %vm702, %v1579, %v1581
      %v1585 = vsel %vm702, %v1581, %v1583
      %v1587 = vsel %vm405, %v1574, 0
      %v1589 = vsel %vm409, %v1584, 0
      %v1591 = vsel %vm409, %v1585, 0
      %1593 = vmatprep.subr.mxu0 %v1591
      %1594 = vmatpush1.msra.mxu0 %v1589
      %1595 = vmatprep.subr.mxu0 0.0
      %1596 = vmatpush1.msra.mxu0 0.0
      %1597 = vmatprep.subr.mxu0 0.0
      %1598 = vmatpush1.msra.mxu0 0.0
      %1599 = vmatprep.subr.mxu0 0.0
      %1600 = vmatpush1.msra.mxu0 0.0
      %1601 = vmatprep.subr.mxu0 0.0
      %1602 = vmatpush1.msra.mxu0 0.0
      %1603 = vmatprep.subr.mxu0 0.0
      %1604 = vmatpush1.msra.mxu0 0.0
      %1605 = vmatprep.subr.mxu0 0.0
      %1606 = vmatpush1.msra.mxu0 0.0
      %1607 = vmatprep.subr.mxu0 0.0
      %1608 = vmatpush1.msra.mxu0 0.0
      %1609 = vmatprep.subr.mxu0 0.0
      %1610 = vmatpush1.msra.mxu0 0.0
      %1611 = vmatprep.subr.mxu0 0.0
      %1612 = vmatpush1.msra.mxu0 0.0
      %1613 = vmatprep.subr.mxu0 0.0
      %1614 = vmatpush1.msra.mxu0 0.0
      %1615 = vmatprep.subr.mxu0 0.0
      %1616 = vmatpush1.msra.mxu0 0.0
      %1617 = vmatprep.subr.mxu0 0.0
      %1618 = vmatpush1.msra.mxu0 0.0
      %1619 = vmatprep.subr.mxu0 0.0
      %1620 = vmatpush1.msra.mxu0 0.0
      %1621 = vmatprep.subr.mxu0 0.0
      %1622 = vmatpush1.msra.mxu0 0.0
      %1623 = vmatprep.subr.mxu0 0.0
      %1624 = vmatpush1.msra.mxu0 0.0
      %1625 = vmatprep.subr.mxu0 0.0
      %1626 = vmatpush1.msra.mxu0 0.0
      %1627 = vmatprep.subr.mxu0 0.0
      %1628 = vmatpush1.msra.mxu0 0.0
      %1629 = vmatprep.subr.mxu0 0.0
      %1630 = vmatpush1.msra.mxu0 0.0
      %1631 = vmatprep.subr.mxu0 0.0
      %1632 = vmatpush1.msra.mxu0 0.0
      %1633 = vmatprep.subr.mxu0 0.0
      %1634 = vmatpush1.msra.mxu0 0.0
      %1635 = vmatprep.subr.mxu0 0.0
      %1636 = vmatpush1.msra.mxu0 0.0
      %1637 = vmatprep.subr.mxu0 0.0
      %1638 = vmatpush1.msra.mxu0 0.0
      %1639 = vmatprep.subr.mxu0 0.0
      %1640 = vmatpush1.msra.mxu0 0.0
      %1641 = vmatprep.subr.mxu0 0.0
      %1642 = vmatpush1.msra.mxu0 0.0
      %1643 = vmatprep.subr.mxu0 0.0
      %1644 = vmatpush1.msra.mxu0 0.0
      %1645 = vmatprep.subr.mxu0 0.0
      %1646 = vmatpush1.msra.mxu0 0.0
      %1647 = vmatprep.subr.mxu0 0.0
      %1648 = vmatpush1.msra.mxu0 0.0
      %1649 = vmatprep.subr.mxu0 0.0
      %1650 = vmatpush1.msra.mxu0 0.0
      %1651 = vmatprep.subr.mxu0 0.0
      %1652 = vmatpush1.msra.mxu0 0.0
      %1653 = vmatprep.subr.mxu0 0.0
      %1654 = vmatpush1.msra.mxu0 0.0
      %1655 = vmatprep.subr.mxu0 0.0
      %1656 = vmatpush1.msra.mxu0 0.0
      %1657 = vmatprep.mubr.f32.mxu0 0.0
      %1658 = vmatmul.mubr.f32.gmra.mrb[0].mxu0 %v1587
      %v1659 = vpop.f32.mrb[0].mxu0
      %v1660 = vadd.f32 0.0, %v1659
      %v1661 = vpop.f32.mrb[0].mxu0
      %v1662 = vadd.f32 0.0, %v1661
      %1663 = vdwg.mxu0
      %v1664 = vadd.f32 %v1567, %v1660
      %v1665 = vadd.f32 %v1568, %v1662
      %v1666 = vld [vmem:[%s360] sm:$0xff]
      %v1667 = vld [vmem:[%s360 + $0x8] sm:$0xf]
      %s1668 = scalar_lea.vmem %s3, 16
      %v1669 = vld [vmem:[%s1668] sm:$0xf]
      %v1672 = vcombine.high %v1666, %v1666
      %1673 = vrot.lane.b32.xlu0 %v1666, 111
      %v1674 = vpop.permute.xlu0 %1673
      %1675 = vrot.lane.b32.xlu0 %v1672, 111
      %v1676 = vpop.permute.xlu0 %1675
      %1677 = vrot.lane.b32.xlu0 %v1667, 111
      %v1678 = vpop.permute.xlu0 %1677
      %v1679 = vsel %vm798, %v1674, %v1676
      %v1680 = vsel %vm798, %v1676, %v1678
      %v1682 = vsel %vm405, %v1669, 0
      %v1684 = vsel %vm409, %v1679, 0
      %v1686 = vsel %vm409, %v1680, 0
      %1688 = vmatprep.subr.mxu0 %v1686
      %1689 = vmatpush1.msra.mxu0 %v1684
      %1690 = vmatprep.subr.mxu0 0.0
      %1691 = vmatpush1.msra.mxu0 0.0
      %1692 = vmatprep.subr.mxu0 0.0
      %1693 = vmatpush1.msra.mxu0 0.0
      %1694 = vmatprep.subr.mxu0 0.0
      %1695 = vmatpush1.msra.mxu0 0.0
      %1696 = vmatprep.subr.mxu0 0.0
      %1697 = vmatpush1.msra.mxu0 0.0
      %1698 = vmatprep.subr.mxu0 0.0
      %1699 = vmatpush1.msra.mxu0 0.0
      %1700 = vmatprep.subr.mxu0 0.0
      %1701 = vmatpush1.msra.mxu0 0.0
      %1702 = vmatprep.subr.mxu0 0.0
      %1703 = vmatpush1.msra.mxu0 0.0
      %1704 = vmatprep.subr.mxu0 0.0
      %1705 = vmatpush1.msra.mxu0 0.0
      %1706 = vmatprep.subr.mxu0 0.0
      %1707 = vmatpush1.msra.mxu0 0.0
      %1708 = vmatprep.subr.mxu0 0.0
      %1709 = vmatpush1.msra.mxu0 0.0
      %1710 = vmatprep.subr.mxu0 0.0
      %1711 = vmatpush1.msra.mxu0 0.0
      %1712 = vmatprep.subr.mxu0 0.0
      %1713 = vmatpush1.msra.mxu0 0.0
      %1714 = vmatprep.subr.mxu0 0.0
      %1715 = vmatpush1.msra.mxu0 0.0
      %1716 = vmatprep.subr.mxu0 0.0
      %1717 = vmatpush1.msra.mxu0 0.0
      %1718 = vmatprep.subr.mxu0 0.0
      %1719 = vmatpush1.msra.mxu0 0.0
      %1720 = vmatprep.subr.mxu0 0.0
      %1721 = vmatpush1.msra.mxu0 0.0
      %1722 = vmatprep.subr.mxu0 0.0
      %1723 = vmatpush1.msra.mxu0 0.0
      %1724 = vmatprep.subr.mxu0 0.0
      %1725 = vmatpush1.msra.mxu0 0.0
      %1726 = vmatprep.subr.mxu0 0.0
      %1727 = vmatpush1.msra.mxu0 0.0
      %1728 = vmatprep.subr.mxu0 0.0
      %1729 = vmatpush1.msra.mxu0 0.0
      %1730 = vmatprep.subr.mxu0 0.0
      %1731 = vmatpush1.msra.mxu0 0.0
      %1732 = vmatprep.subr.mxu0 0.0
      %1733 = vmatpush1.msra.mxu0 0.0
      %1734 = vmatprep.subr.mxu0 0.0
      %1735 = vmatpush1.msra.mxu0 0.0
      %1736 = vmatprep.subr.mxu0 0.0
      %1737 = vmatpush1.msra.mxu0 0.0
      %1738 = vmatprep.subr.mxu0 0.0
      %1739 = vmatpush1.msra.mxu0 0.0
      %1740 = vmatprep.subr.mxu0 0.0
      %1741 = vmatpush1.msra.mxu0 0.0
      %1742 = vmatprep.subr.mxu0 0.0
      %1743 = vmatpush1.msra.mxu0 0.0
      %1744 = vmatprep.subr.mxu0 0.0
      %1745 = vmatpush1.msra.mxu0 0.0
      %1746 = vmatprep.subr.mxu0 0.0
      %1747 = vmatpush1.msra.mxu0 0.0
      %1748 = vmatprep.subr.mxu0 0.0
      %1749 = vmatpush1.msra.mxu0 0.0
      %1750 = vmatprep.subr.mxu0 0.0
      %1751 = vmatpush1.msra.mxu0 0.0
      %1752 = vmatprep.mubr.f32.mxu0 0.0
      %1753 = vmatmul.mubr.f32.gmra.mrb[0].mxu0 %v1682
      %v1754 = vpop.f32.mrb[0].mxu0
      %v1755 = vadd.f32 0.0, %v1754
      %v1756 = vpop.f32.mrb[0].mxu0
      %v1757 = vadd.f32 0.0, %v1756
      %1758 = vdwg.mxu0
      %v1759 = vadd.f32 %v1664, %v1755
      %v1760 = vadd.f32 %v1665, %v1757
      %v1761 = vld [vmem:[%s360] sm:$0xff]
      %v1762 = vld [vmem:[%s360 + $0x8] sm:$0xf]
      %v1763 = vmul.f32 %v1761, %v887
      %v1764 = vmul.f32 %v1762, %v885
      %s1765 = scalar_lea.vmem %s3, 20
      %v1766 = vld [vmem:[%s1765] sm:$0xf]
      %v1769 = vcombine.high %v1763, %v1763
      %1770 = vrot.lane.b32.xlu0 %v1763, 110
      %v1771 = vpop.permute.xlu0 %1770
      %1772 = vrot.lane.b32.xlu0 %v1769, 110
      %v1773 = vpop.permute.xlu0 %1772
      %1774 = vrot.lane.b32.xlu0 %v1764, 110
      %v1775 = vpop.permute.xlu0 %1774
      %v1776 = vsel %vm903, %v1771, %v1773
      %v1777 = vsel %vm903, %v1773, %v1775
      %v1779 = vsel %vm405, %v1766, 0
      %v1781 = vsel %vm409, %v1776, 0
      %v1783 = vsel %vm409, %v1777, 0
      %1785 = vmatprep.subr.mxu0 %v1783
      %1786 = vmatpush1.msra.mxu0 %v1781
      %1787 = vmatprep.subr.mxu0 0.0
      %1788 = vmatpush1.msra.mxu0 0.0
      %1789 = vmatprep.subr.mxu0 0.0
      %1790 = vmatpush1.msra.mxu0 0.0
      %1791 = vmatprep.subr.mxu0 0.0
      %1792 = vmatpush1.msra.mxu0 0.0
      %1793 = vmatprep.subr.mxu0 0.0
      %1794 = vmatpush1.msra.mxu0 0.0
      %1795 = vmatprep.subr.mxu0 0.0
      %1796 = vmatpush1.msra.mxu0 0.0
      %1797 = vmatprep.subr.mxu0 0.0
      %1798 = vmatpush1.msra.mxu0 0.0
      %1799 = vmatprep.subr.mxu0 0.0
      %1800 = vmatpush1.msra.mxu0 0.0
      %1801 = vmatprep.subr.mxu0 0.0
      %1802 = vmatpush1.msra.mxu0 0.0
      %1803 = vmatprep.subr.mxu0 0.0
      %1804 = vmatpush1.msra.mxu0 0.0
      %1805 = vmatprep.subr.mxu0 0.0
      %1806 = vmatpush1.msra.mxu0 0.0
      %1807 = vmatprep.subr.mxu0 0.0
      %1808 = vmatpush1.msra.mxu0 0.0
      %1809 = vmatprep.subr.mxu0 0.0
      %1810 = vmatpush1.msra.mxu0 0.0
      %1811 = vmatprep.subr.mxu0 0.0
      %1812 = vmatpush1.msra.mxu0 0.0
      %1813 = vmatprep.subr.mxu0 0.0
      %1814 = vmatpush1.msra.mxu0 0.0
      %1815 = vmatprep.subr.mxu0 0.0
      %1816 = vmatpush1.msra.mxu0 0.0
      %1817 = vmatprep.subr.mxu0 0.0
      %1818 = vmatpush1.msra.mxu0 0.0
      %1819 = vmatprep.subr.mxu0 0.0
      %1820 = vmatpush1.msra.mxu0 0.0
      %1821 = vmatprep.subr.mxu0 0.0
      %1822 = vmatpush1.msra.mxu0 0.0
      %1823 = vmatprep.subr.mxu0 0.0
      %1824 = vmatpush1.msra.mxu0 0.0
      %1825 = vmatprep.subr.mxu0 0.0
      %1826 = vmatpush1.msra.mxu0 0.0
      %1827 = vmatprep.subr.mxu0 0.0
      %1828 = vmatpush1.msra.mxu0 0.0
      %1829 = vmatprep.subr.mxu0 0.0
      %1830 = vmatpush1.msra.mxu0 0.0
      %1831 = vmatprep.subr.mxu0 0.0
      %1832 = vmatpush1.msra.mxu0 0.0
      %1833 = vmatprep.subr.mxu0 0.0
      %1834 = vmatpush1.msra.mxu0 0.0
      %1835 = vmatprep.subr.mxu0 0.0
      %1836 = vmatpush1.msra.mxu0 0.0
      %1837 = vmatprep.subr.mxu0 0.0
      %1838 = vmatpush1.msra.mxu0 0.0
      %1839 = vmatprep.subr.mxu0 0.0
      %1840 = vmatpush1.msra.mxu0 0.0
      %1841 = vmatprep.subr.mxu0 0.0
      %1842 = vmatpush1.msra.mxu0 0.0
      %1843 = vmatprep.subr.mxu0 0.0
      %1844 = vmatpush1.msra.mxu0 0.0
      %1845 = vmatprep.subr.mxu0 0.0
      %1846 = vmatpush1.msra.mxu0 0.0
      %1847 = vmatprep.subr.mxu0 0.0
      %1848 = vmatpush1.msra.mxu0 0.0
      %1849 = vmatprep.mubr.f32.mxu0 0.0
      %1850 = vmatmul.mubr.f32.gmra.mrb[0].mxu0 %v1779
      %v1851 = vpop.f32.mrb[0].mxu0
      %v1852 = vadd.f32 0.0, %v1851
      %v1853 = vpop.f32.mrb[0].mxu0
      %v1854 = vadd.f32 0.0, %v1853
      %1855 = vdwg.mxu0
      %v1856 = vadd.f32 %v1759, %v1852
      %v1857 = vadd.f32 %v1760, %v1854
      %v1858 = vld [vmem:[%s360] sm:$0xff]
      %v1859 = vld [vmem:[%s360 + $0x8] sm:$0xf]
      %v1860 = vmul.f32 %v1858, %v992
      %v1861 = vmul.f32 %v1859, %v990
      %s1862 = scalar_lea.vmem %s3, 24
      %v1863 = vld [vmem:[%s1862] sm:$0xf]
      %v1866 = vcombine.high %v1860, %v1860
      %1867 = vrot.lane.b32.xlu0 %v1860, 96
      %v1868 = vpop.permute.xlu0 %1867
      %1869 = vrot.lane.b32.xlu0 %v1866, 96
      %v1870 = vpop.permute.xlu0 %1869
      %1871 = vrot.lane.b32.xlu0 %v1861, 96
      %v1872 = vpop.permute.xlu0 %1871
      %v1873 = vsel %vm1008, %v1868, %v1870
      %v1874 = vsel %vm1008, %v1870, %v1872
      %v1876 = vsel %vm405, %v1863, 0
      %v1878 = vsel %vm409, %v1873, 0
      %v1880 = vsel %vm409, %v1874, 0
      %1882 = vmatprep.subr.mxu0 %v1880
      %1883 = vmatpush1.msra.mxu0 %v1878
      %1884 = vmatprep.subr.mxu0 0.0
      %1885 = vmatpush1.msra.mxu0 0.0
      %1886 = vmatprep.subr.mxu0 0.0
      %1887 = vmatpush1.msra.mxu0 0.0
      %1888 = vmatprep.subr.mxu0 0.0
      %1889 = vmatpush1.msra.mxu0 0.0
      %1890 = vmatprep.subr.mxu0 0.0
      %1891 = vmatpush1.msra.mxu0 0.0
      %1892 = vmatprep.subr.mxu0 0.0
      %1893 = vmatpush1.msra.mxu0 0.0
      %1894 = vmatprep.subr.mxu0 0.0
      %1895 = vmatpush1.msra.mxu0 0.0
      %1896 = vmatprep.subr.mxu0 0.0
      %1897 = vmatpush1.msra.mxu0 0.0
      %1898 = vmatprep.subr.mxu0 0.0
      %1899 = vmatpush1.msra.mxu0 0.0
      %1900 = vmatprep.subr.mxu0 0.0
      %1901 = vmatpush1.msra.mxu0 0.0
      %1902 = vmatprep.subr.mxu0 0.0
      %1903 = vmatpush1.msra.mxu0 0.0
      %1904 = vmatprep.subr.mxu0 0.0
      %1905 = vmatpush1.msra.mxu0 0.0
      %1906 = vmatprep.subr.mxu0 0.0
      %1907 = vmatpush1.msra.mxu0 0.0
      %1908 = vmatprep.subr.mxu0 0.0
      %1909 = vmatpush1.msra.mxu0 0.0
      %1910 = vmatprep.subr.mxu0 0.0
      %1911 = vmatpush1.msra.mxu0 0.0
      %1912 = vmatprep.subr.mxu0 0.0
      %1913 = vmatpush1.msra.mxu0 0.0
      %1914 = vmatprep.subr.mxu0 0.0
      %1915 = vmatpush1.msra.mxu0 0.0
      %1916 = vmatprep.subr.mxu0 0.0
      %1917 = vmatpush1.msra.mxu0 0.0
      %1918 = vmatprep.subr.mxu0 0.0
      %1919 = vmatpush1.msra.mxu0 0.0
      %1920 = vmatprep.subr.mxu0 0.0
      %1921 = vmatpush1.msra.mxu0 0.0
      %1922 = vmatprep.subr.mxu0 0.0
      %1923 = vmatpush1.msra.mxu0 0.0
      %1924 = vmatprep.subr.mxu0 0.0
      %1925 = vmatpush1.msra.mxu0 0.0
      %1926 = vmatprep.subr.mxu0 0.0
      %1927 = vmatpush1.msra.mxu0 0.0
      %1928 = vmatprep.subr.mxu0 0.0
      %1929 = vmatpush1.msra.mxu0 0.0
      %1930 = vmatprep.subr.mxu0 0.0
      %1931 = vmatpush1.msra.mxu0 0.0
      %1932 = vmatprep.subr.mxu0 0.0
      %1933 = vmatpush1.msra.mxu0 0.0
      %1934 = vmatprep.subr.mxu0 0.0
      %1935 = vmatpush1.msra.mxu0 0.0
      %1936 = vmatprep.subr.mxu0 0.0
      %1937 = vmatpush1.msra.mxu0 0.0
      %1938 = vmatprep.subr.mxu0 0.0
      %1939 = vmatpush1.msra.mxu0 0.0
      %1940 = vmatprep.subr.mxu0 0.0
      %1941 = vmatpush1.msra.mxu0 0.0
      %1942 = vmatprep.subr.mxu0 0.0
      %1943 = vmatpush1.msra.mxu0 0.0
      %1944 = vmatprep.subr.mxu0 0.0
      %1945 = vmatpush1.msra.mxu0 0.0
      %1946 = vmatprep.mubr.f32.mxu0 0.0
      %1947 = vmatmul.mubr.f32.gmra.mrb[0].mxu0 %v1876
      %v1948 = vpop.f32.mrb[0].mxu0
      %v1949 = vadd.f32 0.0, %v1948
      %v1950 = vpop.f32.mrb[0].mxu0
      %v1951 = vadd.f32 0.0, %v1950
      %1952 = vdwg.mxu0
      %v1953 = vadd.f32 %v1856, %v1949
      %v1954 = vadd.f32 %v1857, %v1951
      %v1955 = vld [vmem:[%s360] sm:$0xff]
      %v1956 = vld [vmem:[%s360 + $0x8] sm:$0xf]
      %s1957 = scalar_lea.vmem %s3, 28
      %v1958 = vld [vmem:[%s1957] sm:$0xf]
      %v1961 = vcombine.high %v1955, %v1955
      %1962 = vrot.lane.b32.xlu0 %v1955, 95
      %v1963 = vpop.permute.xlu0 %1962
      %1964 = vrot.lane.b32.xlu0 %v1961, 95
      %v1965 = vpop.permute.xlu0 %1964
      %1966 = vrot.lane.b32.xlu0 %v1956, 95
      %v1967 = vpop.permute.xlu0 %1966
      %v1968 = vsel %vm1104, %v1963, %v1965
      %v1969 = vsel %vm1104, %v1965, %v1967
      %v1971 = vsel %vm405, %v1958, 0
      %v1973 = vsel %vm409, %v1968, 0
      %v1975 = vsel %vm409, %v1969, 0
      %1977 = vmatprep.subr.mxu0 %v1975
      %1978 = vmatpush1.msra.mxu0 %v1973
      %1979 = vmatprep.subr.mxu0 0.0
      %1980 = vmatpush1.msra.mxu0 0.0
      %1981 = vmatprep.subr.mxu0 0.0
      %1982 = vmatpush1.msra.mxu0 0.0
      %1983 = vmatprep.subr.mxu0 0.0
      %1984 = vmatpush1.msra.mxu0 0.0
      %1985 = vmatprep.subr.mxu0 0.0
      %1986 = vmatpush1.msra.mxu0 0.0
      %1987 = vmatprep.subr.mxu0 0.0
      %1988 = vmatpush1.msra.mxu0 0.0
      %1989 = vmatprep.subr.mxu0 0.0
      %1990 = vmatpush1.msra.mxu0 0.0
      %1991 = vmatprep.subr.mxu0 0.0
      %1992 = vmatpush1.msra.mxu0 0.0
      %1993 = vmatprep.subr.mxu0 0.0
      %1994 = vmatpush1.msra.mxu0 0.0
      %1995 = vmatprep.subr.mxu0 0.0
      %1996 = vmatpush1.msra.mxu0 0.0
      %1997 = vmatprep.subr.mxu0 0.0
      %1998 = vmatpush1.msra.mxu0 0.0
      %1999 = vmatprep.subr.mxu0 0.0
      %2000 = vmatpush1.msra.mxu0 0.0
      %2001 = vmatprep.subr.mxu0 0.0
      %2002 = vmatpush1.msra.mxu0 0.0
      %2003 = vmatprep.subr.mxu0 0.0
      %2004 = vmatpush1.msra.mxu0 0.0
      %2005 = vmatprep.subr.mxu0 0.0
      %2006 = vmatpush1.msra.mxu0 0.0
      %2007 = vmatprep.subr.mxu0 0.0
      %2008 = vmatpush1.msra.mxu0 0.0
      %2009 = vmatprep.subr.mxu0 0.0
      %2010 = vmatpush1.msra.mxu0 0.0
      %2011 = vmatprep.subr.mxu0 0.0
      %2012 = vmatpush1.msra.mxu0 0.0
      %2013 = vmatprep.subr.mxu0 0.0
      %2014 = vmatpush1.msra.mxu0 0.0
      %2015 = vmatprep.subr.mxu0 0.0
      %2016 = vmatpush1.msra.mxu0 0.0
      %2017 = vmatprep.subr.mxu0 0.0
      %2018 = vmatpush1.msra.mxu0 0.0
      %2019 = vmatprep.subr.mxu0 0.0
      %2020 = vmatpush1.msra.mxu0 0.0
      %2021 = vmatprep.subr.mxu0 0.0
      %2022 = vmatpush1.msra.mxu0 0.0
      %2023 = vmatprep.subr.mxu0 0.0
      %2024 = vmatpush1.msra.mxu0 0.0
      %2025 = vmatprep.subr.mxu0 0.0
      %2026 = vmatpush1.msra.mxu0 0.0
      %2027 = vmatprep.subr.mxu0 0.0
      %2028 = vmatpush1.msra.mxu0 0.0
      %2029 = vmatprep.subr.mxu0 0.0
      %2030 = vmatpush1.msra.mxu0 0.0
      %2031 = vmatprep.subr.mxu0 0.0
      %2032 = vmatpush1.msra.mxu0 0.0
      %2033 = vmatprep.subr.mxu0 0.0
      %2034 = vmatpush1.msra.mxu0 0.0
      %2035 = vmatprep.subr.mxu0 0.0
      %2036 = vmatpush1.msra.mxu0 0.0
      %2037 = vmatprep.subr.mxu0 0.0
      %2038 = vmatpush1.msra.mxu0 0.0
      %2039 = vmatprep.subr.mxu0 0.0
      %2040 = vmatpush1.msra.mxu0 0.0
      %2041 = vmatprep.mubr.f32.mxu0 0.0
      %2042 = vmatmul.mubr.f32.gmra.mrb[0].mxu0 %v1971
      %v2043 = vpop.f32.mrb[0].mxu0
      %v2044 = vadd.f32 0.0, %v2043
      %v2045 = vpop.f32.mrb[0].mxu0
      %v2046 = vadd.f32 0.0, %v2045
      %2047 = vdwg.mxu0
      %v2048 = vadd.f32 %v1953, %v2044
      %v2049 = vadd.f32 %v1954, %v2046
      %v2050 = vld [vmem:[%s360] sm:$0xff]
      %v2051 = vld [vmem:[%s360 + $0x8] sm:$0xf]
      %v2052 = vmul.f32 %v2050, %v1193
      %v2053 = vmul.f32 %v2051, %v1191
      %s2054 = scalar_lea.vmem %s3, 32
      %v2055 = vld [vmem:[%s2054] sm:$0xf]
      %v2058 = vcombine.high %v2052, %v2052
      %2059 = vrot.lane.b32.xlu0 %v2052, 94
      %v2060 = vpop.permute.xlu0 %2059
      %2061 = vrot.lane.b32.xlu0 %v2058, 94
      %v2062 = vpop.permute.xlu0 %2061
      %2063 = vrot.lane.b32.xlu0 %v2053, 94
      %v2064 = vpop.permute.xlu0 %2063
      %v2065 = vsel %vm1209, %v2060, %v2062
      %v2066 = vsel %vm1209, %v2062, %v2064
      %v2068 = vsel %vm405, %v2055, 0
      %v2070 = vsel %vm409, %v2065, 0
      %v2072 = vsel %vm409, %v2066, 0
      %2074 = vmatprep.subr.mxu0 %v2072
      %2075 = vmatpush1.msra.mxu0 %v2070
      %2076 = vmatprep.subr.mxu0 0.0
      %2077 = vmatpush1.msra.mxu0 0.0
      %2078 = vmatprep.subr.mxu0 0.0
      %2079 = vmatpush1.msra.mxu0 0.0
      %2080 = vmatprep.subr.mxu0 0.0
      %2081 = vmatpush1.msra.mxu0 0.0
      %2082 = vmatprep.subr.mxu0 0.0
      %2083 = vmatpush1.msra.mxu0 0.0
      %2084 = vmatprep.subr.mxu0 0.0
      %2085 = vmatpush1.msra.mxu0 0.0
      %2086 = vmatprep.subr.mxu0 0.0
      %2087 = vmatpush1.msra.mxu0 0.0
      %2088 = vmatprep.subr.mxu0 0.0
      %2089 = vmatpush1.msra.mxu0 0.0
      %2090 = vmatprep.subr.mxu0 0.0
      %2091 = vmatpush1.msra.mxu0 0.0
      %2092 = vmatprep.subr.mxu0 0.0
      %2093 = vmatpush1.msra.mxu0 0.0
      %2094 = vmatprep.subr.mxu0 0.0
      %2095 = vmatpush1.msra.mxu0 0.0
      %2096 = vmatprep.subr.mxu0 0.0
      %2097 = vmatpush1.msra.mxu0 0.0
      %2098 = vmatprep.subr.mxu0 0.0
      %2099 = vmatpush1.msra.mxu0 0.0
      %2100 = vmatprep.subr.mxu0 0.0
      %2101 = vmatpush1.msra.mxu0 0.0
      %2102 = vmatprep.subr.mxu0 0.0
      %2103 = vmatpush1.msra.mxu0 0.0
      %2104 = vmatprep.subr.mxu0 0.0
      %2105 = vmatpush1.msra.mxu0 0.0
      %2106 = vmatprep.subr.mxu0 0.0
      %2107 = vmatpush1.msra.mxu0 0.0
      %2108 = vmatprep.subr.mxu0 0.0
      %2109 = vmatpush1.msra.mxu0 0.0
      %2110 = vmatprep.subr.mxu0 0.0
      %2111 = vmatpush1.msra.mxu0 0.0
      %2112 = vmatprep.subr.mxu0 0.0
      %2113 = vmatpush1.msra.mxu0 0.0
      %2114 = vmatprep.subr.mxu0 0.0
      %2115 = vmatpush1.msra.mxu0 0.0
      %2116 = vmatprep.subr.mxu0 0.0
      %2117 = vmatpush1.msra.mxu0 0.0
      %2118 = vmatprep.subr.mxu0 0.0
      %2119 = vmatpush1.msra.mxu0 0.0
      %2120 = vmatprep.subr.mxu0 0.0
      %2121 = vmatpush1.msra.mxu0 0.0
      %2122 = vmatprep.subr.mxu0 0.0
      %2123 = vmatpush1.msra.mxu0 0.0
      %2124 = vmatprep.subr.mxu0 0.0
      %2125 = vmatpush1.msra.mxu0 0.0
      %2126 = vmatprep.subr.mxu0 0.0
      %2127 = vmatpush1.msra.mxu0 0.0
      %2128 = vmatprep.subr.mxu0 0.0
      %2129 = vmatpush1.msra.mxu0 0.0
      %2130 = vmatprep.subr.mxu0 0.0
      %2131 = vmatpush1.msra.mxu0 0.0
      %2132 = vmatprep.subr.mxu0 0.0
      %2133 = vmatpush1.msra.mxu0 0.0
      %2134 = vmatprep.subr.mxu0 0.0
      %2135 = vmatpush1.msra.mxu0 0.0
      %2136 = vmatprep.subr.mxu0 0.0
      %2137 = vmatpush1.msra.mxu0 0.0
      %2138 = vmatprep.mubr.f32.mxu0 0.0
      %2139 = vmatmul.mubr.f32.gmra.mrb[0].mxu0 %v2068
      %v2140 = vpop.f32.mrb[0].mxu0
      %v2141 = vadd.f32 0.0, %v2140
      %v2142 = vpop.f32.mrb[0].mxu0
      %v2143 = vadd.f32 0.0, %v2142
      %2144 = vdwg.mxu0
      %v2145 = vadd.f32 %v2048, %v2141
      %v2146 = vadd.f32 %v2049, %v2143
      %v2147 = vld [vmem:[%s4] sm:$0xf]
      %2149 = vset.pattern.permute.xlu0 0
      %2150 = vperm.xlu0 %2149, %v2147
      %v2151 = vpop.permute.xlu0 %2150
      %v2153 = vadd.f32 %v2145, %v2151
      %v2154 = vadd.f32 %v2146, %v2151
      %v2157 = vcombine.low %v2153, %v2154
      %2159 = vst [vmem:[%s365] sm:$0xff] %v2157
      %v2160 = vsel %vm409, %v2153, 0.0
      %v2161 = vsel %vm409, %v2154, 0.0
      %v2162 = vadd.f32 %v2160, %v2161
      %2163 = vadd.xlane.f32.xlu0 %v2162
      %v2164 = vpop.xlane.xlu0 %2163
      %vm2165 = vcmask 3072
      %2166 = vst.msk [vmem:[%s369] sm:$0xf] %vm2165, %v2164
      %v2167 = vmul.f32 %v2153, %v2153
      %v2168 = vmul.f32 %v2154, %v2154
      %v2169 = vsel %vm409, %v2167, 0.0
      %v2170 = vsel %vm409, %v2168, 0.0
      %v2171 = vadd.f32 %v2169, %v2170
      %2172 = vadd.xlane.f32.xlu0 %v2171
      %v2173 = vpop.xlane.xlu0 %2172
      %2174 = vst.msk [vmem:[%s373] sm:$0xf] %vm2165, %v2173
      %p2175 = scmp.lt.s32.totalorder %s21, 1
      %s2176 = scalar_select %p2175, %s21, 1
      %s2177 = smul.addr %s2176, 2
      %s2178 = smul.addr %s2177, 4
      %s2179 = scalar_lea.vmem %s7, %s2178
      %p2180 = scmp.lt.s32.totalorder %s21, 1
      %s2181 = scalar_select %p2180, %s21, 1
      %s2182 = smul.addr %s2181, 4
      %s2183 = scalar_lea.vmem %s8, %s2182
      %p2184 = scmp.lt.s32.totalorder %s21, 1
      %s2185 = scalar_select %p2184, %s21, 1
      %s2186 = smul.addr %s2185, 4
      %s2187 = scalar_lea.vmem %s9, %s2186
      // Predicated region
      $region49: #{up_forward.8} parent=47 // pred_check
        %p2188 = pneg %p196
      $region50: #{up_forward.8} parent=47 // pred_check_branch
        %2190 = sbr.rel (%p2188) target = $region52
      $region51: #{up_forward.8} parent=47 // pred_region
        _
      $region52: #{up_forward.8} parent=47 // pred_fallthru
        _
      // Predicated region
      $region53: #{up_forward.8} parent=47 // pred_check
        %p2191 = pneg %p222
      $region54: #{up_forward.8} parent=47 // pred_check_branch
        %2193 = sbr.rel (%p2191) target = $region56
      $region55: #{up_forward.8} parent=47 // pred_region
        _
      $region56: #{up_forward.8} parent=47 // pred_fallthru
        _
      // Predicated region
      $region57: #{up_forward.8} parent=47 // pred_check
        %p2194 = pneg %p248
      $region58: #{up_forward.8} parent=47 // pred_check_branch
        %2196 = sbr.rel (%p2194) target = $region60
      $region59: #{up_forward.8} parent=47 // pred_region
        _
      $region60: #{up_forward.8} parent=47 // pred_fallthru
        _
    $region48: #{up_forward.8} parent=5 // pred_fallthru
      _
    %p2197 = scmp.le.s32.totalorder 2, %s16
    // Predicated region
    $region61: #{up_forward.8} parent=5 // pred_check
      %p2198 = pneg %p2197
    $region62: #{up_forward.8} parent=5 // pred_check_branch
      %2200 = sbr.rel (%p2198) target = $region64
    $region63: #{up_forward.8} parent=5 // pred_region
      %s2201 = ssub.s32 %s16, 2
      // Predicated region
      $region65: #{up_forward.8} parent=63 // pred_check
        %p2202 = pneg %p202
      $region66: #{up_forward.8} parent=63 // pred_check_branch
        %2204 = sbr.rel (%p2202) target = $region68
      $region67: #{up_forward.8} parent=63 // pred_region
        %p2205 = scmp.lt.s32.totalorder %s22, 1
        %s2206 = scalar_select %p2205, %s22, 1
        %s2207 = smul.addr %s2206, 2
        %s2208 = smul.addr %s2207, 4
        %s2209 = scalar_lea.vmem %s7, %s2208
      $region68: #{up_forward.8} parent=63 // pred_fallthru
        _
      // Predicated region
      $region69: #{up_forward.8} parent=63 // pred_check
        %p2210 = pneg %p228
      $region70: #{up_forward.8} parent=63 // pred_check_branch
        %2212 = sbr.rel (%p2210) target = $region72
      $region71: #{up_forward.8} parent=63 // pred_region
        %p2213 = scmp.lt.s32.totalorder %s22, 1
        %s2214 = scalar_select %p2213, %s22, 1
        %s2215 = smul.addr %s2214, 4
        %s2216 = scalar_lea.vmem %s8, %s2215
      $region72: #{up_forward.8} parent=63 // pred_fallthru
        _
      // Predicated region
      $region73: #{up_forward.8} parent=63 // pred_check
        %p2217 = pneg %p254
      $region74: #{up_forward.8} parent=63 // pred_check_branch
        %2219 = sbr.rel (%p2217) target = $region76
      $region75: #{up_forward.8} parent=63 // pred_region
        %p2220 = scmp.lt.s32.totalorder %s22, 1
        %s2221 = scalar_select %p2220, %s22, 1
        %s2222 = smul.addr %s2221, 4
        %s2223 = scalar_lea.vmem %s9, %s2222
      $region76: #{up_forward.8} parent=63 // pred_fallthru
        _
    $region64: #{up_forward.8} parent=5 // pred_fallthru
      _
  $region6: #{up_forward.8} parent=0 // loop_footer
    %s20 = sadd.s32 1, %s16
  $region7: #{up_forward.8} parent=0 // loop_footer_branch
    %15 = sbr.rel target = $region3
  $region8: #{up_forward.8} parent=0 // loop_exit
    _

// kernel: up_forward.10
$region0: #{up_forward.10}
  #allocation0 [shape = 'u32[]', space=smem, size = 0x4, offset = 0x4, fixed_abs, tag = 'smem constant byte address 0x4 - core index']
  #allocation1 [shape = 'u32[144,128]{1,0:T(1,128)}', space=vmem, size = 0x12000, scoped, tag = 'internal scratch']
  %s0 = inlined_call_operand.vmem [shape: f32[2,4,290], index: 0, kind: input, shape index: {}]
  %s1 = inlined_call_operand.vmem [shape: f32[9,4,4], index: 1, kind: input, shape index: {}]
  %s2 = inlined_call_operand.vmem [shape: f32[4,1], index: 2, kind: input, shape index: {}]
  %s3 = inlined_call_operand.vmem [shape: f32[1,256], index: 3, kind: input, shape index: {}]
  %s4 = inlined_call_operand.vmem [shape: f32[1,256], index: 4, kind: input, shape index: {}]
  %s5 = inlined_call_operand.vmem [shape: f32[2,4,256], index: 5, kind: output, shape index: {0}]
  %s6 = inlined_call_operand.vmem [shape: f32[2,4,1], index: 6, kind: output, shape index: {1}]
  %s7 = inlined_call_operand.vmem [shape: f32[2,4,1], index: 7, kind: output, shape index: {2}]
  %8 = xla_tuple %s5, %s6, %s7
  %s9 = sld [smem:[#allocation0]]
  $region69: #{up_forward.10} parent=0
    _
  %s11 = ssub.s32 1, %s9
  %s12 = scalar_select 0, %s11, %s9
  loop: start=0, step=1, limit=4
  $region2: #{up_forward.10} parent=0 // loop_pre_header
    _
  $region3: #{up_forward.10} parent=0 // loop_header
    %s14 = sphi 0, %s18
    %p15 = scmp.ge.s32.totalorder %s14, 4
    %s24 = sphi 0, %s26
    %s27 = sphi 0, %s24
    %s28 = sphi 0, %s27
    %s44 = sphi 0, %s28
    %s48 = sphi 0, %s48
    %s50 = sphi 0, %s48
    %s51 = sphi 0, %s50
    %s65 = sphi 0, %s51
    %s69 = sphi 0, %s69
    %s71 = sphi 0, %s69
    %s72 = sphi 0, %s71
    %s86 = sphi 0, %s72
    %s90 = sphi 0, %s90
    %s92 = sphi 0, %s90
    %s93 = sphi 0, %s92
    %s107 = sphi 0, %s93
    %s111 = sphi 0, %s111
    %s113 = sphi 0, %s111
    %s114 = sphi 0, %s113
    %s128 = sphi 0, %s114
    %s134 = sphi 0, %s136
    %s137 = sphi 0, %s134
    %s138 = sphi 0, %s137
    %s154 = sphi 0, %s138
    %s160 = sphi 0, %s162
    %s163 = sphi 0, %s160
    %s164 = sphi 0, %s163
    %s180 = sphi 0, %s164
    %s186 = sphi 0, %s188
    %s189 = sphi 0, %s186
    %s190 = sphi 0, %s189
    %s206 = sphi 0, %s190
  $region4: #{up_forward.10} parent=0 // loop_header_branch
    %17 = sbr.rel (%p15) target = $region8
  $region5: #{up_forward.10} parent=0 // loop_body
    %s19 = ssub.s32 %s14, 1
    %s20 = ssub.s32 %s14, 2
    %s21 = sadd.s32 %s14, 1
    %s22 = ssub.s32 %s14, %s21
    %p23 = scmp.eq.s32.totalorder %s22, 0
    %s25 = sadd.s32 %s24, 1
    %s26 = scalar_select %p23, %s24, %s25
    %p29 = pneg %p23
    %p30 = scmp.eq.s32.totalorder %s14, 1
    %p31 = por %p29, %p30
    %p32 = scmp.ne.s32.totalorder %s24, %s27
    %p33 = scmp.eq.s32.totalorder %s14, 0
    %p34 = por %p32, %p33
    %p35 = scmp.ne.s32.totalorder %s24, %s27
    %p36 = scmp.eq.s32.totalorder %s19, 1
    %p37 = por %p35, %p36
    %p38 = scmp.ne.s32.totalorder %s27, %s28
    %p39 = scmp.eq.s32.totalorder %s19, 0
    %p40 = por %p38, %p39
    %p41 = scmp.ne.s32.totalorder %s27, %s28
    %p42 = scmp.eq.s32.totalorder %s20, 1
    %p43 = por %p41, %p42
    %p45 = scmp.ne.s32.totalorder %s28, %s44
    %p46 = scmp.eq.s32.totalorder %s20, 0
    %p47 = por %p45, %p46
    %s49 = sadd.s32 %s48, 1
    %p52 = scmp.eq.s32.totalorder %s14, 1
    %p53 = scmp.ne.s32.totalorder %s48, %s50
    %p54 = scmp.eq.s32.totalorder %s14, 0
    %p55 = por %p53, %p54
    %p56 = scmp.ne.s32.totalorder %s48, %s50
    %p57 = scmp.eq.s32.totalorder %s19, 1
    %p58 = por %p56, %p57
    %p59 = scmp.ne.s32.totalorder %s50, %s51
    %p60 = scmp.eq.s32.totalorder %s19, 0
    %p61 = por %p59, %p60
    %p62 = scmp.ne.s32.totalorder %s50, %s51
    %p63 = scmp.eq.s32.totalorder %s20, 1
    %p64 = por %p62, %p63
    %p66 = scmp.ne.s32.totalorder %s51, %s65
    %p67 = scmp.eq.s32.totalorder %s20, 0
    %p68 = por %p66, %p67
    %s70 = sadd.s32 %s69, 1
    %p73 = scmp.eq.s32.totalorder %s14, 1
    %p74 = scmp.ne.s32.totalorder %s69, %s71
    %p75 = scmp.eq.s32.totalorder %s14, 0
    %p76 = por %p74, %p75
    %p77 = scmp.ne.s32.totalorder %s69, %s71
    %p78 = scmp.eq.s32.totalorder %s19, 1
    %p79 = por %p77, %p78
    %p80 = scmp.ne.s32.totalorder %s71, %s72
    %p81 = scmp.eq.s32.totalorder %s19, 0
    %p82 = por %p80, %p81
    %p83 = scmp.ne.s32.totalorder %s71, %s72
    %p84 = scmp.eq.s32.totalorder %s20, 1
    %p85 = por %p83, %p84
    %p87 = scmp.ne.s32.totalorder %s72, %s86
    %p88 = scmp.eq.s32.totalorder %s20, 0
    %p89 = por %p87, %p88
    %s91 = sadd.s32 %s90, 1
    %p94 = scmp.eq.s32.totalorder %s14, 1
    %p95 = scmp.ne.s32.totalorder %s90, %s92
    %p96 = scmp.eq.s32.totalorder %s14, 0
    %p97 = por %p95, %p96
    %p98 = scmp.ne.s32.totalorder %s90, %s92
    %p99 = scmp.eq.s32.totalorder %s19, 1
    %p100 = por %p98, %p99
    %p101 = scmp.ne.s32.totalorder %s92, %s93
    %p102 = scmp.eq.s32.totalorder %s19, 0
    %p103 = por %p101, %p102
    %p104 = scmp.ne.s32.totalorder %s92, %s93
    %p105 = scmp.eq.s32.totalorder %s20, 1
    %p106 = por %p104, %p105
    %p108 = scmp.ne.s32.totalorder %s93, %s107
    %p109 = scmp.eq.s32.totalorder %s20, 0
    %p110 = por %p108, %p109
    %s112 = sadd.s32 %s111, 1
    %p115 = scmp.eq.s32.totalorder %s14, 1
    %p116 = scmp.ne.s32.totalorder %s111, %s113
    %p117 = scmp.eq.s32.totalorder %s14, 0
    %p118 = por %p116, %p117
    %p119 = scmp.ne.s32.totalorder %s111, %s113
    %p120 = scmp.eq.s32.totalorder %s19, 1
    %p121 = por %p119, %p120
    %p122 = scmp.ne.s32.totalorder %s113, %s114
    %p123 = scmp.eq.s32.totalorder %s19, 0
    %p124 = por %p122, %p123
    %p125 = scmp.ne.s32.totalorder %s113, %s114
    %p126 = scmp.eq.s32.totalorder %s20, 1
    %p127 = por %p125, %p126
    %p129 = scmp.ne.s32.totalorder %s114, %s128
    %p130 = scmp.eq.s32.totalorder %s20, 0
    %p131 = por %p129, %p130
    %s132 = ssub.s32 %s14, %s21
    %p133 = scmp.eq.s32.totalorder %s132, 0
    %s135 = sadd.s32 %s134, 1
    %s136 = scalar_select %p133, %s134, %s135
    %p139 = pneg %p133
    %p140 = scmp.eq.s32.totalorder %s14, 1
    %p141 = por %p139, %p140
    %p142 = scmp.ne.s32.totalorder %s134, %s137
    %p143 = scmp.eq.s32.totalorder %s14, 0
    %p144 = por %p142, %p143
    %p145 = scmp.ne.s32.totalorder %s134, %s137
    %p146 = scmp.eq.s32.totalorder %s19, 1
    %p147 = por %p145, %p146
    %p148 = scmp.ne.s32.totalorder %s137, %s138
    %p149 = scmp.eq.s32.totalorder %s19, 0
    %p150 = por %p148, %p149
    %p151 = scmp.ne.s32.totalorder %s137, %s138
    %p152 = scmp.eq.s32.totalorder %s20, 1
    %p153 = por %p151, %p152
    %p155 = scmp.ne.s32.totalorder %s138, %s154
    %p156 = scmp.eq.s32.totalorder %s20, 0
    %p157 = por %p155, %p156
    %s158 = ssub.s32 %s14, %s21
    %p159 = scmp.eq.s32.totalorder %s158, 0
    %s161 = sadd.s32 %s160, 1
    %s162 = scalar_select %p159, %s160, %s161
    %p165 = pneg %p159
    %p166 = scmp.eq.s32.totalorder %s14, 1
    %p167 = por %p165, %p166
    %p168 = scmp.ne.s32.totalorder %s160, %s163
    %p169 = scmp.eq.s32.totalorder %s14, 0
    %p170 = por %p168, %p169
    %p171 = scmp.ne.s32.totalorder %s160, %s163
    %p172 = scmp.eq.s32.totalorder %s19, 1
    %p173 = por %p171, %p172
    %p174 = scmp.ne.s32.totalorder %s163, %s164
    %p175 = scmp.eq.s32.totalorder %s19, 0
    %p176 = por %p174, %p175
    %p177 = scmp.ne.s32.totalorder %s163, %s164
    %p178 = scmp.eq.s32.totalorder %s20, 1
    %p179 = por %p177, %p178
    %p181 = scmp.ne.s32.totalorder %s164, %s180
    %p182 = scmp.eq.s32.totalorder %s20, 0
    %p183 = por %p181, %p182
    %s184 = ssub.s32 %s14, %s21
    %p185 = scmp.eq.s32.totalorder %s184, 0
    %s187 = sadd.s32 %s186, 1
    %s188 = scalar_select %p185, %s186, %s187
    %p191 = pneg %p185
    %p192 = scmp.eq.s32.totalorder %s14, 1
    %p193 = por %p191, %p192
    %p194 = scmp.ne.s32.totalorder %s186, %s189
    %p195 = scmp.eq.s32.totalorder %s14, 0
    %p196 = por %p194, %p195
    %p197 = scmp.ne.s32.totalorder %s186, %s189
    %p198 = scmp.eq.s32.totalorder %s19, 1
    %p199 = por %p197, %p198
    %p200 = scmp.ne.s32.totalorder %s189, %s190
    %p201 = scmp.eq.s32.totalorder %s19, 0
    %p202 = por %p200, %p201
    %p203 = scmp.ne.s32.totalorder %s189, %s190
    %p204 = scmp.eq.s32.totalorder %s20, 1
    %p205 = por %p203, %p204
    %p207 = scmp.ne.s32.totalorder %s190, %s206
    %p208 = scmp.eq.s32.totalorder %s20, 0
    %p209 = por %p207, %p208
    %p210 = scmp.le.s32.totalorder 1, %s14
    %p211 = scmp.lt.s32.totalorder %s14, 3
    %p212 = pnand %p210, %p211
    %p213 = pneg %p212
    // Predicated region
    $region9: #{up_forward.10} parent=5 // pred_check
      _
    $region10: #{up_forward.10} parent=5 // pred_check_branch
      %215 = sbr.rel (%p212) target = $region12
    $region11: #{up_forward.10} parent=5 // pred_region
      %s216 = ssub.s32 %s14, 1
      // Predicated region
      $region13: #{up_forward.10} parent=11 // pred_check
        %p217 = pneg %p61
      $region14: #{up_forward.10} parent=11 // pred_check_branch
        %219 = sbr.rel (%p217) target = $region16
      $region15: #{up_forward.10} parent=11 // pred_region
        _
      $region16: #{up_forward.10} parent=11 // pred_fallthru
        _
      // Predicated region
      $region17: #{up_forward.10} parent=11 // pred_check
        %p220 = pneg %p82
      $region18: #{up_forward.10} parent=11 // pred_check_branch
        %222 = sbr.rel (%p220) target = $region20
      $region19: #{up_forward.10} parent=11 // pred_region
        _
      $region20: #{up_forward.10} parent=11 // pred_fallthru
        _
      // Predicated region
      $region21: #{up_forward.10} parent=11 // pred_check
        %p223 = pneg %p103
      $region22: #{up_forward.10} parent=11 // pred_check_branch
        %225 = sbr.rel (%p223) target = $region24
      $region23: #{up_forward.10} parent=11 // pred_region
        _
      $region24: #{up_forward.10} parent=11 // pred_fallthru
        _
      // Predicated region
      $region25: #{up_forward.10} parent=11 // pred_check
        %p226 = pneg %p124
      $region26: #{up_forward.10} parent=11 // pred_check_branch
        %228 = sbr.rel (%p226) target = $region28
      $region27: #{up_forward.10} parent=11 // pred_region
        _
      $region28: #{up_forward.10} parent=11 // pred_fallthru
        _
    $region12: #{up_forward.10} parent=5 // pred_fallthru
      _
    %p229 = scmp.lt.s32.totalorder %s14, 2
    // Predicated region
    $region29: #{up_forward.10} parent=5 // pred_check
      %p230 = pneg %p229
    $region30: #{up_forward.10} parent=5 // pred_check_branch
      %232 = sbr.rel (%p230) target = $region32
    $region31: #{up_forward.10} parent=5 // pred_region
      // Predicated region
      $region33: #{up_forward.10} parent=31 // pred_check
        %p233 = pneg %p34
      $region34: #{up_forward.10} parent=31 // pred_check_branch
        %235 = sbr.rel (%p233) target = $region36
      $region35: #{up_forward.10} parent=31 // pred_region
        %p236 = scmp.lt.s32.totalorder %s14, 1
        %s237 = scalar_select %p236, %s14, 1
        %s238 = smul.addr %s237, 3
        %s239 = smul.addr %s238, 4
        %s240 = scalar_lea.vmem %s0, %s239
      $region36: #{up_forward.10} parent=31 // pred_fallthru
        _
    $region32: #{up_forward.10} parent=5 // pred_fallthru
      _
    %p241 = scmp.le.s32.totalorder 1, %s14
    %p242 = scmp.lt.s32.totalorder %s14, 3
    %p243 = pnand %p241, %p242
    %p244 = pneg %p243
    // Predicated region
    $region37: #{up_forward.10} parent=5 // pred_check
      _
    $region38: #{up_forward.10} parent=5 // pred_check_branch
      %246 = sbr.rel (%p243) target = $region40
    $region39: #{up_forward.10} parent=5 // pred_region
      %s247 = ssub.s32 %s14, 1
      %p248 = scmp.lt.s32.totalorder %s19, 1
      %s249 = scalar_select %p248, %s19, 1
      %s250 = smul.addr %s249, 3
      %s251 = smul.addr %s250, 4
      %s252 = scalar_lea.vmem %s0, %s251
      %p253 = pneg %p40
      %p254 = pneg %p37
      %p255 = pneg %p61
      %p256 = pneg %p58
      %p257 = pneg %p82
      %p258 = pneg %p79
      %p259 = pneg %p103
      %p260 = pneg %p100
      %p261 = pneg %p124
      %p262 = pneg %p121
      %p263 = pneg %p150
      %p264 = pneg %p147
      %p265 = scmp.lt.s32.totalorder %s19, 1
      %s266 = scalar_select %p265, %s19, 1
      %s267 = smul.addr %s266, 2
      %s268 = smul.addr %s267, 4
      %s269 = scalar_lea.vmem %s5, %s268
      %p270 = pneg %p176
      %p271 = pneg %p173
      %p272 = scmp.lt.s32.totalorder %s19, 1
      %s273 = scalar_select %p272, %s19, 1
      %s274 = smul.addr %s273, 4
      %s275 = scalar_lea.vmem %s6, %s274
      %p276 = pneg %p202
      %p277 = pneg %p199
      %p278 = scmp.lt.s32.totalorder %s19, 1
      %s279 = scalar_select %p278, %s19, 1
      %s280 = smul.addr %s279, 4
      %s281 = scalar_lea.vmem %s7, %s280
      %p282 = scmp.lt.s32.totalorder %s19, 1
      %s283 = scalar_select %p282, %s19, 1
      %s284 = smul.addr %s283, 3
      %s285 = smul.addr %s284, 4
      %s286 = scalar_lea.vmem %s0, %s285
      %p287 = scmp.lt.s32.totalorder %s19, 1
      %s288 = scalar_select %p287, %s19, 1
      %s289 = smul.addr %s288, 2
      %s290 = smul.addr %s289, 4
      %s291 = scalar_lea.vmem %s5, %s290
      %p292 = scmp.lt.s32.totalorder %s19, 1
      %s293 = scalar_select %p292, %s19, 1
      %s294 = smul.addr %s293, 4
      %s295 = scalar_lea.vmem %s6, %s294
      %p296 = scmp.lt.s32.totalorder %s19, 1
      %s297 = scalar_select %p296, %s19, 1
      %s298 = smul.addr %s297, 4
      %s299 = scalar_lea.vmem %s7, %s298
      %v300 = vld [vmem:[%s3] sm:$0x3]
      %v301 = vld [vmem:[%s4] sm:$0x3]
      %v302 = vld [vmem:[%s286] sm:$0xff]
      %v304 = vlaneseq
      %v305 = vshrl.u32 %v304, 7
      %v306 = vsub.s32 0, %v305
      %v307 = vrot.slane %v300, %v306
      %v308 = vlaneseq
      %v309 = vshrl.u32 %v308, 7
      %v310 = vsub.s32 1, %v309
      %v311 = vrot.slane %v300, %v310
      %v312 = vcombine.low %v307, %v311
      %v314 = vmul.f32 %v302, %v312
      %v315 = vld [vmem:[%s1] sm:$0xf]
      %v316 = vld [vmem:[%s286 + $0x8] sm:$0xf]
      %s317 = scalar_lea.vmem %s1, 4
      %v318 = vld [vmem:[%s317] sm:$0xf]
      %v321 = vcombine.high %v302, %v302
      %322 = vrot.lane.b32.xlu0 %v302, 127
      %v323 = vpop.permute.xlu0 %322
      %324 = vrot.lane.b32.xlu0 %v321, 127
      %v325 = vpop.permute.xlu0 %324
      %326 = vrot.lane.b32.xlu0 %v316, 127
      %v327 = vpop.permute.xlu0 %326
      %vm328 = vcmask 1039360
      %v329 = vsel %vm328, %v323, %v325
      %v330 = vsel %vm328, %v325, %v327
      %vm331 = vcmask 31744
      %v333 = vsel %vm331, %v318, 0
      %vm335 = vcmask 1043456
      %v336 = vsel %vm335, %v329, 0
      %v338 = vsel %vm335, %v330, 0
      %340 = vmatprep.subr.mxu0 %v338
      %341 = vmatpush1.msra.mxu0 %v336
      %342 = vmatprep.subr.mxu0 0.0
      %343 = vmatpush1.msra.mxu0 0.0
      %344 = vmatprep.subr.mxu0 0.0
      %345 = vmatpush1.msra.mxu0 0.0
      %346 = vmatprep.subr.mxu0 0.0
      %347 = vmatpush1.msra.mxu0 0.0
      %348 = vmatprep.subr.mxu0 0.0
      %349 = vmatpush1.msra.mxu0 0.0
      %350 = vmatprep.subr.mxu0 0.0
      %351 = vmatpush1.msra.mxu0 0.0
      %352 = vmatprep.subr.mxu0 0.0
      %353 = vmatpush1.msra.mxu0 0.0
      %354 = vmatprep.subr.mxu0 0.0
      %355 = vmatpush1.msra.mxu0 0.0
      %356 = vmatprep.subr.mxu0 0.0
      %357 = vmatpush1.msra.mxu0 0.0
      %358 = vmatprep.subr.mxu0 0.0
      %359 = vmatpush1.msra.mxu0 0.0
      %360 = vmatprep.subr.mxu0 0.0
      %361 = vmatpush1.msra.mxu0 0.0
      %362 = vmatprep.subr.mxu0 0.0
      %363 = vmatpush1.msra.mxu0 0.0
      %364 = vmatprep.subr.mxu0 0.0
      %365 = vmatpush1.msra.mxu0 0.0
      %366 = vmatprep.subr.mxu0 0.0
      %367 = vmatpush1.msra.mxu0 0.0
      %368 = vmatprep.subr.mxu0 0.0
      %369 = vmatpush1.msra.mxu0 0.0
      %370 = vmatprep.subr.mxu0 0.0
      %371 = vmatpush1.msra.mxu0 0.0
      %372 = vmatprep.subr.mxu0 0.0
      %373 = vmatpush1.msra.mxu0 0.0
      %374 = vmatprep.subr.mxu0 0.0
      %375 = vmatpush1.msra.mxu0 0.0
      %376 = vmatprep.subr.mxu0 0.0
      %377 = vmatpush1.msra.mxu0 0.0
      %378 = vmatprep.subr.mxu0 0.0
      %379 = vmatpush1.msra.mxu0 0.0
      %380 = vmatprep.subr.mxu0 0.0
      %381 = vmatpush1.msra.mxu0 0.0
      %382 = vmatprep.subr.mxu0 0.0
      %383 = vmatpush1.msra.mxu0 0.0
      %384 = vmatprep.subr.mxu0 0.0
      %385 = vmatpush1.msra.mxu0 0.0
      %386 = vmatprep.subr.mxu0 0.0
      %387 = vmatpush1.msra.mxu0 0.0
      %388 = vmatprep.subr.mxu0 0.0
      %389 = vmatpush1.msra.mxu0 0.0
      %390 = vmatprep.subr.mxu0 0.0
      %391 = vmatpush1.msra.mxu0 0.0
      %392 = vmatprep.subr.mxu0 0.0
      %393 = vmatpush1.msra.mxu0 0.0
      %394 = vmatprep.subr.mxu0 0.0
      %395 = vmatpush1.msra.mxu0 0.0
      %396 = vmatprep.subr.mxu0 0.0
      %397 = vmatpush1.msra.mxu0 0.0
      %398 = vmatprep.subr.mxu0 0.0
      %399 = vmatpush1.msra.mxu0 0.0
      %400 = vmatprep.subr.mxu0 0.0
      %401 = vmatpush1.msra.mxu0 0.0
      %402 = vmatprep.subr.mxu0 0.0
      %403 = vmatpush1.msra.mxu0 0.0
      %404 = vmatprep.mubr.f32.mxu0 0.0
      %405 = vmatmul.mubr.f32.gmra.mrb[0].mxu0 %v333
      %v406 = vpop.f32.mrb[0].mxu0
      %v407 = vadd.f32 0.0, %v406
      %v408 = vpop.f32.mrb[0].mxu0
      %v409 = vadd.f32 0.0, %v408
      %410 = vdwg.mxu0
      %v412 = vcombine.high %v314, %v314
      %v414 = vsel %vm331, %v315, 0
      %v416 = vsel %vm335, %v314, 0
      %v418 = vsel %vm335, %v412, 0
      %420 = vmatprep.subr.mxu0 %v418
      %421 = vmatpush1.msra.mxu0 %v416
      %422 = vmatprep.subr.mxu0 0.0
      %423 = vmatpush1.msra.mxu0 0.0
      %424 = vmatprep.subr.mxu0 0.0
      %425 = vmatpush1.msra.mxu0 0.0
      %426 = vmatprep.subr.mxu0 0.0
      %427 = vmatpush1.msra.mxu0 0.0
      %428 = vmatprep.subr.mxu0 0.0
      %429 = vmatpush1.msra.mxu0 0.0
      %430 = vmatprep.subr.mxu0 0.0
      %431 = vmatpush1.msra.mxu0 0.0
      %432 = vmatprep.subr.mxu0 0.0
      %433 = vmatpush1.msra.mxu0 0.0
      %434 = vmatprep.subr.mxu0 0.0
      %435 = vmatpush1.msra.mxu0 0.0
      %436 = vmatprep.subr.mxu0 0.0
      %437 = vmatpush1.msra.mxu0 0.0
      %438 = vmatprep.subr.mxu0 0.0
      %439 = vmatpush1.msra.mxu0 0.0
      %440 = vmatprep.subr.mxu0 0.0
      %441 = vmatpush1.msra.mxu0 0.0
      %442 = vmatprep.subr.mxu0 0.0
      %443 = vmatpush1.msra.mxu0 0.0
      %444 = vmatprep.subr.mxu0 0.0
      %445 = vmatpush1.msra.mxu0 0.0
      %446 = vmatprep.subr.mxu0 0.0
      %447 = vmatpush1.msra.mxu0 0.0
      %448 = vmatprep.subr.mxu0 0.0
      %449 = vmatpush1.msra.mxu0 0.0
      %450 = vmatprep.subr.mxu0 0.0
      %451 = vmatpush1.msra.mxu0 0.0
      %452 = vmatprep.subr.mxu0 0.0
      %453 = vmatpush1.msra.mxu0 0.0
      %454 = vmatprep.subr.mxu0 0.0
      %455 = vmatpush1.msra.mxu0 0.0
      %456 = vmatprep.subr.mxu0 0.0
      %457 = vmatpush1.msra.mxu0 0.0
      %458 = vmatprep.subr.mxu0 0.0
      %459 = vmatpush1.msra.mxu0 0.0
      %460 = vmatprep.subr.mxu0 0.0
      %461 = vmatpush1.msra.mxu0 0.0
      %462 = vmatprep.subr.mxu0 0.0
      %463 = vmatpush1.msra.mxu0 0.0
      %464 = vmatprep.subr.mxu0 0.0
      %465 = vmatpush1.msra.mxu0 0.0
      %466 = vmatprep.subr.mxu0 0.0
      %467 = vmatpush1.msra.mxu0 0.0
      %468 = vmatprep.subr.mxu0 0.0
      %469 = vmatpush1.msra.mxu0 0.0
      %470 = vmatprep.subr.mxu0 0.0
      %471 = vmatpush1.msra.mxu0 0.0
      %472 = vmatprep.subr.mxu0 0.0
      %473 = vmatpush1.msra.mxu0 0.0
      %474 = vmatprep.subr.mxu0 0.0
      %475 = vmatpush1.msra.mxu0 0.0
      %476 = vmatprep.subr.mxu0 0.0
      %477 = vmatpush1.msra.mxu0 0.0
      %478 = vmatprep.subr.mxu0 0.0
      %479 = vmatpush1.msra.mxu0 0.0
      %480 = vmatprep.subr.mxu0 0.0
      %481 = vmatpush1.msra.mxu0 0.0
      %482 = vmatprep.subr.mxu0 0.0
      %483 = vmatpush1.msra.mxu0 0.0
      %484 = vmatprep.mubr.f32.mxu0 0.0
      %485 = vmatmul.mubr.f32.gmra.mrb[0].mxu0 %v414
      %v486 = vpop.f32.mrb[0].mxu0
      %v487 = vadd.f32 %v407, %v486
      %v488 = vpop.f32.mrb[0].mxu0
      %v489 = vadd.f32 %v409, %v488
      %490 = vdwg.mxu0
      %v491 = vld [vmem:[%s286] sm:$0xff]
      %v492 = vld [vmem:[%s286 + $0x8] sm:$0xf]
      %v494 = vlaneseq
      %v495 = vshrl.u32 %v494, 7
      %v496 = vsub.s32 0, %v495
      %v497 = vrot.slane %v301, %v496
      %v498 = vlaneseq
      %v499 = vshrl.u32 %v498, 7
      %v500 = vsub.s32 1, %v499
      %v501 = vrot.slane %v301, %v500
      %v502 = vcombine.low %v497, %v501
      %503 = vrot.lane.b32.xlu0 %v502, 2
      %v504 = vpop.permute.xlu0 %503
      %v505 = vrot.slane %v504, 4
      %vm506 = vcmask 15360
      %v507 = vsel %vm506, %v505, %v504
      %v510 = vmul.f32 %v491, %v507
      %v511 = vmul.f32 %v492, %v505
      %s512 = scalar_lea.vmem %s1, 8
      %v513 = vld [vmem:[%s512] sm:$0xf]
      %v516 = vcombine.high %v510, %v510
      %517 = vrot.lane.b32.xlu0 %v510, 126
      %v518 = vpop.permute.xlu0 %517
      %519 = vrot.lane.b32.xlu0 %v516, 126
      %v520 = vpop.permute.xlu0 %519
      %521 = vrot.lane.b32.xlu0 %v511, 126
      %v522 = vpop.permute.xlu0 %521
      %vm523 = vcmask 1031168
      %v524 = vsel %vm523, %v518, %v520
      %v525 = vsel %vm523, %v520, %v522
      %v527 = vsel %vm331, %v513, 0
      %v529 = vsel %vm335, %v524, 0
      %v531 = vsel %vm335, %v525, 0
      %533 = vmatprep.subr.mxu0 %v531
      %534 = vmatpush1.msra.mxu0 %v529
      %535 = vmatprep.subr.mxu0 0.0
      %536 = vmatpush1.msra.mxu0 0.0
      %537 = vmatprep.subr.mxu0 0.0
      %538 = vmatpush1.msra.mxu0 0.0
      %539 = vmatprep.subr.mxu0 0.0
      %540 = vmatpush1.msra.mxu0 0.0
      %541 = vmatprep.subr.mxu0 0.0
      %542 = vmatpush1.msra.mxu0 0.0
      %543 = vmatprep.subr.mxu0 0.0
      %544 = vmatpush1.msra.mxu0 0.0
      %545 = vmatprep.subr.mxu0 0.0
      %546 = vmatpush1.msra.mxu0 0.0
      %547 = vmatprep.subr.mxu0 0.0
      %548 = vmatpush1.msra.mxu0 0.0
      %549 = vmatprep.subr.mxu0 0.0
      %550 = vmatpush1.msra.mxu0 0.0
      %551 = vmatprep.subr.mxu0 0.0
      %552 = vmatpush1.msra.mxu0 0.0
      %553 = vmatprep.subr.mxu0 0.0
      %554 = vmatpush1.msra.mxu0 0.0
      %555 = vmatprep.subr.mxu0 0.0
      %556 = vmatpush1.msra.mxu0 0.0
      %557 = vmatprep.subr.mxu0 0.0
      %558 = vmatpush1.msra.mxu0 0.0
      %559 = vmatprep.subr.mxu0 0.0
      %560 = vmatpush1.msra.mxu0 0.0
      %561 = vmatprep.subr.mxu0 0.0
      %562 = vmatpush1.msra.mxu0 0.0
      %563 = vmatprep.subr.mxu0 0.0
      %564 = vmatpush1.msra.mxu0 0.0
      %565 = vmatprep.subr.mxu0 0.0
      %566 = vmatpush1.msra.mxu0 0.0
      %567 = vmatprep.subr.mxu0 0.0
      %568 = vmatpush1.msra.mxu0 0.0
      %569 = vmatprep.subr.mxu0 0.0
      %570 = vmatpush1.msra.mxu0 0.0
      %571 = vmatprep.subr.mxu0 0.0
      %572 = vmatpush1.msra.mxu0 0.0
      %573 = vmatprep.subr.mxu0 0.0
      %574 = vmatpush1.msra.mxu0 0.0
      %575 = vmatprep.subr.mxu0 0.0
      %576 = vmatpush1.msra.mxu0 0.0
      %577 = vmatprep.subr.mxu0 0.0
      %578 = vmatpush1.msra.mxu0 0.0
      %579 = vmatprep.subr.mxu0 0.0
      %580 = vmatpush1.msra.mxu0 0.0
      %581 = vmatprep.subr.mxu0 0.0
      %582 = vmatpush1.msra.mxu0 0.0
      %583 = vmatprep.subr.mxu0 0.0
      %584 = vmatpush1.msra.mxu0 0.0
      %585 = vmatprep.subr.mxu0 0.0
      %586 = vmatpush1.msra.mxu0 0.0
      %587 = vmatprep.subr.mxu0 0.0
      %588 = vmatpush1.msra.mxu0 0.0
      %589 = vmatprep.subr.mxu0 0.0
      %590 = vmatpush1.msra.mxu0 0.0
      %591 = vmatprep.subr.mxu0 0.0
      %592 = vmatpush1.msra.mxu0 0.0
      %593 = vmatprep.subr.mxu0 0.0
      %594 = vmatpush1.msra.mxu0 0.0
      %595 = vmatprep.subr.mxu0 0.0
      %596 = vmatpush1.msra.mxu0 0.0
      %597 = vmatprep.mubr.f32.mxu0 0.0
      %598 = vmatmul.mubr.f32.gmra.mrb[0].mxu0 %v527
      %v599 = vpop.f32.mrb[0].mxu0
      %v600 = vadd.f32 0.0, %v599
      %v601 = vpop.f32.mrb[0].mxu0
      %v602 = vadd.f32 0.0, %v601
      %603 = vdwg.mxu0
      %v604 = vadd.f32 %v487, %v600
      %v605 = vadd.f32 %v489, %v602
      %v606 = vld [vmem:[%s286] sm:$0xff]
      %v607 = vld [vmem:[%s286 + $0x8] sm:$0xf]
      %608 = vrot.lane.b32.xlu0 %v312, 16
      %v609 = vpop.permute.xlu0 %608
      %v610 = vrot.slane %v609, 4
      %vm611 = vcmask 130048
      %v612 = vsel %vm611, %v610, %v609
      %v615 = vmul.f32 %v606, %v612
      %v616 = vmul.f32 %v607, %v610
      %s617 = scalar_lea.vmem %s1, 12
      %v618 = vld [vmem:[%s617] sm:$0xf]
      %v621 = vcombine.high %v615, %v615
      %622 = vrot.lane.b32.xlu0 %v615, 112
      %v623 = vpop.permute.xlu0 %622
      %624 = vrot.lane.b32.xlu0 %v621, 112
      %v625 = vpop.permute.xlu0 %624
      %626 = vrot.lane.b32.xlu0 %v616, 112
      %v627 = vpop.permute.xlu0 %626
      %vm628 = vcmask 916480
      %v629 = vsel %vm628, %v623, %v625
      %v630 = vsel %vm628, %v625, %v627
      %v632 = vsel %vm331, %v618, 0
      %v634 = vsel %vm335, %v629, 0
      %v636 = vsel %vm335, %v630, 0
      %638 = vmatprep.subr.mxu0 %v636
      %639 = vmatpush1.msra.mxu0 %v634
      %640 = vmatprep.subr.mxu0 0.0
      %641 = vmatpush1.msra.mxu0 0.0
      %642 = vmatprep.subr.mxu0 0.0
      %643 = vmatpush1.msra.mxu0 0.0
      %644 = vmatprep.subr.mxu0 0.0
      %645 = vmatpush1.msra.mxu0 0.0
      %646 = vmatprep.subr.mxu0 0.0
      %647 = vmatpush1.msra.mxu0 0.0
      %648 = vmatprep.subr.mxu0 0.0
      %649 = vmatpush1.msra.mxu0 0.0
      %650 = vmatprep.subr.mxu0 0.0
      %651 = vmatpush1.msra.mxu0 0.0
      %652 = vmatprep.subr.mxu0 0.0
      %653 = vmatpush1.msra.mxu0 0.0
      %654 = vmatprep.subr.mxu0 0.0
      %655 = vmatpush1.msra.mxu0 0.0
      %656 = vmatprep.subr.mxu0 0.0
      %657 = vmatpush1.msra.mxu0 0.0
      %658 = vmatprep.subr.mxu0 0.0
      %659 = vmatpush1.msra.mxu0 0.0
      %660 = vmatprep.subr.mxu0 0.0
      %661 = vmatpush1.msra.mxu0 0.0
      %662 = vmatprep.subr.mxu0 0.0
      %663 = vmatpush1.msra.mxu0 0.0
      %664 = vmatprep.subr.mxu0 0.0
      %665 = vmatpush1.msra.mxu0 0.0
      %666 = vmatprep.subr.mxu0 0.0
      %667 = vmatpush1.msra.mxu0 0.0
      %668 = vmatprep.subr.mxu0 0.0
      %669 = vmatpush1.msra.mxu0 0.0
      %670 = vmatprep.subr.mxu0 0.0
      %671 = vmatpush1.msra.mxu0 0.0
      %672 = vmatprep.subr.mxu0 0.0
      %673 = vmatpush1.msra.mxu0 0.0
      %674 = vmatprep.subr.mxu0 0.0
      %675 = vmatpush1.msra.mxu0 0.0
      %676 = vmatprep.subr.mxu0 0.0
      %677 = vmatpush1.msra.mxu0 0.0
      %678 = vmatprep.subr.mxu0 0.0
      %679 = vmatpush1.msra.mxu0 0.0
      %680 = vmatprep.subr.mxu0 0.0
      %681 = vmatpush1.msra.mxu0 0.0
      %682 = vmatprep.subr.mxu0 0.0
      %683 = vmatpush1.msra.mxu0 0.0
      %684 = vmatprep.subr.mxu0 0.0
      %685 = vmatpush1.msra.mxu0 0.0
      %686 = vmatprep.subr.mxu0 0.0
      %687 = vmatpush1.msra.mxu0 0.0
      %688 = vmatprep.subr.mxu0 0.0
      %689 = vmatpush1.msra.mxu0 0.0
      %690 = vmatprep.subr.mxu0 0.0
      %691 = vmatpush1.msra.mxu0 0.0
      %692 = vmatprep.subr.mxu0 0.0
      %693 = vmatpush1.msra.mxu0 0.0
      %694 = vmatprep.subr.mxu0 0.0
      %695 = vmatpush1.msra.mxu0 0.0
      %696 = vmatprep.subr.mxu0 0.0
      %697 = vmatpush1.msra.mxu0 0.0
      %698 = vmatprep.subr.mxu0 0.0
      %699 = vmatpush1.msra.mxu0 0.0
      %700 = vmatprep.subr.mxu0 0.0
      %701 = vmatpush1.msra.mxu0 0.0
      %702 = vmatprep.mubr.f32.mxu0 0.0
      %703 = vmatmul.mubr.f32.gmra.mrb[0].mxu0 %v632
      %v704 = vpop.f32.mrb[0].mxu0
      %v705 = vadd.f32 0.0, %v704
      %v706 = vpop.f32.mrb[0].mxu0
      %v707 = vadd.f32 0.0, %v706
      %708 = vdwg.mxu0
      %v709 = vadd.f32 %v604, %v705
      %v710 = vadd.f32 %v605, %v707
      %v711 = vld [vmem:[%s286] sm:$0xff]
      %v712 = vld [vmem:[%s286 + $0x8] sm:$0xf]
      %s713 = scalar_lea.vmem %s1, 16
      %v714 = vld [vmem:[%s713] sm:$0xf]
      %v717 = vcombine.high %v711, %v711
      %718 = vrot.lane.b32.xlu0 %v711, 111
      %v719 = vpop.permute.xlu0 %718
      %720 = vrot.lane.b32.xlu0 %v717, 111
      %v721 = vpop.permute.xlu0 %720
      %722 = vrot.lane.b32.xlu0 %v712, 111
      %v723 = vpop.permute.xlu0 %722
      %vm724 = vcmask 908288
      %v725 = vsel %vm724, %v719, %v721
      %v726 = vsel %vm724, %v721, %v723
      %v728 = vsel %vm331, %v714, 0
      %v730 = vsel %vm335, %v725, 0
      %v732 = vsel %vm335, %v726, 0
      %734 = vmatprep.subr.mxu0 %v732
      %735 = vmatpush1.msra.mxu0 %v730
      %736 = vmatprep.subr.mxu0 0.0
      %737 = vmatpush1.msra.mxu0 0.0
      %738 = vmatprep.subr.mxu0 0.0
      %739 = vmatpush1.msra.mxu0 0.0
      %740 = vmatprep.subr.mxu0 0.0
      %741 = vmatpush1.msra.mxu0 0.0
      %742 = vmatprep.subr.mxu0 0.0
      %743 = vmatpush1.msra.mxu0 0.0
      %744 = vmatprep.subr.mxu0 0.0
      %745 = vmatpush1.msra.mxu0 0.0
      %746 = vmatprep.subr.mxu0 0.0
      %747 = vmatpush1.msra.mxu0 0.0
      %748 = vmatprep.subr.mxu0 0.0
      %749 = vmatpush1.msra.mxu0 0.0
      %750 = vmatprep.subr.mxu0 0.0
      %751 = vmatpush1.msra.mxu0 0.0
      %752 = vmatprep.subr.mxu0 0.0
      %753 = vmatpush1.msra.mxu0 0.0
      %754 = vmatprep.subr.mxu0 0.0
      %755 = vmatpush1.msra.mxu0 0.0
      %756 = vmatprep.subr.mxu0 0.0
      %757 = vmatpush1.msra.mxu0 0.0
      %758 = vmatprep.subr.mxu0 0.0
      %759 = vmatpush1.msra.mxu0 0.0
      %760 = vmatprep.subr.mxu0 0.0
      %761 = vmatpush1.msra.mxu0 0.0
      %762 = vmatprep.subr.mxu0 0.0
      %763 = vmatpush1.msra.mxu0 0.0
      %764 = vmatprep.subr.mxu0 0.0
      %765 = vmatpush1.msra.mxu0 0.0
      %766 = vmatprep.subr.mxu0 0.0
      %767 = vmatpush1.msra.mxu0 0.0
      %768 = vmatprep.subr.mxu0 0.0
      %769 = vmatpush1.msra.mxu0 0.0
      %770 = vmatprep.subr.mxu0 0.0
      %771 = vmatpush1.msra.mxu0 0.0
      %772 = vmatprep.subr.mxu0 0.0
      %773 = vmatpush1.msra.mxu0 0.0
      %774 = vmatprep.subr.mxu0 0.0
      %775 = vmatpush1.msra.mxu0 0.0
      %776 = vmatprep.subr.mxu0 0.0
      %777 = vmatpush1.msra.mxu0 0.0
      %778 = vmatprep.subr.mxu0 0.0
      %779 = vmatpush1.msra.mxu0 0.0
      %780 = vmatprep.subr.mxu0 0.0
      %781 = vmatpush1.msra.mxu0 0.0
      %782 = vmatprep.subr.mxu0 0.0
      %783 = vmatpush1.msra.mxu0 0.0
      %784 = vmatprep.subr.mxu0 0.0
      %785 = vmatpush1.msra.mxu0 0.0
      %786 = vmatprep.subr.mxu0 0.0
      %787 = vmatpush1.msra.mxu0 0.0
      %788 = vmatprep.subr.mxu0 0.0
      %789 = vmatpush1.msra.mxu0 0.0
      %790 = vmatprep.subr.mxu0 0.0
      %791 = vmatpush1.msra.mxu0 0.0
      %792 = vmatprep.subr.mxu0 0.0
      %793 = vmatpush1.msra.mxu0 0.0
      %794 = vmatprep.subr.mxu0 0.0
      %795 = vmatpush1.msra.mxu0 0.0
      %796 = vmatprep.subr.mxu0 0.0
      %797 = vmatpush1.msra.mxu0 0.0
      %798 = vmatprep.mubr.f32.mxu0 0.0
      %799 = vmatmul.mubr.f32.gmra.mrb[0].mxu0 %v728
      %v800 = vpop.f32.mrb[0].mxu0
      %v801 = vadd.f32 0.0, %v800
      %v802 = vpop.f32.mrb[0].mxu0
      %v803 = vadd.f32 0.0, %v802
      %804 = vdwg.mxu0
      %v805 = vadd.f32 %v709, %v801
      %v806 = vadd.f32 %v710, %v803
      %v807 = vld [vmem:[%s286] sm:$0xff]
      %v808 = vld [vmem:[%s286 + $0x8] sm:$0xf]
      %809 = vrot.lane.b32.xlu0 %v502, 18
      %v810 = vpop.permute.xlu0 %809
      %v811 = vrot.slane %v810, 4
      %vm812 = vcmask 146432
      %v813 = vsel %vm812, %v811, %v810
      %v816 = vmul.f32 %v807, %v813
      %v817 = vmul.f32 %v808, %v811
      %s818 = scalar_lea.vmem %s1, 20
      %v819 = vld [vmem:[%s818] sm:$0xf]
      %v822 = vcombine.high %v816, %v816
      %823 = vrot.lane.b32.xlu0 %v816, 110
      %v824 = vpop.permute.xlu0 %823
      %825 = vrot.lane.b32.xlu0 %v822, 110
      %v826 = vpop.permute.xlu0 %825
      %827 = vrot.lane.b32.xlu0 %v817, 110
      %v828 = vpop.permute.xlu0 %827
      %vm829 = vcmask 900096
      %v830 = vsel %vm829, %v824, %v826
      %v831 = vsel %vm829, %v826, %v828
      %v833 = vsel %vm331, %v819, 0
      %v835 = vsel %vm335, %v830, 0
      %v837 = vsel %vm335, %v831, 0
      %839 = vmatprep.subr.mxu0 %v837
      %840 = vmatpush1.msra.mxu0 %v835
      %841 = vmatprep.subr.mxu0 0.0
      %842 = vmatpush1.msra.mxu0 0.0
      %843 = vmatprep.subr.mxu0 0.0
      %844 = vmatpush1.msra.mxu0 0.0
      %845 = vmatprep.subr.mxu0 0.0
      %846 = vmatpush1.msra.mxu0 0.0
      %847 = vmatprep.subr.mxu0 0.0
      %848 = vmatpush1.msra.mxu0 0.0
      %849 = vmatprep.subr.mxu0 0.0
      %850 = vmatpush1.msra.mxu0 0.0
      %851 = vmatprep.subr.mxu0 0.0
      %852 = vmatpush1.msra.mxu0 0.0
      %853 = vmatprep.subr.mxu0 0.0
      %854 = vmatpush1.msra.mxu0 0.0
      %855 = vmatprep.subr.mxu0 0.0
      %856 = vmatpush1.msra.mxu0 0.0
      %857 = vmatprep.subr.mxu0 0.0
      %858 = vmatpush1.msra.mxu0 0.0
      %859 = vmatprep.subr.mxu0 0.0
      %860 = vmatpush1.msra.mxu0 0.0
      %861 = vmatprep.subr.mxu0 0.0
      %862 = vmatpush1.msra.mxu0 0.0
      %863 = vmatprep.subr.mxu0 0.0
      %864 = vmatpush1.msra.mxu0 0.0
      %865 = vmatprep.subr.mxu0 0.0
      %866 = vmatpush1.msra.mxu0 0.0
      %867 = vmatprep.subr.mxu0 0.0
      %868 = vmatpush1.msra.mxu0 0.0
      %869 = vmatprep.subr.mxu0 0.0
      %870 = vmatpush1.msra.mxu0 0.0
      %871 = vmatprep.subr.mxu0 0.0
      %872 = vmatpush1.msra.mxu0 0.0
      %873 = vmatprep.subr.mxu0 0.0
      %874 = vmatpush1.msra.mxu0 0.0
      %875 = vmatprep.subr.mxu0 0.0
      %876 = vmatpush1.msra.mxu0 0.0
      %877 = vmatprep.subr.mxu0 0.0
      %878 = vmatpush1.msra.mxu0 0.0
      %879 = vmatprep.subr.mxu0 0.0
      %880 = vmatpush1.msra.mxu0 0.0
      %881 = vmatprep.subr.mxu0 0.0
      %882 = vmatpush1.msra.mxu0 0.0
      %883 = vmatprep.subr.mxu0 0.0
      %884 = vmatpush1.msra.mxu0 0.0
      %885 = vmatprep.subr.mxu0 0.0
      %886 = vmatpush1.msra.mxu0 0.0
      %887 = vmatprep.subr.mxu0 0.0
      %888 = vmatpush1.msra.mxu0 0.0
      %889 = vmatprep.subr.mxu0 0.0
      %890 = vmatpush1.msra.mxu0 0.0
      %891 = vmatprep.subr.mxu0 0.0
      %892 = vmatpush1.msra.mxu0 0.0
      %893 = vmatprep.subr.mxu0 0.0
      %894 = vmatpush1.msra.mxu0 0.0
      %895 = vmatprep.subr.mxu0 0.0
      %896 = vmatpush1.msra.mxu0 0.0
      %897 = vmatprep.subr.mxu0 0.0
      %898 = vmatpush1.msra.mxu0 0.0
      %899 = vmatprep.subr.mxu0 0.0
      %900 = vmatpush1.msra.mxu0 0.0
      %901 = vmatprep.subr.mxu0 0.0
      %902 = vmatpush1.msra.mxu0 0.0
      %903 = vmatprep.mubr.f32.mxu0 0.0
      %904 = vmatmul.mubr.f32.gmra.mrb[0].mxu0 %v833
      %v905 = vpop.f32.mrb[0].mxu0
      %v906 = vadd.f32 0.0, %v905
      %v907 = vpop.f32.mrb[0].mxu0
      %v908 = vadd.f32 0.0, %v907
      %909 = vdwg.mxu0
      %v910 = vadd.f32 %v805, %v906
      %v911 = vadd.f32 %v806, %v908
      %v912 = vld [vmem:[%s286] sm:$0xff]
      %v913 = vld [vmem:[%s286 + $0x8] sm:$0xf]
      %914 = vrot.lane.b32.xlu0 %v312, 32
      %v915 = vpop.permute.xlu0 %914
      %v916 = vrot.slane %v915, 4
      %vm917 = vcmask 261120
      %v918 = vsel %vm917, %v916, %v915
      %v921 = vmul.f32 %v912, %v918
      %v922 = vmul.f32 %v913, %v916
      %s923 = scalar_lea.vmem %s1, 24
      %v924 = vld [vmem:[%s923] sm:$0xf]
      %v927 = vcombine.high %v921, %v921
      %928 = vrot.lane.b32.xlu0 %v921, 96
      %v929 = vpop.permute.xlu0 %928
      %930 = vrot.lane.b32.xlu0 %v927, 96
      %v931 = vpop.permute.xlu0 %930
      %932 = vrot.lane.b32.xlu0 %v922, 96
      %v933 = vpop.permute.xlu0 %932
      %vm934 = vcmask 785408
      %v935 = vsel %vm934, %v929, %v931
      %v936 = vsel %vm934, %v931, %v933
      %v938 = vsel %vm331, %v924, 0
      %v940 = vsel %vm335, %v935, 0
      %v942 = vsel %vm335, %v936, 0
      %944 = vmatprep.subr.mxu0 %v942
      %945 = vmatpush1.msra.mxu0 %v940
      %946 = vmatprep.subr.mxu0 0.0
      %947 = vmatpush1.msra.mxu0 0.0
      %948 = vmatprep.subr.mxu0 0.0
      %949 = vmatpush1.msra.mxu0 0.0
      %950 = vmatprep.subr.mxu0 0.0
      %951 = vmatpush1.msra.mxu0 0.0
      %952 = vmatprep.subr.mxu0 0.0
      %953 = vmatpush1.msra.mxu0 0.0
      %954 = vmatprep.subr.mxu0 0.0
      %955 = vmatpush1.msra.mxu0 0.0
      %956 = vmatprep.subr.mxu0 0.0
      %957 = vmatpush1.msra.mxu0 0.0
      %958 = vmatprep.subr.mxu0 0.0
      %959 = vmatpush1.msra.mxu0 0.0
      %960 = vmatprep.subr.mxu0 0.0
      %961 = vmatpush1.msra.mxu0 0.0
      %962 = vmatprep.subr.mxu0 0.0
      %963 = vmatpush1.msra.mxu0 0.0
      %964 = vmatprep.subr.mxu0 0.0
      %965 = vmatpush1.msra.mxu0 0.0
      %966 = vmatprep.subr.mxu0 0.0
      %967 = vmatpush1.msra.mxu0 0.0
      %968 = vmatprep.subr.mxu0 0.0
      %969 = vmatpush1.msra.mxu0 0.0
      %970 = vmatprep.subr.mxu0 0.0
      %971 = vmatpush1.msra.mxu0 0.0
      %972 = vmatprep.subr.mxu0 0.0
      %973 = vmatpush1.msra.mxu0 0.0
      %974 = vmatprep.subr.mxu0 0.0
      %975 = vmatpush1.msra.mxu0 0.0
      %976 = vmatprep.subr.mxu0 0.0
      %977 = vmatpush1.msra.mxu0 0.0
      %978 = vmatprep.subr.mxu0 0.0
      %979 = vmatpush1.msra.mxu0 0.0
      %980 = vmatprep.subr.mxu0 0.0
      %981 = vmatpush1.msra.mxu0 0.0
      %982 = vmatprep.subr.mxu0 0.0
      %983 = vmatpush1.msra.mxu0 0.0
      %984 = vmatprep.subr.mxu0 0.0
      %985 = vmatpush1.msra.mxu0 0.0
      %986 = vmatprep.subr.mxu0 0.0
      %987 = vmatpush1.msra.mxu0 0.0
      %988 = vmatprep.subr.mxu0 0.0
      %989 = vmatpush1.msra.mxu0 0.0
      %990 = vmatprep.subr.mxu0 0.0
      %991 = vmatpush1.msra.mxu0 0.0
      %992 = vmatprep.subr.mxu0 0.0
      %993 = vmatpush1.msra.mxu0 0.0
      %994 = vmatprep.subr.mxu0 0.0
      %995 = vmatpush1.msra.mxu0 0.0
      %996 = vmatprep.subr.mxu0 0.0
      %997 = vmatpush1.msra.mxu0 0.0
      %998 = vmatprep.subr.mxu0 0.0
      %999 = vmatpush1.msra.mxu0 0.0
      %1000 = vmatprep.subr.mxu0 0.0
      %1001 = vmatpush1.msra.mxu0 0.0
      %1002 = vmatprep.subr.mxu0 0.0
      %1003 = vmatpush1.msra.mxu0 0.0
      %1004 = vmatprep.subr.mxu0 0.0
      %1005 = vmatpush1.msra.mxu0 0.0
      %1006 = vmatprep.subr.mxu0 0.0
      %1007 = vmatpush1.msra.mxu0 0.0
      %1008 = vmatprep.mubr.f32.mxu0 0.0
      %1009 = vmatmul.mubr.f32.gmra.mrb[0].mxu0 %v938
      %v1010 = vpop.f32.mrb[0].mxu0
      %v1011 = vadd.f32 0.0, %v1010
      %v1012 = vpop.f32.mrb[0].mxu0
      %v1013 = vadd.f32 0.0, %v1012
      %1014 = vdwg.mxu0
      %v1015 = vadd.f32 %v910, %v1011
      %v1016 = vadd.f32 %v911, %v1013
      %v1017 = vld [vmem:[%s286] sm:$0xff]
      %v1018 = vld [vmem:[%s286 + $0x8] sm:$0xf]
      %s1019 = scalar_lea.vmem %s1, 28
      %v1020 = vld [vmem:[%s1019] sm:$0xf]
      %v1023 = vcombine.high %v1017, %v1017
      %1024 = vrot.lane.b32.xlu0 %v1017, 95
      %v1025 = vpop.permute.xlu0 %1024
      %1026 = vrot.lane.b32.xlu0 %v1023, 95
      %v1027 = vpop.permute.xlu0 %1026
      %1028 = vrot.lane.b32.xlu0 %v1018, 95
      %v1029 = vpop.permute.xlu0 %1028
      %vm1030 = vcmask 777216
      %v1031 = vsel %vm1030, %v1025, %v1027
      %v1032 = vsel %vm1030, %v1027, %v1029
      %v1034 = vsel %vm331, %v1020, 0
      %v1036 = vsel %vm335, %v1031, 0
      %v1038 = vsel %vm335, %v1032, 0
      %1040 = vmatprep.subr.mxu0 %v1038
      %1041 = vmatpush1.msra.mxu0 %v1036
      %1042 = vmatprep.subr.mxu0 0.0
      %1043 = vmatpush1.msra.mxu0 0.0
      %1044 = vmatprep.subr.mxu0 0.0
      %1045 = vmatpush1.msra.mxu0 0.0
      %1046 = vmatprep.subr.mxu0 0.0
      %1047 = vmatpush1.msra.mxu0 0.0
      %1048 = vmatprep.subr.mxu0 0.0
      %1049 = vmatpush1.msra.mxu0 0.0
      %1050 = vmatprep.subr.mxu0 0.0
      %1051 = vmatpush1.msra.mxu0 0.0
      %1052 = vmatprep.subr.mxu0 0.0
      %1053 = vmatpush1.msra.mxu0 0.0
      %1054 = vmatprep.subr.mxu0 0.0
      %1055 = vmatpush1.msra.mxu0 0.0
      %1056 = vmatprep.subr.mxu0 0.0
      %1057 = vmatpush1.msra.mxu0 0.0
      %1058 = vmatprep.subr.mxu0 0.0
      %1059 = vmatpush1.msra.mxu0 0.0
      %1060 = vmatprep.subr.mxu0 0.0
      %1061 = vmatpush1.msra.mxu0 0.0
      %1062 = vmatprep.subr.mxu0 0.0
      %1063 = vmatpush1.msra.mxu0 0.0
      %1064 = vmatprep.subr.mxu0 0.0
      %1065 = vmatpush1.msra.mxu0 0.0
      %1066 = vmatprep.subr.mxu0 0.0
      %1067 = vmatpush1.msra.mxu0 0.0
      %1068 = vmatprep.subr.mxu0 0.0
      %1069 = vmatpush1.msra.mxu0 0.0
      %1070 = vmatprep.subr.mxu0 0.0
      %1071 = vmatpush1.msra.mxu0 0.0
      %1072 = vmatprep.subr.mxu0 0.0
      %1073 = vmatpush1.msra.mxu0 0.0
      %1074 = vmatprep.subr.mxu0 0.0
      %1075 = vmatpush1.msra.mxu0 0.0
      %1076 = vmatprep.subr.mxu0 0.0
      %1077 = vmatpush1.msra.mxu0 0.0
      %1078 = vmatprep.subr.mxu0 0.0
      %1079 = vmatpush1.msra.mxu0 0.0
      %1080 = vmatprep.subr.mxu0 0.0
      %1081 = vmatpush1.msra.mxu0 0.0
      %1082 = vmatprep.subr.mxu0 0.0
      %1083 = vmatpush1.msra.mxu0 0.0
      %1084 = vmatprep.subr.mxu0 0.0
      %1085 = vmatpush1.msra.mxu0 0.0
      %1086 = vmatprep.subr.mxu0 0.0
      %1087 = vmatpush1.msra.mxu0 0.0
      %1088 = vmatprep.subr.mxu0 0.0
      %1089 = vmatpush1.msra.mxu0 0.0
      %1090 = vmatprep.subr.mxu0 0.0
      %1091 = vmatpush1.msra.mxu0 0.0
      %1092 = vmatprep.subr.mxu0 0.0
      %1093 = vmatpush1.msra.mxu0 0.0
      %1094 = vmatprep.subr.mxu0 0.0
      %1095 = vmatpush1.msra.mxu0 0.0
      %1096 = vmatprep.subr.mxu0 0.0
      %1097 = vmatpush1.msra.mxu0 0.0
      %1098 = vmatprep.subr.mxu0 0.0
      %1099 = vmatpush1.msra.mxu0 0.0
      %1100 = vmatprep.subr.mxu0 0.0
      %1101 = vmatpush1.msra.mxu0 0.0
      %1102 = vmatprep.subr.mxu0 0.0
      %1103 = vmatpush1.msra.mxu0 0.0
      %1104 = vmatprep.mubr.f32.mxu0 0.0
      %1105 = vmatmul.mubr.f32.gmra.mrb[0].mxu0 %v1034
      %v1106 = vpop.f32.mrb[0].mxu0
      %v1107 = vadd.f32 0.0, %v1106
      %v1108 = vpop.f32.mrb[0].mxu0
      %v1109 = vadd.f32 0.0, %v1108
      %1110 = vdwg.mxu0
      %v1111 = vadd.f32 %v1015, %v1107
      %v1112 = vadd.f32 %v1016, %v1109
      %v1113 = vld [vmem:[%s286] sm:$0xff]
      %v1114 = vld [vmem:[%s286 + $0x8] sm:$0xf]
      %1115 = vrot.lane.b32.xlu0 %v502, 34
      %v1116 = vpop.permute.xlu0 %1115
      %v1117 = vrot.slane %v1116, 4
      %vm1118 = vcmask 277504
      %v1119 = vsel %vm1118, %v1117, %v1116
      %v1122 = vmul.f32 %v1113, %v1119
      %v1123 = vmul.f32 %v1114, %v1117
      %s1124 = scalar_lea.vmem %s1, 32
      %v1125 = vld [vmem:[%s1124] sm:$0xf]
      %v1128 = vcombine.high %v1122, %v1122
      %1129 = vrot.lane.b32.xlu0 %v1122, 94
      %v1130 = vpop.permute.xlu0 %1129
      %1131 = vrot.lane.b32.xlu0 %v1128, 94
      %v1132 = vpop.permute.xlu0 %1131
      %1133 = vrot.lane.b32.xlu0 %v1123, 94
      %v1134 = vpop.permute.xlu0 %1133
      %vm1135 = vcmask 769024
      %v1136 = vsel %vm1135, %v1130, %v1132
      %v1137 = vsel %vm1135, %v1132, %v1134
      %v1139 = vsel %vm331, %v1125, 0
      %v1141 = vsel %vm335, %v1136, 0
      %v1143 = vsel %vm335, %v1137, 0
      %1145 = vmatprep.subr.mxu0 %v1143
      %1146 = vmatpush1.msra.mxu0 %v1141
      %1147 = vmatprep.subr.mxu0 0.0
      %1148 = vmatpush1.msra.mxu0 0.0
      %1149 = vmatprep.subr.mxu0 0.0
      %1150 = vmatpush1.msra.mxu0 0.0
      %1151 = vmatprep.subr.mxu0 0.0
      %1152 = vmatpush1.msra.mxu0 0.0
      %1153 = vmatprep.subr.mxu0 0.0
      %1154 = vmatpush1.msra.mxu0 0.0
      %1155 = vmatprep.subr.mxu0 0.0
      %1156 = vmatpush1.msra.mxu0 0.0
      %1157 = vmatprep.subr.mxu0 0.0
      %1158 = vmatpush1.msra.mxu0 0.0
      %1159 = vmatprep.subr.mxu0 0.0
      %1160 = vmatpush1.msra.mxu0 0.0
      %1161 = vmatprep.subr.mxu0 0.0
      %1162 = vmatpush1.msra.mxu0 0.0
      %1163 = vmatprep.subr.mxu0 0.0
      %1164 = vmatpush1.msra.mxu0 0.0
      %1165 = vmatprep.subr.mxu0 0.0
      %1166 = vmatpush1.msra.mxu0 0.0
      %1167 = vmatprep.subr.mxu0 0.0
      %1168 = vmatpush1.msra.mxu0 0.0
      %1169 = vmatprep.subr.mxu0 0.0
      %1170 = vmatpush1.msra.mxu0 0.0
      %1171 = vmatprep.subr.mxu0 0.0
      %1172 = vmatpush1.msra.mxu0 0.0
      %1173 = vmatprep.subr.mxu0 0.0
      %1174 = vmatpush1.msra.mxu0 0.0
      %1175 = vmatprep.subr.mxu0 0.0
      %1176 = vmatpush1.msra.mxu0 0.0
      %1177 = vmatprep.subr.mxu0 0.0
      %1178 = vmatpush1.msra.mxu0 0.0
      %1179 = vmatprep.subr.mxu0 0.0
      %1180 = vmatpush1.msra.mxu0 0.0
      %1181 = vmatprep.subr.mxu0 0.0
      %1182 = vmatpush1.msra.mxu0 0.0
      %1183 = vmatprep.subr.mxu0 0.0
      %1184 = vmatpush1.msra.mxu0 0.0
      %1185 = vmatprep.subr.mxu0 0.0
      %1186 = vmatpush1.msra.mxu0 0.0
      %1187 = vmatprep.subr.mxu0 0.0
      %1188 = vmatpush1.msra.mxu0 0.0
      %1189 = vmatprep.subr.mxu0 0.0
      %1190 = vmatpush1.msra.mxu0 0.0
      %1191 = vmatprep.subr.mxu0 0.0
      %1192 = vmatpush1.msra.mxu0 0.0
      %1193 = vmatprep.subr.mxu0 0.0
      %1194 = vmatpush1.msra.mxu0 0.0
      %1195 = vmatprep.subr.mxu0 0.0
      %1196 = vmatpush1.msra.mxu0 0.0
      %1197 = vmatprep.subr.mxu0 0.0
      %1198 = vmatpush1.msra.mxu0 0.0
      %1199 = vmatprep.subr.mxu0 0.0
      %1200 = vmatpush1.msra.mxu0 0.0
      %1201 = vmatprep.subr.mxu0 0.0
      %1202 = vmatpush1.msra.mxu0 0.0
      %1203 = vmatprep.subr.mxu0 0.0
      %1204 = vmatpush1.msra.mxu0 0.0
      %1205 = vmatprep.subr.mxu0 0.0
      %1206 = vmatpush1.msra.mxu0 0.0
      %1207 = vmatprep.subr.mxu0 0.0
      %1208 = vmatpush1.msra.mxu0 0.0
      %1209 = vmatprep.mubr.f32.mxu0 0.0
      %1210 = vmatmul.mubr.f32.gmra.mrb[0].mxu0 %v1139
      %v1211 = vpop.f32.mrb[0].mxu0
      %v1212 = vadd.f32 0.0, %v1211
      %v1213 = vpop.f32.mrb[0].mxu0
      %v1214 = vadd.f32 0.0, %v1213
      %1215 = vdwg.mxu0
      %v1216 = vadd.f32 %v1111, %v1212
      %v1217 = vadd.f32 %v1112, %v1214
      %v1218 = vld [vmem:[%s2] sm:$0xf]
      %1220 = vset.pattern.permute.xlu0 0
      %1221 = vperm.xlu0 %1220, %v1218
      %v1222 = vpop.permute.xlu0 %1221
      %v1224 = vadd.f32 %v1216, %v1222
      %v1225 = vadd.f32 %v1217, %v1222
      %v1228 = vcombine.low %v1224, %v1225
      %1230 = vst [vmem:[%s291] sm:$0xff] %v1228
      %v1231 = vsel %vm335, %v1224, 0.0
      %v1232 = vsel %vm335, %v1225, 0.0
      %v1233 = vadd.f32 %v1231, %v1232
      %1234 = vadd.xlane.f32.xlu0 %v1233
      %v1235 = vpop.xlane.xlu0 %1234
      %vm1236 = vcmask 3072
      %1237 = vst.msk [vmem:[%s295] sm:$0xf] %vm1236, %v1235
      %v1238 = vmul.f32 %v1224, %v1224
      %v1239 = vmul.f32 %v1225, %v1225
      %v1240 = vsel %vm335, %v1238, 0.0
      %v1241 = vsel %vm335, %v1239, 0.0
      %v1242 = vadd.f32 %v1240, %v1241
      %1243 = vadd.xlane.f32.xlu0 %v1242
      %v1244 = vpop.xlane.xlu0 %1243
      %1245 = vst.msk [vmem:[%s299] sm:$0xf] %vm1236, %v1244
      %p1246 = scmp.lt.s32.totalorder %s19, 1
      %s1247 = scalar_select %p1246, %s19, 1
      %s1248 = smul.addr %s1247, 2
      %s1249 = smul.addr %s1248, 4
      %s1250 = scalar_lea.vmem %s5, %s1249
      %p1251 = scmp.lt.s32.totalorder %s19, 1
      %s1252 = scalar_select %p1251, %s19, 1
      %s1253 = smul.addr %s1252, 4
      %s1254 = scalar_lea.vmem %s6, %s1253
      %p1255 = scmp.lt.s32.totalorder %s19, 1
      %s1256 = scalar_select %p1255, %s19, 1
      %s1257 = smul.addr %s1256, 4
      %s1258 = scalar_lea.vmem %s7, %s1257
      // Predicated region
      $region41: #{up_forward.10} parent=39 // pred_check
        %p1259 = pneg %p147
      $region42: #{up_forward.10} parent=39 // pred_check_branch
        %1261 = sbr.rel (%p1259) target = $region44
      $region43: #{up_forward.10} parent=39 // pred_region
        _
      $region44: #{up_forward.10} parent=39 // pred_fallthru
        _
      // Predicated region
      $region45: #{up_forward.10} parent=39 // pred_check
        %p1262 = pneg %p173
      $region46: #{up_forward.10} parent=39 // pred_check_branch
        %1264 = sbr.rel (%p1262) target = $region48
      $region47: #{up_forward.10} parent=39 // pred_region
        _
      $region48: #{up_forward.10} parent=39 // pred_fallthru
        _
      // Predicated region
      $region49: #{up_forward.10} parent=39 // pred_check
        %p1265 = pneg %p199
      $region50: #{up_forward.10} parent=39 // pred_check_branch
        %1267 = sbr.rel (%p1265) target = $region52
      $region51: #{up_forward.10} parent=39 // pred_region
        _
      $region52: #{up_forward.10} parent=39 // pred_fallthru
        _
    $region40: #{up_forward.10} parent=5 // pred_fallthru
      _
    %p1268 = scmp.le.s32.totalorder 2, %s14
    // Predicated region
    $region53: #{up_forward.10} parent=5 // pred_check
      %p1269 = pneg %p1268
    $region54: #{up_forward.10} parent=5 // pred_check_branch
      %1271 = sbr.rel (%p1269) target = $region56
    $region55: #{up_forward.10} parent=5 // pred_region
      %s1272 = ssub.s32 %s14, 2
      // Predicated region
      $region57: #{up_forward.10} parent=55 // pred_check
        %p1273 = pneg %p153
      $region58: #{up_forward.10} parent=55 // pred_check_branch
        %1275 = sbr.rel (%p1273) target = $region60
      $region59: #{up_forward.10} parent=55 // pred_region
        %p1276 = scmp.lt.s32.totalorder %s20, 1
        %s1277 = scalar_select %p1276, %s20, 1
        %s1278 = smul.addr %s1277, 2
        %s1279 = smul.addr %s1278, 4
        %s1280 = scalar_lea.vmem %s5, %s1279
      $region60: #{up_forward.10} parent=55 // pred_fallthru
        _
      // Predicated region
      $region61: #{up_forward.10} parent=55 // pred_check
        %p1281 = pneg %p179
      $region62: #{up_forward.10} parent=55 // pred_check_branch
        %1283 = sbr.rel (%p1281) target = $region64
      $region63: #{up_forward.10} parent=55 // pred_region
        %p1284 = scmp.lt.s32.totalorder %s20, 1
        %s1285 = scalar_select %p1284, %s20, 1
        %s1286 = smul.addr %s1285, 4
        %s1287 = scalar_lea.vmem %s6, %s1286
      $region64: #{up_forward.10} parent=55 // pred_fallthru
        _
      // Predicated region
      $region65: #{up_forward.10} parent=55 // pred_check
        %p1288 = pneg %p205
      $region66: #{up_forward.10} parent=55 // pred_check_branch
        %1290 = sbr.rel (%p1288) target = $region68
      $region67: #{up_forward.10} parent=55 // pred_region
        %p1291 = scmp.lt.s32.totalorder %s20, 1
        %s1292 = scalar_select %p1291, %s20, 1
        %s1293 = smul.addr %s1292, 4
        %s1294 = scalar_lea.vmem %s7, %s1293
      $region68: #{up_forward.10} parent=55 // pred_fallthru
        _
    $region56: #{up_forward.10} parent=5 // pred_fallthru
      _
  $region6: #{up_forward.10} parent=0 // loop_footer
    %s18 = sadd.s32 1, %s14
  $region7: #{up_forward.10} parent=0 // loop_footer_branch
    %13 = sbr.rel target = $region3
  $region8: #{up_forward.10} parent=0 // loop_exit
    _

</llo_original>
